<compile_context>
chip_gen: v5e
topology: v5e:2x2
jax: 0.10.0
libtpu: 0.0.40
codegen_flags: <defaults>
</compile_context>

<pallas_src>
import math
from functools import partial

import jax
import jax.numpy as jnp
from jax import lax
from jax.experimental import pallas as pl
from jax.experimental.pallas import tpu as pltpu

LN_EPS = 1e-5        # PyTorch LayerNorm default
NEG_INF = -1e30      # large finite negative instead of -inf (no -inf arithmetic edge cases)
_GELU_C = math.sqrt(2.0 / math.pi)


# ----------------------------- math helpers -----------------------------------------

def _layer_norm(x, w, b):
    mu = jnp.mean(x, axis=-1, keepdims=True)
    var = jnp.mean((x - mu) ** 2, axis=-1, keepdims=True)
    return (x - mu) * lax.rsqrt(var + LN_EPS) * w + b


def _gelu_tanh(x):
    # tanh-approx GELU: one EUP tanh instead of ~10 VALU ops for an erf polynomial
    # (per review); |err| vs exact erf-GELU < ~1e-3 -- well inside the test tolerance.
    return 0.5 * x * (1.0 + jnp.tanh(_GELU_C * (x + 0.044715 * x * x * x)))


# ----------------------------- Pallas kernels ---------------------------------------

def _encoder_layer_kernel(x_ref, wqkv, bqkv, wo, bo, ln1w, ln1b,
                          w1, b1, w2, b2, ln2w, ln2b, o_ref, *, n_head, q_block):
    """One post-norm nn.TransformerEncoderLayer (eval mode) for one batch element.

    x_ref : (T, D) bf16   (batch dim squeezed by the BlockSpec)
    wqkv  : (D, 3D) bf16  [q | k | v] columns, q columns pre-scaled by 1/sqrt(dh)
    wo    : (D, D) bf16 ; w1 (D, 4D) / w2 (4D, D) bf16 ; biases & LN params f32.
    """
    T, D = x_ref.shape
    H = n_head
    dh = D // H
    nq = T // q_block

    x_bf = x_ref[...]                                   # (T, D) bf16

    # ---- fused, lane-dense QKV projection: a single (T,D)@(D,3D) MXU matmul
    # (no broadcast of the activations, full MXU column utilization).
    qkv = jnp.dot(x_bf, wqkv[...], preferred_element_type=jnp.float32) + bqkv[...]
    qkv_bf = qkv.astype(jnp.bfloat16)                   # (T, 3D)

    # per-head K/V column slices (static lane slices; reused by every query block)
    k_heads = [qkv_bf[:, D + h * dh: D + (h + 1) * dh] for h in range(H)]
    v_heads = [qkv_bf[:, 2 * D + h * dh: 2 * D + (h + 1) * dh] for h in range(H)]
    wo_v = wo[...]
    wo_heads = [wo_v[h * dh:(h + 1) * dh, :] for h in range(H)]

    bo_v, b1_v, b2_v = bo[...], b1[...], b2[...]
    ln1w_v, ln1b_v = ln1w[...], ln1b[...]
    ln2w_v, ln2b_v = ln2w[...], ln2b[...]
    w1_v, w2_v = w1[...], w2[...]

    row = lax.broadcasted_iota(jnp.int32, (q_block, T), 0)
    col = lax.broadcasted_iota(jnp.int32, (q_block, T), 1)

    # ---- query-block tiling: bounds the live score slab to (q_block, T) per head and
    # the GELU intermediate to (q_block, 4D).  nq is static; at demo sizes nq == 1.
    # TODO(synk): at production T, turn this into a pl.loop / second "parallel" grid
    # axis with online softmax + causal kv-block skipping (also gives v7x's second
    # TensorCore work when B == 1); the static unroll is sufficient at demo shapes.
    for qi in range(nq):
        qs = qi * q_block
        causal = col <= (row + qs)                      # (q_block, T) bool

        attn = jnp.zeros((q_block, D), jnp.float32)
        for h in range(H):
            q_h = qkv_bf[qs:qs + q_block, h * dh:(h + 1) * dh]          # (qb, dh), pre-scaled
            s = jnp.einsum("qd,kd->qk", q_h, k_heads[h],
                           preferred_element_type=jnp.float32)          # (qb, T)
            s = jnp.where(causal, s, NEG_INF)
            s = s - jnp.max(s, axis=-1, keepdims=True)
            p = jnp.exp(s)
            p = p * pl.reciprocal(jnp.sum(p, axis=-1, keepdims=True), approx=True)  # EUP divide
            o_h = jnp.dot(p.astype(jnp.bfloat16), v_heads[h],
                          preferred_element_type=jnp.float32)           # (qb, dh)
            # output projection folded into the head loop: accumulate (qb, D) directly,
            # no (H, T, D) intermediate and no cross-head VPU reduction.
            attn = attn + jnp.dot(o_h.astype(jnp.bfloat16), wo_heads[h],
                                  preferred_element_type=jnp.float32)
        attn = attn + bo_v

        # TODO(synk): nn.Dropout(p=0.1) is identity in eval mode; training-mode dropout
        # is not implemented.
        x_blk = x_bf[qs:qs + q_block, :].astype(jnp.float32)
        x1 = _layer_norm(x_blk + attn, ln1w_v, ln1b_v)

        # ---- GELU MLP on the same row block (FFN row tiling).
        h1 = _gelu_tanh(jnp.dot(x1.astype(jnp.bfloat16), w1_v,
                                preferred_element_type=jnp.float32) + b1_v)
        ff = jnp.dot(h1.astype(jnp.bfloat16), w2_v,
                     preferred_element_type=jnp.float32) + b2_v
        x2 = _layer_norm(x1 + ff, ln2w_v, ln2b_v)

        o_ref[qs:qs + q_block, :] = x2.astype(o_ref.dtype)


def _ln_head_kernel(x_ref, lnw, lnb, wh, o_ref, xn_ref):
    """Final LayerNorm (computed once per batch element) + bias-free head projection."""
    @pl.when(pl.program_id(1) == 0)
    def _():
        xn = _layer_norm(x_ref[...].astype(jnp.float32), lnw[...], lnb[...])
        xn_ref[...] = xn.astype(jnp.bfloat16)
    # TODO(synk): emit bf16 logits (or fuse top-k/argmax) if downstream sampling allows;
    # f32 kept here to match the PyTorch head output exactly.
    o_ref[...] = jnp.dot(xn_ref[...], wh[...],
                         preferred_element_type=jnp.float32).astype(o_ref.dtype)


# ----------------------------- wrappers ----------------------------------------------

def _rep_spec_factory():
    """Replicated (constant-index) weight blocks: request single-buffering so the
    weight is held once in VMEM instead of double-buffered (v7x VMEM win).  Falls back
    to a plain BlockSpec if this JAX version does not accept pipeline_mode."""
    def single(shape):
        n = len(shape)
        return pl.BlockSpec(shape, lambda *_: (0,) * n, pipeline_mode=pl.Buffered(1))

    def plain(shape):
        n = len(shape)
        return pl.BlockSpec(shape, lambda *_: (0,) * n)

    try:
        single((8, 128))            # probe API support once at import
        return single
    except Exception:
        return plain


_rep_spec = _rep_spec_factory()

_VMEM_CAP = None


def _vmem_cap_bytes():
    """Generation-aware VMEM cap: ~80% of physical (≈100 MiB v5e/v6e, ≈51 MiB v7x)."""
    global _VMEM_CAP
    if _VMEM_CAP is None:
        try:
            _VMEM_CAP = int(0.8 * pltpu.get_tpu_info().vmem_capacity_bytes)
        except Exception:
            _VMEM_CAP = 64 * 1024 * 1024
    return _VMEM_CAP


def _clamp_vmem(nbytes):
    return int(min(max(nbytes, 32 * 1024 * 1024), _vmem_cap_bytes()))


def _pick_q_block(T):
    if T <= 128:
        return T
    for qb in (128, 64, 32, 16, 8):
        if T % qb == 0:
            return qb
    return T


def _pick_vocab_tile(V, max_tile=2048):
    if V <= max_tile:
        return V
    t = max_tile - (max_tile % 128)
    while t >= 128:
        if V % t == 0:
            return t
        t -= 128
    return V


def encoder_layer_pallas(x, lp, n_head):
    B, T, D = x.shape
    q_block = _pick_q_block(T)
    assert T % q_block == 0

    weights = (lp["wqkv"], lp["bqkv"], lp["wo"], lp["bo"], lp["ln1w"], lp["ln1b"],
               lp["w1"], lp["b1"], lp["w2"], lp["b2"], lp["ln2w"], lp["ln2b"])
    w_bytes = sum(math.prod(w.shape) * w.dtype.itemsize for w in weights)
    io_bytes = 2 * (2 * T * D * 2)                               # bf16 x in + out, 2-buffered
    act_bytes = (6 * T * 3 * D                                   # qkv f32 + bf16
                 + 4 * n_head * q_block * T                      # per-head score slabs
                 + 4 * q_block * 10 * D)                         # FFN / LN temporaries
    vmem_limit = _clamp_vmem(int(1.5 * w_bytes) + io_bytes + 2 * act_bytes)

    # TODO(synk): on v5e, fuse several layers into one pallas_call with
    # pltpu.emit_pipeline-streamed per-layer weights to avoid the per-layer HBM
    # round-trip of activations; per-layer calls are kept here for simplicity.
    in_specs = [pl.BlockSpec((None, T, D), lambda b: (b, 0, 0))]
    in_specs += [_rep_spec(w.shape) for w in weights]
    return pl.pallas_call(
        partial(_encoder_layer_kernel, n_head=n_head, q_block=q_block),
        grid=(B,),
        in_specs=in_specs,
        out_specs=pl.BlockSpec((None, T, D), lambda b: (b, 0, 0)),
        out_shape=jax.ShapeDtypeStruct((B, T, D), jnp.bfloat16),
        compiler_params=pltpu.CompilerParams(
            dimension_semantics=("parallel",),       # batch elements are independent
            vmem_limit_bytes=vmem_limit),
    )(x, *weights)


def ln_head_pallas(x, lnw, lnb, wh):
    B, T, D = x.shape
    V = wh.shape[1]
    tv = _pick_vocab_tile(V)
    nv = V // tv
    w_tile_bytes = D * tv * wh.dtype.itemsize
    vmem_limit = _clamp_vmem(2 * w_tile_bytes + 6 * T * D * 4 + 2 * T * tv * 4)
    return pl.pallas_call(
        _ln_head_kernel,
        grid=(B, nv),
        in_specs=[pl.BlockSpec((None, T, D), lambda b, j: (b, 0, 0)),
                  _rep_spec(lnw.shape),
                  _rep_spec(lnb.shape),
                  pl.BlockSpec((D, tv), lambda b, j: (0, j))],
        out_specs=pl.BlockSpec((None, T, tv), lambda b, j: (b, 0, j)),
        out_shape=jax.ShapeDtypeStruct((B, T, V), jnp.float32),
        scratch_shapes=[pltpu.VMEM((T, D), jnp.bfloat16)],       # normalized x, reused per tile
        compiler_params=pltpu.CompilerParams(
            dimension_semantics=("parallel", "arbitrary"),        # scratch carried across vocab tiles
            vmem_limit_bytes=vmem_limit),
    )(x, lnw, lnb, wh)


# ----------------------------- parameter prep + forward ------------------------------

def prepare_params(params, config):
    """One-time (outside-jit) weight preprocessing: fuse q|k|v into a lane-major (D, 3D)
    matrix, fold the 1/sqrt(dh) scale into the q block, cast matmul weights to bf16
    (biases / LN params stay f32)."""
    H, D = config["n_head"], config["n_embd"]
    assert D % H == 0
    scale = 1.0 / math.sqrt(D // H)

    prepped = {
        "tok_emb": params["tok_emb"],
        "pos_emb": params["pos_emb"],
        "ln_f_w": params["ln_f_w"],
        "ln_f_b": params["ln_f_b"],
        "head_w": params["head_w"].astype(jnp.bfloat16),
        "layers": [],
    }
    for p in params["layers"]:
        wqkv = jnp.concatenate([p["wq"] * scale, p["wk"], p["wv"]], axis=1)   # (D, 3D)
        bqkv = jnp.concatenate([p["bq"] * scale, p["bk"], p["bv"]], axis=1)   # (1, 3D)
        prepped["layers"].append({
            "wqkv": wqkv.astype(jnp.bfloat16),
            "bqkv": bqkv.astype(jnp.float32),
            "wo": p["wo"].astype(jnp.bfloat16),
            "bo": p["bo"],
            "ln1w": p["ln1w"], "ln1b": p["ln1b"],
            "w1": p["w1"].astype(jnp.bfloat16), "b1": p["b1"],
            "w2": p["w2"].astype(jnp.bfloat16), "b2": p["b2"],
            "ln2w": p["ln2w"], "ln2b": p["ln2b"],
        })
    return prepped


def vqgan_transformer_forward(idx, prepped, config):
    """Equivalent of VQGANTransformer.forward(idx) in eval mode."""
    B, T = idx.shape
    assert T <= config["block_size"], \
        f"Cannot forward sequence of length {T}, block size is only {config['block_size']}"
    tok = jnp.take(prepped["tok_emb"], idx, axis=0)               # nn.Embedding gather (JAX glue)
    x = (tok + prepped["pos_emb"][:, :T, :]).astype(jnp.bfloat16)  # bf16 inter-layer activations
    for lp in prepped["layers"]:
        x = encoder_layer_pallas(x, lp, config["n_head"])
    return ln_head_pallas(x, prepped["ln_f_w"], prepped["ln_f_b"], prepped["head_w"])


# ----------------------------- params + reference ------------------------------------

def init_params(key, config):
    D, V = config["n_embd"], config["vocab_size"]
    L, BS = config["n_layer"], config["block_size"]
    Dff = 4 * D
    keys = jax.random.split(key, 3 + L)

    def nrm(k, shape, scale=0.05):
        return (scale * jax.random.normal(k, shape)).astype(jnp.float32)

    params = {
        "tok_emb": nrm(keys[0], (V + 1, D)),
        # nn.Parameter(torch.zeros(...)) in the module; random here for a nontrivial test
        "pos_emb": nrm(keys[1], (1, BS, D)),
        "ln_f_w": jnp.ones((1, D), jnp.float32),
        "ln_f_b": jnp.zeros((1, D), jnp.float32),
        "head_w": nrm(keys[2], (D, V)),      # = nn.Linear(D, V, bias=False).weight.T
        "layers": [],
    }
    for l in range(L):
        lk = jax.random.split(keys[3 + l], 10)
        params["layers"].append({
            "wq": nrm(lk[0], (D, D)), "wk": nrm(lk[1], (D, D)), "wv": nrm(lk[2], (D, D)),
            "bq": nrm(lk[3], (1, D)), "bk": jnp.zeros((1, D), jnp.float32),
            "bv": jnp.zeros((1, D), jnp.float32),
            "wo": nrm(lk[4], (D, D)), "bo": nrm(lk[5], (1, D)),
            "ln1w": jnp.ones((1, D), jnp.float32), "ln1b": jnp.zeros((1, D), jnp.float32),
            "w1": nrm(lk[6], (D, Dff)), "b1": nrm(lk[7], (1, Dff)),
            "w2": nrm(lk[8], (Dff, D)), "b2": nrm(lk[9], (1, D)),
            "ln2w": jnp.ones((1, D), jnp.float32), "ln2b": jnp.zeros((1, D), jnp.float32),
        })
    return params


def reference_forward(idx, params, config):
    """Plain-JAX f32 mirror of the PyTorch forward (eval mode) for validation."""
    B, T = idx.shape
    D, H = config["n_embd"], config["n_head"]
    dh = D // H
    x = jnp.take(params["tok_emb"], idx, axis=0) + params["pos_emb"][:, :T, :]
    row = jnp.arange(T)[:, None]
    col = jnp.arange(T)[None, :]
    mask = jnp.where(col > row, -jnp.inf, 0.0).astype(jnp.float32)
    for p in params["layers"]:
        q = x @ p["wq"] + p["bq"]
        k = x @ p["wk"] + p["bk"]
        v = x @ p["wv"] + p["bv"]
        qh = q.reshape(B, T, H, dh).transpose(0, 2, 1, 3)
        kh = k.reshape(B, T, H, dh).transpose(0, 2, 1, 3)
        vh = v.reshape(B, T, H, dh).transpose(0, 2, 1, 3)
        s = jnp.einsum("bhqd,bhkd->bhqk", qh, kh) / math.sqrt(dh) + mask
        a = jax.nn.softmax(s, axis=-1)
        o = jnp.einsum("bhqk,bhkd->bhqd", a, vh).transpose(0, 2, 1, 3).reshape(B, T, D)
        o = o @ p["wo"] + p["bo"]
        x1 = _layer_norm(x + o, p["ln1w"], p["ln1b"])
        ff = jax.nn.gelu(x1 @ p["w1"] + p["b1"], approximate=False) @ p["w2"] + p["b2"]
        x = _layer_norm(x1 + ff, p["ln2w"], p["ln2b"])
    x = _layer_norm(x, params["ln_f_w"], params["ln_f_b"])
    return x @ params["head_w"]


# ----------------------------- main ---------------------------------------------------

if __name__ == "__main__":
    config = dict(vocab_size=32, n_embd=32, n_layer=2, n_head=4, block_size=16)
    key = jax.random.PRNGKey(0)
    pkey, ikey = jax.random.split(key)
    params = init_params(pkey, config)
    prepped = prepare_params(params, config)   # one-time weight packing / bf16 cast

    B, T = 2, 8
    idx = jax.random.randint(ikey, (B, T), 0, config["vocab_size"] + 1, dtype=jnp.int32)

    logits = jax.jit(lambda i: vqgan_transformer_forward(i, prepped, config))(idx)
    logits = jax.block_until_ready(logits)

    assert logits.shape == (B, T, config["vocab_size"]), logits.shape
    ref = reference_forward(idx, params, config)
    max_err = float(jnp.max(jnp.abs(logits - ref)))
    if not (max_err < 5e-2) or not bool(jnp.all(jnp.isfinite(logits))):
        raise AssertionError(f"kernel/reference mismatch, max abs err = {max_err}")
    print("KERNEL_OK")
</pallas_src>

<mosaic_0001>
module attributes {stable_mosaic.version = 11 : i64} {
  func.func @_ln_head_kernel(%arg0: i32, %arg1: i32, %arg2: memref<1x8x32xbf16, #tpu.memory_space<vmem>>, %arg3: memref<1x32xf32, #tpu.memory_space<vmem>>, %arg4: memref<1x32xf32, #tpu.memory_space<vmem>>, %arg5: memref<32x32xbf16, #tpu.memory_space<vmem>>, %arg6: memref<1x8x32xf32, #tpu.memory_space<vmem>>, %arg7: memref<8x32xbf16, #tpu.memory_space<vmem>>) attributes {dimension_semantics = [#tpu.dimension_semantics<parallel>, #tpu.dimension_semantics<arbitrary>], iteration_bounds = array<i64: 2, 1>, scalar_prefetch = 0 : i64, scratch_operands = 1 : i64, tpu.core_type = #tpu.core_type<tc>, window_params = [{transform_indices = @transform_0, window_bounds = array<i64: 1, 8, 32>}, {pipeline_mode = #tpu.pipeline_mode<synchronous>, transform_indices = @transform_1, window_bounds = array<i64: 1, 32>}, {pipeline_mode = #tpu.pipeline_mode<synchronous>, transform_indices = @transform_2, window_bounds = array<i64: 1, 32>}, {transform_indices = @transform_3, window_bounds = array<i64: 32, 32>}, {transform_indices = @transform_4, window_bounds = array<i64: 1, 8, 32>}]} {
    %c0_i32 = arith.constant 0 : i32
    %0 = arith.cmpi eq, %arg1, %c0_i32 : i32
    %1 = arith.extui %0 : i1 to i32
    %c0_i32_0 = arith.constant 0 : i32
    %2 = arith.cmpi ne, %1, %c0_i32_0 : i32
    scf.if %2 {
      %c0_7 = arith.constant 0 : index
      %c0_8 = arith.constant 0 : index
      %c0_9 = arith.constant 0 : index
      %9 = vector.load %arg2[%c0_7, %c0_8, %c0_9] : memref<1x8x32xbf16, #tpu.memory_space<vmem>>, vector<1x8x32xbf16>
      %10 = vector.shape_cast %9 : vector<1x8x32xbf16> to vector<8x32xbf16>
      %11 = arith.extf %10 : vector<8x32xbf16> to vector<8x32xf32>
      %c0_10 = arith.constant 0 : index
      %c0_11 = arith.constant 0 : index
      %12 = vector.load %arg3[%c0_10, %c0_11] : memref<1x32xf32, #tpu.memory_space<vmem>>, vector<1x32xf32>
      %c0_12 = arith.constant 0 : index
      %c0_13 = arith.constant 0 : index
      %13 = vector.load %arg4[%c0_12, %c0_13] : memref<1x32xf32, #tpu.memory_space<vmem>>, vector<1x32xf32>
      %cst_14 = arith.constant dense<0.000000e+00> : vector<8xf32>
      %14 = vector.multi_reduction <add>, %11, %cst_14 [1] : vector<8x32xf32> to vector<8xf32>
      %15 = vector.shape_cast %14 : vector<8xf32> to vector<8x1xf32>
      %cst_15 = arith.constant 3.200000e+01 : f32
      %16 = vector.broadcast %cst_15 : f32 to vector<8x1xf32>
      %17 = arith.divf %15, %16 : vector<8x1xf32>
      %18 = vector.broadcast %17 : vector<8x1xf32> to vector<8x32xf32>
      %19 = arith.subf %11, %18 : vector<8x32xf32>
      %20 = arith.mulf %19, %19 : vector<8x32xf32>
      %cst_16 = arith.constant dense<0.000000e+00> : vector<8xf32>
      %21 = vector.multi_reduction <add>, %20, %cst_16 [1] : vector<8x32xf32> to vector<8xf32>
      %22 = vector.shape_cast %21 : vector<8xf32> to vector<8x1xf32>
      %cst_17 = arith.constant 3.200000e+01 : f32
      %23 = vector.broadcast %cst_17 : f32 to vector<8x1xf32>
      %24 = arith.divf %22, %23 : vector<8x1xf32>
      %25 = vector.broadcast %17 : vector<8x1xf32> to vector<8x32xf32>
      %26 = arith.subf %11, %25 : vector<8x32xf32>
      %cst_18 = arith.constant 9.99999974E-6 : f32
      %27 = vector.broadcast %cst_18 : f32 to vector<8x1xf32>
      %28 = arith.addf %24, %27 : vector<8x1xf32>
      %29 = math.rsqrt %28 : vector<8x1xf32>
      %30 = vector.broadcast %29 : vector<8x1xf32> to vector<8x32xf32>
      %31 = arith.mulf %26, %30 : vector<8x32xf32>
      %32 = vector.broadcast %12 : vector<1x32xf32> to vector<8x32xf32>
      %33 = arith.mulf %31, %32 : vector<8x32xf32>
      %34 = vector.broadcast %13 : vector<1x32xf32> to vector<8x32xf32>
      %35 = arith.addf %33, %34 : vector<8x32xf32>
      %36 = arith.truncf %35 : vector<8x32xf32> to vector<8x32xbf16>
      %c0_19 = arith.constant 0 : index
      %c0_20 = arith.constant 0 : index
      %37 = vector.load %arg7[%c0_19, %c0_20] : memref<8x32xbf16, #tpu.memory_space<vmem>>, vector<8x32xbf16>
      tpu.vector_store %arg7[%c0_19, %c0_20], %36 {strides = array<i32>} : memref<8x32xbf16, #tpu.memory_space<vmem>>, vector<8x32xbf16>,
    } else {
    }
    %c0 = arith.constant 0 : index
    %c0_1 = arith.constant 0 : index
    %3 = vector.load %arg7[%c0, %c0_1] : memref<8x32xbf16, #tpu.memory_space<vmem>>, vector<8x32xbf16>
    %c0_2 = arith.constant 0 : index
    %c0_3 = arith.constant 0 : index
    %4 = vector.load %arg5[%c0_2, %c0_3] : memref<32x32xbf16, #tpu.memory_space<vmem>>, vector<32x32xbf16>
    %cst = arith.constant dense<0.000000e+00> : vector<8x32xf32>
    %5 = tpu.matmul %3, %4, %cst {dimension_numbers = #tpu.dot_dimension_numbers<[1], [0], [0], [1], [0, 0, 1, 1], [], []>} : vector<8x32xbf16>, vector<32x32xbf16>, vector<8x32xf32> -> vector<8x32xf32>
    %c0_4 = arith.constant 0 : index
    %c0_5 = arith.constant 0 : index
    %c0_6 = arith.constant 0 : index
    %6 = vector.load %arg6[%c0_4, %c0_5, %c0_6] : memref<1x8x32xf32, #tpu.memory_space<vmem>>, vector<1x8x32xf32>
    %7 = vector.shape_cast %6 : vector<1x8x32xf32> to vector<8x32xf32>
    %8 = vector.shape_cast %5 : vector<8x32xf32> to vector<1x8x32xf32>
    tpu.vector_store %arg6[%c0_4, %c0_5, %c0_6], %8 {strides = array<i32>} : memref<1x8x32xf32, #tpu.memory_space<vmem>>, vector<1x8x32xf32>,
    return
  }
  func.func @transform_0(%arg0: i32, %arg1: i32) -> (i32, i32, i32) {
    %c0_i32 = arith.constant 0 : i32
    %c0_i32_0 = arith.constant 0 : i32
    %c0_i32_1 = arith.constant 0 : i32
    return %arg0, %c0_i32, %c0_i32_0 : i32, i32, i32
  }
  func.func @transform_1(%arg0: i32, %arg1: i32) -> (i32, i32) {
    %c0_i32 = arith.constant 0 : i32
    %c0_i32_0 = arith.constant 0 : i32
    %c0_i32_1 = arith.constant 0 : i32
    return %c0_i32, %c0_i32_0 : i32, i32
  }
  func.func @transform_2(%arg0: i32, %arg1: i32) -> (i32, i32) {
    %c0_i32 = arith.constant 0 : i32
    %c0_i32_0 = arith.constant 0 : i32
    %c0_i32_1 = arith.constant 0 : i32
    return %c0_i32, %c0_i32_0 : i32, i32
  }
  func.func @transform_3(%arg0: i32, %arg1: i32) -> (i32, i32) {
    %c0_i32 = arith.constant 0 : i32
    %c0_i32_0 = arith.constant 0 : i32
    return %c0_i32, %arg1 : i32, i32
  }
  func.func @transform_4(%arg0: i32, %arg1: i32) -> (i32, i32, i32) {
    %c0_i32 = arith.constant 0 : i32
    %c0_i32_0 = arith.constant 0 : i32
    return %arg0, %c0_i32, %arg1 : i32, i32, i32
  }
}

module attributes {stable_mosaic.version = 11 : i64} {
  func.func @_encoder_layer_kernel(%arg0: i32, %arg1: memref<1x8x32xbf16, #tpu.memory_space<vmem>>, %arg2: memref<32x96xbf16, #tpu.memory_space<vmem>>, %arg3: memref<1x96xf32, #tpu.memory_space<vmem>>, %arg4: memref<32x32xbf16, #tpu.memory_space<vmem>>, %arg5: memref<1x32xf32, #tpu.memory_space<vmem>>, %arg6: memref<1x32xf32, #tpu.memory_space<vmem>>, %arg7: memref<1x32xf32, #tpu.memory_space<vmem>>, %arg8: memref<32x128xbf16, #tpu.memory_space<vmem>>, %arg9: memref<1x128xf32, #tpu.memory_space<vmem>>, %arg10: memref<128x32xbf16, #tpu.memory_space<vmem>>, %arg11: memref<1x32xf32, #tpu.memory_space<vmem>>, %arg12: memref<1x32xf32, #tpu.memory_space<vmem>>, %arg13: memref<1x32xf32, #tpu.memory_space<vmem>>, %arg14: memref<1x8x32xbf16, #tpu.memory_space<vmem>>) attributes {dimension_semantics = [#tpu.dimension_semantics<parallel>], iteration_bounds = array<i64: 2>, scalar_prefetch = 0 : i64, scratch_operands = 0 : i64, tpu.core_type = #tpu.core_type<tc>, window_params = [{transform_indices = @transform_0, window_bounds = array<i64: 1, 8, 32>}, {pipeline_mode = #tpu.pipeline_mode<synchronous>, transform_indices = @transform_1, window_bounds = array<i64: 32, 96>}, {pipeline_mode = #tpu.pipeline_mode<synchronous>, transform_indices = @transform_2, window_bounds = array<i64: 1, 96>}, {pipeline_mode = #tpu.pipeline_mode<synchronous>, transform_indices = @transform_3, window_bounds = array<i64: 32, 32>}, {pipeline_mode = #tpu.pipeline_mode<synchronous>, transform_indices = @transform_4, window_bounds = array<i64: 1, 32>}, {pipeline_mode = #tpu.pipeline_mode<synchronous>, transform_indices = @transform_5, window_bounds = array<i64: 1, 32>}, {pipeline_mode = #tpu.pipeline_mode<synchronous>, transform_indices = @transform_6, window_bounds = array<i64: 1, 32>}, {pipeline_mode = #tpu.pipeline_mode<synchronous>, transform_indices = @transform_7, window_bounds = array<i64: 32, 128>}, {pipeline_mode = #tpu.pipeline_mode<synchronous>, transform_indices = @transform_8, window_bounds = array<i64: 1, 128>}, {pipeline_mode = #tpu.pipeline_mode<synchronous>, transform_indices = @transform_9, window_bounds = array<i64: 128, 32>}, {pipeline_mode = #tpu.pipeline_mode<synchronous>, transform_indices = @transform_10, window_bounds = array<i64: 1, 32>}, {pipeline_mode = #tpu.pipeline_mode<synchronous>, transform_indices = @transform_11, window_bounds = array<i64: 1, 32>}, {pipeline_mode = #tpu.pipeline_mode<synchronous>, transform_indices = @transform_12, window_bounds = array<i64: 1, 32>}, {transform_indices = @transform_13, window_bounds = array<i64: 1, 8, 32>}]} {
    %c0 = arith.constant 0 : index
    %c0_0 = arith.constant 0 : index
    %c0_1 = arith.constant 0 : index
    %0 = vector.load %arg1[%c0, %c0_0, %c0_1] : memref<1x8x32xbf16, #tpu.memory_space<vmem>>, vector<1x8x32xbf16>
    %1 = vector.shape_cast %0 : vector<1x8x32xbf16> to vector<8x32xbf16>
    %c0_2 = arith.constant 0 : index
    %c0_3 = arith.constant 0 : index
    %2 = vector.load %arg2[%c0_2, %c0_3] : memref<32x96xbf16, #tpu.memory_space<vmem>>, vector<32x96xbf16>
    %cst = arith.constant dense<0.000000e+00> : vector<8x96xf32>
    %3 = tpu.matmul %1, %2, %cst {dimension_numbers = #tpu.dot_dimension_numbers<[1], [0], [0], [1], [0, 0, 1, 1], [], []>} : vector<8x32xbf16>, vector<32x96xbf16>, vector<8x96xf32> -> vector<8x96xf32>
    %c0_4 = arith.constant 0 : index
    %c0_5 = arith.constant 0 : index
    %4 = vector.load %arg3[%c0_4, %c0_5] : memref<1x96xf32, #tpu.memory_space<vmem>>, vector<1x96xf32>
    %5 = vector.broadcast %4 : vector<1x96xf32> to vector<8x96xf32>
    %6 = arith.addf %3, %5 : vector<8x96xf32>
    %7 = arith.truncf %6 : vector<8x96xf32> to vector<8x96xbf16>
    %8 = vector.extract_strided_slice %7 {offsets = [0, 32], sizes = [8, 8], strides = [1, 1]} : vector<8x96xbf16> to vector<8x8xbf16>
    %9 = vector.extract_strided_slice %7 {offsets = [0, 40], sizes = [8, 8], strides = [1, 1]} : vector<8x96xbf16> to vector<8x8xbf16>
    %10 = vector.extract_strided_slice %7 {offsets = [0, 48], sizes = [8, 8], strides = [1, 1]} : vector<8x96xbf16> to vector<8x8xbf16>
    %11 = vector.extract_strided_slice %7 {offsets = [0, 56], sizes = [8, 8], strides = [1, 1]} : vector<8x96xbf16> to vector<8x8xbf16>
    %12 = vector.extract_strided_slice %7 {offsets = [0, 64], sizes = [8, 8], strides = [1, 1]} : vector<8x96xbf16> to vector<8x8xbf16>
    %13 = vector.extract_strided_slice %7 {offsets = [0, 72], sizes = [8, 8], strides = [1, 1]} : vector<8x96xbf16> to vector<8x8xbf16>
    %14 = vector.extract_strided_slice %7 {offsets = [0, 80], sizes = [8, 8], strides = [1, 1]} : vector<8x96xbf16> to vector<8x8xbf16>
    %15 = vector.extract_strided_slice %7 {offsets = [0, 88], sizes = [8, 8], strides = [1, 1]} : vector<8x96xbf16> to vector<8x8xbf16>
    %c0_6 = arith.constant 0 : index
    %c0_7 = arith.constant 0 : index
    %16 = vector.load %arg4[%c0_6, %c0_7] : memref<32x32xbf16, #tpu.memory_space<vmem>>, vector<32x32xbf16>
    %17 = vector.extract_strided_slice %16 {offsets = [0, 0], sizes = [8, 32], strides = [1, 1]} : vector<32x32xbf16> to vector<8x32xbf16>
    %18 = vector.extract_strided_slice %16 {offsets = [8, 0], sizes = [8, 32], strides = [1, 1]} : vector<32x32xbf16> to vector<8x32xbf16>
    %19 = vector.extract_strided_slice %16 {offsets = [16, 0], sizes = [8, 32], strides = [1, 1]} : vector<32x32xbf16> to vector<8x32xbf16>
    %20 = vector.extract_strided_slice %16 {offsets = [24, 0], sizes = [8, 32], strides = [1, 1]} : vector<32x32xbf16> to vector<8x32xbf16>
    %c0_8 = arith.constant 0 : index
    %c0_9 = arith.constant 0 : index
    %21 = vector.load %arg5[%c0_8, %c0_9] : memref<1x32xf32, #tpu.memory_space<vmem>>, vector<1x32xf32>
    %c0_10 = arith.constant 0 : index
    %c0_11 = arith.constant 0 : index
    %22 = vector.load %arg9[%c0_10, %c0_11] : memref<1x128xf32, #tpu.memory_space<vmem>>, vector<1x128xf32>
    %c0_12 = arith.constant 0 : index
    %c0_13 = arith.constant 0 : index
    %23 = vector.load %arg11[%c0_12, %c0_13] : memref<1x32xf32, #tpu.memory_space<vmem>>, vector<1x32xf32>
    %c0_14 = arith.constant 0 : index
    %c0_15 = arith.constant 0 : index
    %24 = vector.load %arg6[%c0_14, %c0_15] : memref<1x32xf32, #tpu.memory_space<vmem>>, vector<1x32xf32>
    %c0_16 = arith.constant 0 : index
    %c0_17 = arith.constant 0 : index
    %25 = vector.load %arg7[%c0_16, %c0_17] : memref<1x32xf32, #tpu.memory_space<vmem>>, vector<1x32xf32>
    %c0_18 = arith.constant 0 : index
    %c0_19 = arith.constant 0 : index
    %26 = vector.load %arg12[%c0_18, %c0_19] : memref<1x32xf32, #tpu.memory_space<vmem>>, vector<1x32xf32>
    %c0_20 = arith.constant 0 : index
    %c0_21 = arith.constant 0 : index
    %27 = vector.load %arg13[%c0_20, %c0_21] : memref<1x32xf32, #tpu.memory_space<vmem>>, vector<1x32xf32>
    %c0_22 = arith.constant 0 : index
    %c0_23 = arith.constant 0 : index
    %28 = vector.load %arg8[%c0_22, %c0_23] : memref<32x128xbf16, #tpu.memory_space<vmem>>, vector<32x128xbf16>
    %c0_24 = arith.constant 0 : index
    %c0_25 = arith.constant 0 : index
    %29 = vector.load %arg10[%c0_24, %c0_25] : memref<128x32xbf16, #tpu.memory_space<vmem>>, vector<128x32xbf16>
    %30 = tpu.iota {dimensions = array<i32: 0>} : vector<8x8xi32>
    %31 = tpu.iota {dimensions = array<i32: 1>} : vector<8x8xi32>
    %c0_i32 = arith.constant 0 : i32
    %32 = vector.broadcast %c0_i32 : i32 to vector<8x8xi32>
    %33 = arith.addi %30, %32 : vector<8x8xi32>
    %34 = arith.cmpi sle, %31, %33 : vector<8x8xi32>
    %cst_26 = arith.constant 0.000000e+00 : f32
    %35 = vector.broadcast %cst_26 : f32 to vector<8x32xf32>
    %36 = vector.extract_strided_slice %7 {offsets = [0, 0], sizes = [8, 8], strides = [1, 1]} : vector<8x96xbf16> to vector<8x8xbf16>
    "tpu.trace_start"() <{level = 10 : i32, message = "qd,kd->qk"}> : () -> ()
    %cst_27 = arith.constant dense<0.000000e+00> : vector<8x8xf32>
    %37 = tpu.matmul %36, %8, %cst_27 {dimension_numbers = #tpu.dot_dimension_numbers<[1], [1], [0], [0], [0, 0, 1, 0], [], []>} : vector<8x8xbf16>, vector<8x8xbf16>, vector<8x8xf32> -> vector<8x8xf32>
    %cst_28 = arith.constant -1.000000e+30 : f32
    "tpu.trace_stop"() : () -> ()
    %38 = vector.broadcast %cst_28 : f32 to vector<8x8xf32>
    %39 = arith.select %34, %37, %38 : vector<8x8xi1>, vector<8x8xf32>
    %cst_29 = arith.constant dense<0xFF800000> : vector<8xf32>
    %40 = vector.multi_reduction <maximumf>, %39, %cst_29 [1] : vector<8x8xf32> to vector<8xf32>
    %41 = vector.shape_cast %40 : vector<8xf32> to vector<8x1xf32>
    %42 = vector.broadcast %41 : vector<8x1xf32> to vector<8x8xf32>
    %43 = arith.subf %39, %42 : vector<8x8xf32>
    %44 = math.exp %43 : vector<8x8xf32>
    %cst_30 = arith.constant dense<0.000000e+00> : vector<8xf32>
    %45 = vector.multi_reduction <add>, %44, %cst_30 [1] : vector<8x8xf32> to vector<8xf32>
    %46 = vector.shape_cast %45 : vector<8xf32> to vector<8x1xf32>
    %47 = tpu.reciprocal %46 {approx = true} : vector<8x1xf32> -> vector<8x1xf32>
    %48 = vector.broadcast %47 : vector<8x1xf32> to vector<8x8xf32>
    %49 = arith.mulf %44, %48 : vector<8x8xf32>
    %50 = arith.truncf %49 : vector<8x8xf32> to vector<8x8xbf16>
    %cst_31 = arith.constant dense<0.000000e+00> : vector<8x8xf32>
    %51 = tpu.matmul %50, %12, %cst_31 {dimension_numbers = #tpu.dot_dimension_numbers<[1], [0], [0], [1], [0, 0, 1, 1], [], []>} : vector<8x8xbf16>, vector<8x8xbf16>, vector<8x8xf32> -> vector<8x8xf32>
    %52 = arith.truncf %51 : vector<8x8xf32> to vector<8x8xbf16>
    %cst_32 = arith.constant dense<0.000000e+00> : vector<8x32xf32>
    %53 = tpu.matmul %52, %17, %cst_32 {dimension_numbers = #tpu.dot_dimension_numbers<[1], [0], [0], [1], [0, 0, 1, 1], [], []>} : vector<8x8xbf16>, vector<8x32xbf16>, vector<8x32xf32> -> vector<8x32xf32>
    %54 = arith.addf %35, %53 : vector<8x32xf32>
    %55 = vector.extract_strided_slice %7 {offsets = [0, 8], sizes = [8, 8], strides = [1, 1]} : vector<8x96xbf16> to vector<8x8xbf16>
    "tpu.trace_start"() <{level = 10 : i32, message = "qd,kd->qk"}> : () -> ()
    %cst_33 = arith.constant dense<0.000000e+00> : vector<8x8xf32>
    %56 = tpu.matmul %55, %9, %cst_33 {dimension_numbers = #tpu.dot_dimension_numbers<[1], [1], [0], [0], [0, 0, 1, 0], [], []>} : vector<8x8xbf16>, vector<8x8xbf16>, vector<8x8xf32> -> vector<8x8xf32>
    %cst_34 = arith.constant -1.000000e+30 : f32
    "tpu.trace_stop"() : () -> ()
    %57 = vector.broadcast %cst_34 : f32 to vector<8x8xf32>
    %58 = arith.select %34, %56, %57 : vector<8x8xi1>, vector<8x8xf32>
    %cst_35 = arith.constant dense<0xFF800000> : vector<8xf32>
    %59 = vector.multi_reduction <maximumf>, %58, %cst_35 [1] : vector<8x8xf32> to vector<8xf32>
    %60 = vector.shape_cast %59 : vector<8xf32> to vector<8x1xf32>
    %61 = vector.broadcast %60 : vector<8x1xf32> to vector<8x8xf32>
    %62 = arith.subf %58, %61 : vector<8x8xf32>
    %63 = math.exp %62 : vector<8x8xf32>
    %cst_36 = arith.constant dense<0.000000e+00> : vector<8xf32>
    %64 = vector.multi_reduction <add>, %63, %cst_36 [1] : vector<8x8xf32> to vector<8xf32>
    %65 = vector.shape_cast %64 : vector<8xf32> to vector<8x1xf32>
    %66 = tpu.reciprocal %65 {approx = true} : vector<8x1xf32> -> vector<8x1xf32>
    %67 = vector.broadcast %66 : vector<8x1xf32> to vector<8x8xf32>
    %68 = arith.mulf %63, %67 : vector<8x8xf32>
    %69 = arith.truncf %68 : vector<8x8xf32> to vector<8x8xbf16>
    %cst_37 = arith.constant dense<0.000000e+00> : vector<8x8xf32>
    %70 = tpu.matmul %69, %13, %cst_37 {dimension_numbers = #tpu.dot_dimension_numbers<[1], [0], [0], [1], [0, 0, 1, 1], [], []>} : vector<8x8xbf16>, vector<8x8xbf16>, vector<8x8xf32> -> vector<8x8xf32>
    %71 = arith.truncf %70 : vector<8x8xf32> to vector<8x8xbf16>
    %cst_38 = arith.constant dense<0.000000e+00> : vector<8x32xf32>
    %72 = tpu.matmul %71, %18, %cst_38 {dimension_numbers = #tpu.dot_dimension_numbers<[1], [0], [0], [1], [0, 0, 1, 1], [], []>} : vector<8x8xbf16>, vector<8x32xbf16>, vector<8x32xf32> -> vector<8x32xf32>
    %73 = arith.addf %54, %72 : vector<8x32xf32>
    %74 = vector.extract_strided_slice %7 {offsets = [0, 16], sizes = [8, 8], strides = [1, 1]} : vector<8x96xbf16> to vector<8x8xbf16>
    "tpu.trace_start"() <{level = 10 : i32, message = "qd,kd->qk"}> : () -> ()
    %cst_39 = arith.constant dense<0.000000e+00> : vector<8x8xf32>
    %75 = tpu.matmul %74, %10, %cst_39 {dimension_numbers = #tpu.dot_dimension_numbers<[1], [1], [0], [0], [0, 0, 1, 0], [], []>} : vector<8x8xbf16>, vector<8x8xbf16>, vector<8x8xf32> -> vector<8x8xf32>
    %cst_40 = arith.constant -1.000000e+30 : f32
    "tpu.trace_stop"() : () -> ()
    %76 = vector.broadcast %cst_40 : f32 to vector<8x8xf32>
    %77 = arith.select %34, %75, %76 : vector<8x8xi1>, vector<8x8xf32>
    %cst_41 = arith.constant dense<0xFF800000> : vector<8xf32>
    %78 = vector.multi_reduction <maximumf>, %77, %cst_41 [1] : vector<8x8xf32> to vector<8xf32>
    %79 = vector.shape_cast %78 : vector<8xf32> to vector<8x1xf32>
    %80 = vector.broadcast %79 : vector<8x1xf32> to vector<8x8xf32>
    %81 = arith.subf %77, %80 : vector<8x8xf32>
    %82 = math.exp %81 : vector<8x8xf32>
    %cst_42 = arith.constant dense<0.000000e+00> : vector<8xf32>
    %83 = vector.multi_reduction <add>, %82, %cst_42 [1] : vector<8x8xf32> to vector<8xf32>
    %84 = vector.shape_cast %83 : vector<8xf32> to vector<8x1xf32>
    %85 = tpu.reciprocal %84 {approx = true} : vector<8x1xf32> -> vector<8x1xf32>
    %86 = vector.broadcast %85 : vector<8x1xf32> to vector<8x8xf32>
    %87 = arith.mulf %82, %86 : vector<8x8xf32>
    %88 = arith.truncf %87 : vector<8x8xf32> to vector<8x8xbf16>
    %cst_43 = arith.constant dense<0.000000e+00> : vector<8x8xf32>
    %89 = tpu.matmul %88, %14, %cst_43 {dimension_numbers = #tpu.dot_dimension_numbers<[1], [0], [0], [1], [0, 0, 1, 1], [], []>} : vector<8x8xbf16>, vector<8x8xbf16>, vector<8x8xf32> -> vector<8x8xf32>
    %90 = arith.truncf %89 : vector<8x8xf32> to vector<8x8xbf16>
    %cst_44 = arith.constant dense<0.000000e+00> : vector<8x32xf32>
    %91 = tpu.matmul %90, %19, %cst_44 {dimension_numbers = #tpu.dot_dimension_numbers<[1], [0], [0], [1], [0, 0, 1, 1], [], []>} : vector<8x8xbf16>, vector<8x32xbf16>, vector<8x32xf32> -> vector<8x32xf32>
    %92 = arith.addf %73, %91 : vector<8x32xf32>
    %93 = vector.extract_strided_slice %7 {offsets = [0, 24], sizes = [8, 8], strides = [1, 1]} : vector<8x96xbf16> to vector<8x8xbf16>
    "tpu.trace_start"() <{level = 10 : i32, message = "qd,kd->qk"}> : () -> ()
    %cst_45 = arith.constant dense<0.000000e+00> : vector<8x8xf32>
    %94 = tpu.matmul %93, %11, %cst_45 {dimension_numbers = #tpu.dot_dimension_numbers<[1], [1], [0], [0], [0, 0, 1, 0], [], []>} : vector<8x8xbf16>, vector<8x8xbf16>, vector<8x8xf32> -> vector<8x8xf32>
    %cst_46 = arith.constant -1.000000e+30 : f32
    "tpu.trace_stop"() : () -> ()
    %95 = vector.broadcast %cst_46 : f32 to vector<8x8xf32>
    %96 = arith.select %34, %94, %95 : vector<8x8xi1>, vector<8x8xf32>
    %cst_47 = arith.constant dense<0xFF800000> : vector<8xf32>
    %97 = vector.multi_reduction <maximumf>, %96, %cst_47 [1] : vector<8x8xf32> to vector<8xf32>
    %98 = vector.shape_cast %97 : vector<8xf32> to vector<8x1xf32>
    %99 = vector.broadcast %98 : vector<8x1xf32> to vector<8x8xf32>
    %100 = arith.subf %96, %99 : vector<8x8xf32>
    %101 = math.exp %100 : vector<8x8xf32>
    %cst_48 = arith.constant dense<0.000000e+00> : vector<8xf32>
    %102 = vector.multi_reduction <add>, %101, %cst_48 [1] : vector<8x8xf32> to vector<8xf32>
    %103 = vector.shape_cast %102 : vector<8xf32> to vector<8x1xf32>
    %104 = tpu.reciprocal %103 {approx = true} : vector<8x1xf32> -> vector<8x1xf32>
    %105 = vector.broadcast %104 : vector<8x1xf32> to vector<8x8xf32>
    %106 = arith.mulf %101, %105 : vector<8x8xf32>
    %107 = arith.truncf %106 : vector<8x8xf32> to vector<8x8xbf16>
    %cst_49 = arith.constant dense<0.000000e+00> : vector<8x8xf32>
    %108 = tpu.matmul %107, %15, %cst_49 {dimension_numbers = #tpu.dot_dimension_numbers<[1], [0], [0], [1], [0, 0, 1, 1], [], []>} : vector<8x8xbf16>, vector<8x8xbf16>, vector<8x8xf32> -> vector<8x8xf32>
    %109 = arith.truncf %108 : vector<8x8xf32> to vector<8x8xbf16>
    %cst_50 = arith.constant dense<0.000000e+00> : vector<8x32xf32>
    %110 = tpu.matmul %109, %20, %cst_50 {dimension_numbers = #tpu.dot_dimension_numbers<[1], [0], [0], [1], [0, 0, 1, 1], [], []>} : vector<8x8xbf16>, vector<8x32xbf16>, vector<8x32xf32> -> vector<8x32xf32>
    %111 = arith.addf %92, %110 : vector<8x32xf32>
    %112 = vector.broadcast %21 : vector<1x32xf32> to vector<8x32xf32>
    %113 = arith.addf %111, %112 : vector<8x32xf32>
    %114 = arith.extf %1 : vector<8x32xbf16> to vector<8x32xf32>
    %115 = arith.addf %114, %113 : vector<8x32xf32>
    %cst_51 = arith.constant dense<0.000000e+00> : vector<8xf32>
    %116 = vector.multi_reduction <add>, %115, %cst_51 [1] : vector<8x32xf32> to vector<8xf32>
    %117 = vector.shape_cast %116 : vector<8xf32> to vector<8x1xf32>
    %cst_52 = arith.constant 3.200000e+01 : f32
    %118 = vector.broadcast %cst_52 : f32 to vector<8x1xf32>
    %119 = arith.divf %117, %118 : vector<8x1xf32>
    %120 = vector.broadcast %119 : vector<8x1xf32> to vector<8x32xf32>
    %121 = arith.subf %115, %120 : vector<8x32xf32>
    %122 = arith.mulf %121, %121 : vector<8x32xf32>
    %cst_53 = arith.constant dense<0.000000e+00> : vector<8xf32>
    %123 = vector.multi_reduction <add>, %122, %cst_53 [1] : vector<8x32xf32> to vector<8xf32>
    %124 = vector.shape_cast %123 : vector<8xf32> to vector<8x1xf32>
    %cst_54 = arith.constant 3.200000e+01 : f32
    %125 = vector.broadcast %cst_54 : f32 to vector<8x1xf32>
    %126 = arith.divf %124, %125 : vector<8x1xf32>
    %127 = vector.broadcast %119 : vector<8x1xf32> to vector<8x32xf32>
    %128 = arith.subf %115, %127 : vector<8x32xf32>
    %cst_55 = arith.constant 9.99999974E-6 : f32
    %129 = vector.broadcast %cst_55 : f32 to vector<8x1xf32>
    %130 = arith.addf %126, %129 : vector<8x1xf32>
    %131 = math.rsqrt %130 : vector<8x1xf32>
    %132 = vector.broadcast %131 : vector<8x1xf32> to vector<8x32xf32>
    %133 = arith.mulf %128, %132 : vector<8x32xf32>
    %134 = vector.broadcast %24 : vector<1x32xf32> to vector<8x32xf32>
    %135 = arith.mulf %133, %134 : vector<8x32xf32>
    %136 = vector.broadcast %25 : vector<1x32xf32> to vector<8x32xf32>
    %137 = arith.addf %135, %136 : vector<8x32xf32>
    %138 = arith.truncf %137 : vector<8x32xf32> to vector<8x32xbf16>
    %cst_56 = arith.constant dense<0.000000e+00> : vector<8x128xf32>
    %139 = tpu.matmul %138, %28, %cst_56 {dimension_numbers = #tpu.dot_dimension_numbers<[1], [0], [0], [1], [0, 0, 1, 1], [], []>} : vector<8x32xbf16>, vector<32x128xbf16>, vector<8x128xf32> -> vector<8x128xf32>
    %140 = vector.broadcast %22 : vector<1x128xf32> to vector<8x128xf32>
    %141 = arith.addf %139, %140 : vector<8x128xf32>
    %cst_57 = arith.constant 5.000000e-01 : f32
    %142 = vector.broadcast %cst_57 : f32 to vector<8x128xf32>
    %143 = arith.mulf %142, %141 : vector<8x128xf32>
    %cst_58 = arith.constant 4.471500e-02 : f32
    %144 = vector.broadcast %cst_58 : f32 to vector<8x128xf32>
    %145 = arith.mulf %144, %141 : vector<8x128xf32>
    %146 = arith.mulf %145, %141 : vector<8x128xf32>
    %147 = arith.mulf %146, %141 : vector<8x128xf32>
    %148 = arith.addf %141, %147 : vector<8x128xf32>
    %cst_59 = arith.constant 0.797884583 : f32
    %149 = vector.broadcast %cst_59 : f32 to vector<8x128xf32>
    %150 = arith.mulf %149, %148 : vector<8x128xf32>
    %151 = math.tanh %150 : vector<8x128xf32>
    %cst_60 = arith.constant 1.000000e+00 : f32
    %152 = vector.broadcast %cst_60 : f32 to vector<8x128xf32>
    %153 = arith.addf %152, %151 : vector<8x128xf32>
    %154 = arith.mulf %143, %153 : vector<8x128xf32>
    %155 = arith.truncf %154 : vector<8x128xf32> to vector<8x128xbf16>
    %cst_61 = arith.constant dense<0.000000e+00> : vector<8x32xf32>
    %156 = tpu.matmul %155, %29, %cst_61 {dimension_numbers = #tpu.dot_dimension_numbers<[1], [0], [0], [1], [0, 0, 1, 1], [], []>} : vector<8x128xbf16>, vector<128x32xbf16>, vector<8x32xf32> -> vector<8x32xf32>
    %157 = vector.broadcast %23 : vector<1x32xf32> to vector<8x32xf32>
    %158 = arith.addf %156, %157 : vector<8x32xf32>
    %159 = arith.addf %137, %158 : vector<8x32xf32>
    %cst_62 = arith.constant dense<0.000000e+00> : vector<8xf32>
    %160 = vector.multi_reduction <add>, %159, %cst_62 [1] : vector<8x32xf32> to vector<8xf32>
    %161 = vector.shape_cast %160 : vector<8xf32> to vector<8x1xf32>
    %cst_63 = arith.constant 3.200000e+01 : f32
    %162 = vector.broadcast %cst_63 : f32 to vector<8x1xf32>
    %163 = arith.divf %161, %162 : vector<8x1xf32>
    %164 = vector.broadcast %163 : vector<8x1xf32> to vector<8x32xf32>
    %165 = arith.subf %159, %164 : vector<8x32xf32>
    %166 = arith.mulf %165, %165 : vector<8x32xf32>
    %cst_64 = arith.constant dense<0.000000e+00> : vector<8xf32>
    %167 = vector.multi_reduction <add>, %166, %cst_64 [1] : vector<8x32xf32> to vector<8xf32>
    %168 = vector.shape_cast %167 : vector<8xf32> to vector<8x1xf32>
    %cst_65 = arith.constant 3.200000e+01 : f32
    %169 = vector.broadcast %cst_65 : f32 to vector<8x1xf32>
    %170 = arith.divf %168, %169 : vector<8x1xf32>
    %171 = vector.broadcast %163 : vector<8x1xf32> to vector<8x32xf32>
    %172 = arith.subf %159, %171 : vector<8x32xf32>
    %cst_66 = arith.constant 9.99999974E-6 : f32
    %173 = vector.broadcast %cst_66 : f32 to vector<8x1xf32>
    %174 = arith.addf %170, %173 : vector<8x1xf32>
    %175 = math.rsqrt %174 : vector<8x1xf32>
    %176 = vector.broadcast %175 : vector<8x1xf32> to vector<8x32xf32>
    %177 = arith.mulf %172, %176 : vector<8x32xf32>
    %178 = vector.broadcast %26 : vector<1x32xf32> to vector<8x32xf32>
    %179 = arith.mulf %177, %178 : vector<8x32xf32>
    %180 = vector.broadcast %27 : vector<1x32xf32> to vector<8x32xf32>
    %181 = arith.addf %179, %180 : vector<8x32xf32>
    %182 = arith.truncf %181 : vector<8x32xf32> to vector<8x32xbf16>
    %c0_67 = arith.constant 0 : index
    %c0_68 = arith.constant 0 : index
    %c0_69 = arith.constant 0 : index
    %183 = vector.load %arg14[%c0_67, %c0_68, %c0_69] : memref<1x8x32xbf16, #tpu.memory_space<vmem>>, vector<1x8x32xbf16>
    %184 = vector.shape_cast %183 : vector<1x8x32xbf16> to vector<8x32xbf16>
    %185 = vector.shape_cast %182 : vector<8x32xbf16> to vector<1x8x32xbf16>
    tpu.vector_store %arg14[%c0_67, %c0_68, %c0_69], %185 {strides = array<i32>} : memref<1x8x32xbf16, #tpu.memory_space<vmem>>, vector<1x8x32xbf16>,
    return
  }
  func.func @transform_0(%arg0: i32) -> (i32, i32, i32) {
    %c0_i32 = arith.constant 0 : i32
    %c0_i32_0 = arith.constant 0 : i32
    %c0_i32_1 = arith.constant 0 : i32
    return %arg0, %c0_i32, %c0_i32_0 : i32, i32, i32
  }
  func.func @transform_1(%arg0: i32) -> (i32, i32) {
    %c0_i32 = arith.constant 0 : i32
    %c0_i32_0 = arith.constant 0 : i32
    %c0_i32_1 = arith.constant 0 : i32
    return %c0_i32, %c0_i32_0 : i32, i32
  }
  func.func @transform_2(%arg0: i32) -> (i32, i32) {
    %c0_i32 = arith.constant 0 : i32
    %c0_i32_0 = arith.constant 0 : i32
    %c0_i32_1 = arith.constant 0 : i32
    return %c0_i32, %c0_i32_0 : i32, i32
  }
  func.func @transform_3(%arg0: i32) -> (i32, i32) {
    %c0_i32 = arith.constant 0 : i32
    %c0_i32_0 = arith.constant 0 : i32
    %c0_i32_1 = arith.constant 0 : i32
    return %c0_i32, %c0_i32_0 : i32, i32
  }
  func.func @transform_4(%arg0: i32) -> (i32, i32) {
    %c0_i32 = arith.constant 0 : i32
    %c0_i32_0 = arith.constant 0 : i32
    %c0_i32_1 = arith.constant 0 : i32
    return %c0_i32, %c0_i32_0 : i32, i32
  }
  func.func @transform_5(%arg0: i32) -> (i32, i32) {
    %c0_i32 = arith.constant 0 : i32
    %c0_i32_0 = arith.constant 0 : i32
    %c0_i32_1 = arith.constant 0 : i32
    return %c0_i32, %c0_i32_0 : i32, i32
  }
  func.func @transform_6(%arg0: i32) -> (i32, i32) {
    %c0_i32 = arith.constant 0 : i32
    %c0_i32_0 = arith.constant 0 : i32
    %c0_i32_1 = arith.constant 0 : i32
    return %c0_i32, %c0_i32_0 : i32, i32
  }
  func.func @transform_7(%arg0: i32) -> (i32, i32) {
    %c0_i32 = arith.constant 0 : i32
    %c0_i32_0 = arith.constant 0 : i32
    %c0_i32_1 = arith.constant 0 : i32
    return %c0_i32, %c0_i32_0 : i32, i32
  }
  func.func @transform_8(%arg0: i32) -> (i32, i32) {
    %c0_i32 = arith.constant 0 : i32
    %c0_i32_0 = arith.constant 0 : i32
    %c0_i32_1 = arith.constant 0 : i32
    return %c0_i32, %c0_i32_0 : i32, i32
  }
  func.func @transform_9(%arg0: i32) -> (i32, i32) {
    %c0_i32 = arith.constant 0 : i32
    %c0_i32_0 = arith.constant 0 : i32
    %c0_i32_1 = arith.constant 0 : i32
    return %c0_i32, %c0_i32_0 : i32, i32
  }
  func.func @transform_10(%arg0: i32) -> (i32, i32) {
    %c0_i32 = arith.constant 0 : i32
    %c0_i32_0 = arith.constant 0 : i32
    %c0_i32_1 = arith.constant 0 : i32
    return %c0_i32, %c0_i32_0 : i32, i32
  }
  func.func @transform_11(%arg0: i32) -> (i32, i32) {
    %c0_i32 = arith.constant 0 : i32
    %c0_i32_0 = arith.constant 0 : i32
    %c0_i32_1 = arith.constant 0 : i32
    return %c0_i32, %c0_i32_0 : i32, i32
  }
  func.func @transform_12(%arg0: i32) -> (i32, i32) {
    %c0_i32 = arith.constant 0 : i32
    %c0_i32_0 = arith.constant 0 : i32
    %c0_i32_1 = arith.constant 0 : i32
    return %c0_i32, %c0_i32_0 : i32, i32
  }
  func.func @transform_13(%arg0: i32) -> (i32, i32, i32) {
    %c0_i32 = arith.constant 0 : i32
    %c0_i32_0 = arith.constant 0 : i32
    %c0_i32_1 = arith.constant 0 : i32
    return %arg0, %c0_i32, %c0_i32_0 : i32, i32, i32
  }
}

module attributes {stable_mosaic.version = 11 : i64} {
  func.func @_encoder_layer_kernel(%arg0: i32, %arg1: memref<1x8x32xbf16, #tpu.memory_space<vmem>>, %arg2: memref<32x96xbf16, #tpu.memory_space<vmem>>, %arg3: memref<1x96xf32, #tpu.memory_space<vmem>>, %arg4: memref<32x32xbf16, #tpu.memory_space<vmem>>, %arg5: memref<1x32xf32, #tpu.memory_space<vmem>>, %arg6: memref<1x32xf32, #tpu.memory_space<vmem>>, %arg7: memref<1x32xf32, #tpu.memory_space<vmem>>, %arg8: memref<32x128xbf16, #tpu.memory_space<vmem>>, %arg9: memref<1x128xf32, #tpu.memory_space<vmem>>, %arg10: memref<128x32xbf16, #tpu.memory_space<vmem>>, %arg11: memref<1x32xf32, #tpu.memory_space<vmem>>, %arg12: memref<1x32xf32, #tpu.memory_space<vmem>>, %arg13: memref<1x32xf32, #tpu.memory_space<vmem>>, %arg14: memref<1x8x32xbf16, #tpu.memory_space<vmem>>) attributes {dimension_semantics = [#tpu.dimension_semantics<parallel>], iteration_bounds = array<i64: 2>, scalar_prefetch = 0 : i64, scratch_operands = 0 : i64, tpu.core_type = #tpu.core_type<tc>, window_params = [{transform_indices = @transform_0, window_bounds = array<i64: 1, 8, 32>}, {pipeline_mode = #tpu.pipeline_mode<synchronous>, transform_indices = @transform_1, window_bounds = array<i64: 32, 96>}, {pipeline_mode = #tpu.pipeline_mode<synchronous>, transform_indices = @transform_2, window_bounds = array<i64: 1, 96>}, {pipeline_mode = #tpu.pipeline_mode<synchronous>, transform_indices = @transform_3, window_bounds = array<i64: 32, 32>}, {pipeline_mode = #tpu.pipeline_mode<synchronous>, transform_indices = @transform_4, window_bounds = array<i64: 1, 32>}, {pipeline_mode = #tpu.pipeline_mode<synchronous>, transform_indices = @transform_5, window_bounds = array<i64: 1, 32>}, {pipeline_mode = #tpu.pipeline_mode<synchronous>, transform_indices = @transform_6, window_bounds = array<i64: 1, 32>}, {pipeline_mode = #tpu.pipeline_mode<synchronous>, transform_indices = @transform_7, window_bounds = array<i64: 32, 128>}, {pipeline_mode = #tpu.pipeline_mode<synchronous>, transform_indices = @transform_8, window_bounds = array<i64: 1, 128>}, {pipeline_mode = #tpu.pipeline_mode<synchronous>, transform_indices = @transform_9, window_bounds = array<i64: 128, 32>}, {pipeline_mode = #tpu.pipeline_mode<synchronous>, transform_indices = @transform_10, window_bounds = array<i64: 1, 32>}, {pipeline_mode = #tpu.pipeline_mode<synchronous>, transform_indices = @transform_11, window_bounds = array<i64: 1, 32>}, {pipeline_mode = #tpu.pipeline_mode<synchronous>, transform_indices = @transform_12, window_bounds = array<i64: 1, 32>}, {transform_indices = @transform_13, window_bounds = array<i64: 1, 8, 32>}]} {
    %c0 = arith.constant 0 : index
    %c0_0 = arith.constant 0 : index
    %c0_1 = arith.constant 0 : index
    %0 = vector.load %arg1[%c0, %c0_0, %c0_1] : memref<1x8x32xbf16, #tpu.memory_space<vmem>>, vector<1x8x32xbf16>
    %1 = vector.shape_cast %0 : vector<1x8x32xbf16> to vector<8x32xbf16>
    %c0_2 = arith.constant 0 : index
    %c0_3 = arith.constant 0 : index
    %2 = vector.load %arg2[%c0_2, %c0_3] : memref<32x96xbf16, #tpu.memory_space<vmem>>, vector<32x96xbf16>
    %cst = arith.constant dense<0.000000e+00> : vector<8x96xf32>
    %3 = tpu.matmul %1, %2, %cst {dimension_numbers = #tpu.dot_dimension_numbers<[1], [0], [0], [1], [0, 0, 1, 1], [], []>} : vector<8x32xbf16>, vector<32x96xbf16>, vector<8x96xf32> -> vector<8x96xf32>
    %c0_4 = arith.constant 0 : index
    %c0_5 = arith.constant 0 : index
    %4 = vector.load %arg3[%c0_4, %c0_5] : memref<1x96xf32, #tpu.memory_space<vmem>>, vector<1x96xf32>
    %5 = vector.broadcast %4 : vector<1x96xf32> to vector<8x96xf32>
    %6 = arith.addf %3, %5 : vector<8x96xf32>
    %7 = arith.truncf %6 : vector<8x96xf32> to vector<8x96xbf16>
    %8 = vector.extract_strided_slice %7 {offsets = [0, 32], sizes = [8, 8], strides = [1, 1]} : vector<8x96xbf16> to vector<8x8xbf16>
    %9 = vector.extract_strided_slice %7 {offsets = [0, 40], sizes = [8, 8], strides = [1, 1]} : vector<8x96xbf16> to vector<8x8xbf16>
    %10 = vector.extract_strided_slice %7 {offsets = [0, 48], sizes = [8, 8], strides = [1, 1]} : vector<8x96xbf16> to vector<8x8xbf16>
    %11 = vector.extract_strided_slice %7 {offsets = [0, 56], sizes = [8, 8], strides = [1, 1]} : vector<8x96xbf16> to vector<8x8xbf16>
    %12 = vector.extract_strided_slice %7 {offsets = [0, 64], sizes = [8, 8], strides = [1, 1]} : vector<8x96xbf16> to vector<8x8xbf16>
    %13 = vector.extract_strided_slice %7 {offsets = [0, 72], sizes = [8, 8], strides = [1, 1]} : vector<8x96xbf16> to vector<8x8xbf16>
    %14 = vector.extract_strided_slice %7 {offsets = [0, 80], sizes = [8, 8], strides = [1, 1]} : vector<8x96xbf16> to vector<8x8xbf16>
    %15 = vector.extract_strided_slice %7 {offsets = [0, 88], sizes = [8, 8], strides = [1, 1]} : vector<8x96xbf16> to vector<8x8xbf16>
    %c0_6 = arith.constant 0 : index
    %c0_7 = arith.constant 0 : index
    %16 = vector.load %arg4[%c0_6, %c0_7] : memref<32x32xbf16, #tpu.memory_space<vmem>>, vector<32x32xbf16>
    %17 = vector.extract_strided_slice %16 {offsets = [0, 0], sizes = [8, 32], strides = [1, 1]} : vector<32x32xbf16> to vector<8x32xbf16>
    %18 = vector.extract_strided_slice %16 {offsets = [8, 0], sizes = [8, 32], strides = [1, 1]} : vector<32x32xbf16> to vector<8x32xbf16>
    %19 = vector.extract_strided_slice %16 {offsets = [16, 0], sizes = [8, 32], strides = [1, 1]} : vector<32x32xbf16> to vector<8x32xbf16>
    %20 = vector.extract_strided_slice %16 {offsets = [24, 0], sizes = [8, 32], strides = [1, 1]} : vector<32x32xbf16> to vector<8x32xbf16>
    %c0_8 = arith.constant 0 : index
    %c0_9 = arith.constant 0 : index
    %21 = vector.load %arg5[%c0_8, %c0_9] : memref<1x32xf32, #tpu.memory_space<vmem>>, vector<1x32xf32>
    %c0_10 = arith.constant 0 : index
    %c0_11 = arith.constant 0 : index
    %22 = vector.load %arg9[%c0_10, %c0_11] : memref<1x128xf32, #tpu.memory_space<vmem>>, vector<1x128xf32>
    %c0_12 = arith.constant 0 : index
    %c0_13 = arith.constant 0 : index
    %23 = vector.load %arg11[%c0_12, %c0_13] : memref<1x32xf32, #tpu.memory_space<vmem>>, vector<1x32xf32>
    %c0_14 = arith.constant 0 : index
    %c0_15 = arith.constant 0 : index
    %24 = vector.load %arg6[%c0_14, %c0_15] : memref<1x32xf32, #tpu.memory_space<vmem>>, vector<1x32xf32>
    %c0_16 = arith.constant 0 : index
    %c0_17 = arith.constant 0 : index
    %25 = vector.load %arg7[%c0_16, %c0_17] : memref<1x32xf32, #tpu.memory_space<vmem>>, vector<1x32xf32>
    %c0_18 = arith.constant 0 : index
    %c0_19 = arith.constant 0 : index
    %26 = vector.load %arg12[%c0_18, %c0_19] : memref<1x32xf32, #tpu.memory_space<vmem>>, vector<1x32xf32>
    %c0_20 = arith.constant 0 : index
    %c0_21 = arith.constant 0 : index
    %27 = vector.load %arg13[%c0_20, %c0_21] : memref<1x32xf32, #tpu.memory_space<vmem>>, vector<1x32xf32>
    %c0_22 = arith.constant 0 : index
    %c0_23 = arith.constant 0 : index
    %28 = vector.load %arg8[%c0_22, %c0_23] : memref<32x128xbf16, #tpu.memory_space<vmem>>, vector<32x128xbf16>
    %c0_24 = arith.constant 0 : index
    %c0_25 = arith.constant 0 : index
    %29 = vector.load %arg10[%c0_24, %c0_25] : memref<128x32xbf16, #tpu.memory_space<vmem>>, vector<128x32xbf16>
    %30 = tpu.iota {dimensions = array<i32: 0>} : vector<8x8xi32>
    %31 = tpu.iota {dimensions = array<i32: 1>} : vector<8x8xi32>
    %c0_i32 = arith.constant 0 : i32
    %32 = vector.broadcast %c0_i32 : i32 to vector<8x8xi32>
    %33 = arith.addi %30, %32 : vector<8x8xi32>
    %34 = arith.cmpi sle, %31, %33 : vector<8x8xi32>
    %cst_26 = arith.constant 0.000000e+00 : f32
    %35 = vector.broadcast %cst_26 : f32 to vector<8x32xf32>
    %36 = vector.extract_strided_slice %7 {offsets = [0, 0], sizes = [8, 8], strides = [1, 1]} : vector<8x96xbf16> to vector<8x8xbf16>
    "tpu.trace_start"() <{level = 10 : i32, message = "qd,kd->qk"}> : () -> ()
    %cst_27 = arith.constant dense<0.000000e+00> : vector<8x8xf32>
    %37 = tpu.matmul %36, %8, %cst_27 {dimension_numbers = #tpu.dot_dimension_numbers<[1], [1], [0], [0], [0, 0, 1, 0], [], []>} : vector<8x8xbf16>, vector<8x8xbf16>, vector<8x8xf32> -> vector<8x8xf32>
    %cst_28 = arith.constant -1.000000e+30 : f32
    "tpu.trace_stop"() : () -> ()
    %38 = vector.broadcast %cst_28 : f32 to vector<8x8xf32>
    %39 = arith.select %34, %37, %38 : vector<8x8xi1>, vector<8x8xf32>
    %cst_29 = arith.constant dense<0xFF800000> : vector<8xf32>
    %40 = vector.multi_reduction <maximumf>, %39, %cst_29 [1] : vector<8x8xf32> to vector<8xf32>
    %41 = vector.shape_cast %40 : vector<8xf32> to vector<8x1xf32>
    %42 = vector.broadcast %41 : vector<8x1xf32> to vector<8x8xf32>
    %43 = arith.subf %39, %42 : vector<8x8xf32>
    %44 = math.exp %43 : vector<8x8xf32>
    %cst_30 = arith.constant dense<0.000000e+00> : vector<8xf32>
    %45 = vector.multi_reduction <add>, %44, %cst_30 [1] : vector<8x8xf32> to vector<8xf32>
    %46 = vector.shape_cast %45 : vector<8xf32> to vector<8x1xf32>
    %47 = tpu.reciprocal %46 {approx = true} : vector<8x1xf32> -> vector<8x1xf32>
    %48 = vector.broadcast %47 : vector<8x1xf32> to vector<8x8xf32>
    %49 = arith.mulf %44, %48 : vector<8x8xf32>
    %50 = arith.truncf %49 : vector<8x8xf32> to vector<8x8xbf16>
    %cst_31 = arith.constant dense<0.000000e+00> : vector<8x8xf32>
    %51 = tpu.matmul %50, %12, %cst_31 {dimension_numbers = #tpu.dot_dimension_numbers<[1], [0], [0], [1], [0, 0, 1, 1], [], []>} : vector<8x8xbf16>, vector<8x8xbf16>, vector<8x8xf32> -> vector<8x8xf32>
    %52 = arith.truncf %51 : vector<8x8xf32> to vector<8x8xbf16>
    %cst_32 = arith.constant dense<0.000000e+00> : vector<8x32xf32>
    %53 = tpu.matmul %52, %17, %cst_32 {dimension_numbers = #tpu.dot_dimension_numbers<[1], [0], [0], [1], [0, 0, 1, 1], [], []>} : vector<8x8xbf16>, vector<8x32xbf16>, vector<8x32xf32> -> vector<8x32xf32>
    %54 = arith.addf %35, %53 : vector<8x32xf32>
    %55 = vector.extract_strided_slice %7 {offsets = [0, 8], sizes = [8, 8], strides = [1, 1]} : vector<8x96xbf16> to vector<8x8xbf16>
    "tpu.trace_start"() <{level = 10 : i32, message = "qd,kd->qk"}> : () -> ()
    %cst_33 = arith.constant dense<0.000000e+00> : vector<8x8xf32>
    %56 = tpu.matmul %55, %9, %cst_33 {dimension_numbers = #tpu.dot_dimension_numbers<[1], [1], [0], [0], [0, 0, 1, 0], [], []>} : vector<8x8xbf16>, vector<8x8xbf16>, vector<8x8xf32> -> vector<8x8xf32>
    %cst_34 = arith.constant -1.000000e+30 : f32
    "tpu.trace_stop"() : () -> ()
    %57 = vector.broadcast %cst_34 : f32 to vector<8x8xf32>
    %58 = arith.select %34, %56, %57 : vector<8x8xi1>, vector<8x8xf32>
    %cst_35 = arith.constant dense<0xFF800000> : vector<8xf32>
    %59 = vector.multi_reduction <maximumf>, %58, %cst_35 [1] : vector<8x8xf32> to vector<8xf32>
    %60 = vector.shape_cast %59 : vector<8xf32> to vector<8x1xf32>
    %61 = vector.broadcast %60 : vector<8x1xf32> to vector<8x8xf32>
    %62 = arith.subf %58, %61 : vector<8x8xf32>
    %63 = math.exp %62 : vector<8x8xf32>
    %cst_36 = arith.constant dense<0.000000e+00> : vector<8xf32>
    %64 = vector.multi_reduction <add>, %63, %cst_36 [1] : vector<8x8xf32> to vector<8xf32>
    %65 = vector.shape_cast %64 : vector<8xf32> to vector<8x1xf32>
    %66 = tpu.reciprocal %65 {approx = true} : vector<8x1xf32> -> vector<8x1xf32>
    %67 = vector.broadcast %66 : vector<8x1xf32> to vector<8x8xf32>
    %68 = arith.mulf %63, %67 : vector<8x8xf32>
    %69 = arith.truncf %68 : vector<8x8xf32> to vector<8x8xbf16>
    %cst_37 = arith.constant dense<0.000000e+00> : vector<8x8xf32>
    %70 = tpu.matmul %69, %13, %cst_37 {dimension_numbers = #tpu.dot_dimension_numbers<[1], [0], [0], [1], [0, 0, 1, 1], [], []>} : vector<8x8xbf16>, vector<8x8xbf16>, vector<8x8xf32> -> vector<8x8xf32>
    %71 = arith.truncf %70 : vector<8x8xf32> to vector<8x8xbf16>
    %cst_38 = arith.constant dense<0.000000e+00> : vector<8x32xf32>
    %72 = tpu.matmul %71, %18, %cst_38 {dimension_numbers = #tpu.dot_dimension_numbers<[1], [0], [0], [1], [0, 0, 1, 1], [], []>} : vector<8x8xbf16>, vector<8x32xbf16>, vector<8x32xf32> -> vector<8x32xf32>
    %73 = arith.addf %54, %72 : vector<8x32xf32>
    %74 = vector.extract_strided_slice %7 {offsets = [0, 16], sizes = [8, 8], strides = [1, 1]} : vector<8x96xbf16> to vector<8x8xbf16>
    "tpu.trace_start"() <{level = 10 : i32, message = "qd,kd->qk"}> : () -> ()
    %cst_39 = arith.constant dense<0.000000e+00> : vector<8x8xf32>
    %75 = tpu.matmul %74, %10, %cst_39 {dimension_numbers = #tpu.dot_dimension_numbers<[1], [1], [0], [0], [0, 0, 1, 0], [], []>} : vector<8x8xbf16>, vector<8x8xbf16>, vector<8x8xf32> -> vector<8x8xf32>
    %cst_40 = arith.constant -1.000000e+30 : f32
    "tpu.trace_stop"() : () -> ()
    %76 = vector.broadcast %cst_40 : f32 to vector<8x8xf32>
    %77 = arith.select %34, %75, %76 : vector<8x8xi1>, vector<8x8xf32>
    %cst_41 = arith.constant dense<0xFF800000> : vector<8xf32>
    %78 = vector.multi_reduction <maximumf>, %77, %cst_41 [1] : vector<8x8xf32> to vector<8xf32>
    %79 = vector.shape_cast %78 : vector<8xf32> to vector<8x1xf32>
    %80 = vector.broadcast %79 : vector<8x1xf32> to vector<8x8xf32>
    %81 = arith.subf %77, %80 : vector<8x8xf32>
    %82 = math.exp %81 : vector<8x8xf32>
    %cst_42 = arith.constant dense<0.000000e+00> : vector<8xf32>
    %83 = vector.multi_reduction <add>, %82, %cst_42 [1] : vector<8x8xf32> to vector<8xf32>
    %84 = vector.shape_cast %83 : vector<8xf32> to vector<8x1xf32>
    %85 = tpu.reciprocal %84 {approx = true} : vector<8x1xf32> -> vector<8x1xf32>
    %86 = vector.broadcast %85 : vector<8x1xf32> to vector<8x8xf32>
    %87 = arith.mulf %82, %86 : vector<8x8xf32>
    %88 = arith.truncf %87 : vector<8x8xf32> to vector<8x8xbf16>
    %cst_43 = arith.constant dense<0.000000e+00> : vector<8x8xf32>
    %89 = tpu.matmul %88, %14, %cst_43 {dimension_numbers = #tpu.dot_dimension_numbers<[1], [0], [0], [1], [0, 0, 1, 1], [], []>} : vector<8x8xbf16>, vector<8x8xbf16>, vector<8x8xf32> -> vector<8x8xf32>
    %90 = arith.truncf %89 : vector<8x8xf32> to vector<8x8xbf16>
    %cst_44 = arith.constant dense<0.000000e+00> : vector<8x32xf32>
    %91 = tpu.matmul %90, %19, %cst_44 {dimension_numbers = #tpu.dot_dimension_numbers<[1], [0], [0], [1], [0, 0, 1, 1], [], []>} : vector<8x8xbf16>, vector<8x32xbf16>, vector<8x32xf32> -> vector<8x32xf32>
    %92 = arith.addf %73, %91 : vector<8x32xf32>
    %93 = vector.extract_strided_slice %7 {offsets = [0, 24], sizes = [8, 8], strides = [1, 1]} : vector<8x96xbf16> to vector<8x8xbf16>
    "tpu.trace_start"() <{level = 10 : i32, message = "qd,kd->qk"}> : () -> ()
    %cst_45 = arith.constant dense<0.000000e+00> : vector<8x8xf32>
    %94 = tpu.matmul %93, %11, %cst_45 {dimension_numbers = #tpu.dot_dimension_numbers<[1], [1], [0], [0], [0, 0, 1, 0], [], []>} : vector<8x8xbf16>, vector<8x8xbf16>, vector<8x8xf32> -> vector<8x8xf32>
    %cst_46 = arith.constant -1.000000e+30 : f32
    "tpu.trace_stop"() : () -> ()
    %95 = vector.broadcast %cst_46 : f32 to vector<8x8xf32>
    %96 = arith.select %34, %94, %95 : vector<8x8xi1>, vector<8x8xf32>
    %cst_47 = arith.constant dense<0xFF800000> : vector<8xf32>
    %97 = vector.multi_reduction <maximumf>, %96, %cst_47 [1] : vector<8x8xf32> to vector<8xf32>
    %98 = vector.shape_cast %97 : vector<8xf32> to vector<8x1xf32>
    %99 = vector.broadcast %98 : vector<8x1xf32> to vector<8x8xf32>
    %100 = arith.subf %96, %99 : vector<8x8xf32>
    %101 = math.exp %100 : vector<8x8xf32>
    %cst_48 = arith.constant dense<0.000000e+00> : vector<8xf32>
    %102 = vector.multi_reduction <add>, %101, %cst_48 [1] : vector<8x8xf32> to vector<8xf32>
    %103 = vector.shape_cast %102 : vector<8xf32> to vector<8x1xf32>
    %104 = tpu.reciprocal %103 {approx = true} : vector<8x1xf32> -> vector<8x1xf32>
    %105 = vector.broadcast %104 : vector<8x1xf32> to vector<8x8xf32>
    %106 = arith.mulf %101, %105 : vector<8x8xf32>
    %107 = arith.truncf %106 : vector<8x8xf32> to vector<8x8xbf16>
    %cst_49 = arith.constant dense<0.000000e+00> : vector<8x8xf32>
    %108 = tpu.matmul %107, %15, %cst_49 {dimension_numbers = #tpu.dot_dimension_numbers<[1], [0], [0], [1], [0, 0, 1, 1], [], []>} : vector<8x8xbf16>, vector<8x8xbf16>, vector<8x8xf32> -> vector<8x8xf32>
    %109 = arith.truncf %108 : vector<8x8xf32> to vector<8x8xbf16>
    %cst_50 = arith.constant dense<0.000000e+00> : vector<8x32xf32>
    %110 = tpu.matmul %109, %20, %cst_50 {dimension_numbers = #tpu.dot_dimension_numbers<[1], [0], [0], [1], [0, 0, 1, 1], [], []>} : vector<8x8xbf16>, vector<8x32xbf16>, vector<8x32xf32> -> vector<8x32xf32>
    %111 = arith.addf %92, %110 : vector<8x32xf32>
    %112 = vector.broadcast %21 : vector<1x32xf32> to vector<8x32xf32>
    %113 = arith.addf %111, %112 : vector<8x32xf32>
    %114 = arith.extf %1 : vector<8x32xbf16> to vector<8x32xf32>
    %115 = arith.addf %114, %113 : vector<8x32xf32>
    %cst_51 = arith.constant dense<0.000000e+00> : vector<8xf32>
    %116 = vector.multi_reduction <add>, %115, %cst_51 [1] : vector<8x32xf32> to vector<8xf32>
    %117 = vector.shape_cast %116 : vector<8xf32> to vector<8x1xf32>
    %cst_52 = arith.constant 3.200000e+01 : f32
    %118 = vector.broadcast %cst_52 : f32 to vector<8x1xf32>
    %119 = arith.divf %117, %118 : vector<8x1xf32>
    %120 = vector.broadcast %119 : vector<8x1xf32> to vector<8x32xf32>
    %121 = arith.subf %115, %120 : vector<8x32xf32>
    %122 = arith.mulf %121, %121 : vector<8x32xf32>
    %cst_53 = arith.constant dense<0.000000e+00> : vector<8xf32>
    %123 = vector.multi_reduction <add>, %122, %cst_53 [1] : vector<8x32xf32> to vector<8xf32>
    %124 = vector.shape_cast %123 : vector<8xf32> to vector<8x1xf32>
    %cst_54 = arith.constant 3.200000e+01 : f32
    %125 = vector.broadcast %cst_54 : f32 to vector<8x1xf32>
    %126 = arith.divf %124, %125 : vector<8x1xf32>
    %127 = vector.broadcast %119 : vector<8x1xf32> to vector<8x32xf32>
    %128 = arith.subf %115, %127 : vector<8x32xf32>
    %cst_55 = arith.constant 9.99999974E-6 : f32
    %129 = vector.broadcast %cst_55 : f32 to vector<8x1xf32>
    %130 = arith.addf %126, %129 : vector<8x1xf32>
    %131 = math.rsqrt %130 : vector<8x1xf32>
    %132 = vector.broadcast %131 : vector<8x1xf32> to vector<8x32xf32>
    %133 = arith.mulf %128, %132 : vector<8x32xf32>
    %134 = vector.broadcast %24 : vector<1x32xf32> to vector<8x32xf32>
    %135 = arith.mulf %133, %134 : vector<8x32xf32>
    %136 = vector.broadcast %25 : vector<1x32xf32> to vector<8x32xf32>
    %137 = arith.addf %135, %136 : vector<8x32xf32>
    %138 = arith.truncf %137 : vector<8x32xf32> to vector<8x32xbf16>
    %cst_56 = arith.constant dense<0.000000e+00> : vector<8x128xf32>
    %139 = tpu.matmul %138, %28, %cst_56 {dimension_numbers = #tpu.dot_dimension_numbers<[1], [0], [0], [1], [0, 0, 1, 1], [], []>} : vector<8x32xbf16>, vector<32x128xbf16>, vector<8x128xf32> -> vector<8x128xf32>
    %140 = vector.broadcast %22 : vector<1x128xf32> to vector<8x128xf32>
    %141 = arith.addf %139, %140 : vector<8x128xf32>
    %cst_57 = arith.constant 5.000000e-01 : f32
    %142 = vector.broadcast %cst_57 : f32 to vector<8x128xf32>
    %143 = arith.mulf %142, %141 : vector<8x128xf32>
    %cst_58 = arith.constant 4.471500e-02 : f32
    %144 = vector.broadcast %cst_58 : f32 to vector<8x128xf32>
    %145 = arith.mulf %144, %141 : vector<8x128xf32>
    %146 = arith.mulf %145, %141 : vector<8x128xf32>
    %147 = arith.mulf %146, %141 : vector<8x128xf32>
    %148 = arith.addf %141, %147 : vector<8x128xf32>
    %cst_59 = arith.constant 0.797884583 : f32
    %149 = vector.broadcast %cst_59 : f32 to vector<8x128xf32>
    %150 = arith.mulf %149, %148 : vector<8x128xf32>
    %151 = math.tanh %150 : vector<8x128xf32>
    %cst_60 = arith.constant 1.000000e+00 : f32
    %152 = vector.broadcast %cst_60 : f32 to vector<8x128xf32>
    %153 = arith.addf %152, %151 : vector<8x128xf32>
    %154 = arith.mulf %143, %153 : vector<8x128xf32>
    %155 = arith.truncf %154 : vector<8x128xf32> to vector<8x128xbf16>
    %cst_61 = arith.constant dense<0.000000e+00> : vector<8x32xf32>
    %156 = tpu.matmul %155, %29, %cst_61 {dimension_numbers = #tpu.dot_dimension_numbers<[1], [0], [0], [1], [0, 0, 1, 1], [], []>} : vector<8x128xbf16>, vector<128x32xbf16>, vector<8x32xf32> -> vector<8x32xf32>
    %157 = vector.broadcast %23 : vector<1x32xf32> to vector<8x32xf32>
    %158 = arith.addf %156, %157 : vector<8x32xf32>
    %159 = arith.addf %137, %158 : vector<8x32xf32>
    %cst_62 = arith.constant dense<0.000000e+00> : vector<8xf32>
    %160 = vector.multi_reduction <add>, %159, %cst_62 [1] : vector<8x32xf32> to vector<8xf32>
    %161 = vector.shape_cast %160 : vector<8xf32> to vector<8x1xf32>
    %cst_63 = arith.constant 3.200000e+01 : f32
    %162 = vector.broadcast %cst_63 : f32 to vector<8x1xf32>
    %163 = arith.divf %161, %162 : vector<8x1xf32>
    %164 = vector.broadcast %163 : vector<8x1xf32> to vector<8x32xf32>
    %165 = arith.subf %159, %164 : vector<8x32xf32>
    %166 = arith.mulf %165, %165 : vector<8x32xf32>
    %cst_64 = arith.constant dense<0.000000e+00> : vector<8xf32>
    %167 = vector.multi_reduction <add>, %166, %cst_64 [1] : vector<8x32xf32> to vector<8xf32>
    %168 = vector.shape_cast %167 : vector<8xf32> to vector<8x1xf32>
    %cst_65 = arith.constant 3.200000e+01 : f32
    %169 = vector.broadcast %cst_65 : f32 to vector<8x1xf32>
    %170 = arith.divf %168, %169 : vector<8x1xf32>
    %171 = vector.broadcast %163 : vector<8x1xf32> to vector<8x32xf32>
    %172 = arith.subf %159, %171 : vector<8x32xf32>
    %cst_66 = arith.constant 9.99999974E-6 : f32
    %173 = vector.broadcast %cst_66 : f32 to vector<8x1xf32>
    %174 = arith.addf %170, %173 : vector<8x1xf32>
    %175 = math.rsqrt %174 : vector<8x1xf32>
    %176 = vector.broadcast %175 : vector<8x1xf32> to vector<8x32xf32>
    %177 = arith.mulf %172, %176 : vector<8x32xf32>
    %178 = vector.broadcast %26 : vector<1x32xf32> to vector<8x32xf32>
    %179 = arith.mulf %177, %178 : vector<8x32xf32>
    %180 = vector.broadcast %27 : vector<1x32xf32> to vector<8x32xf32>
    %181 = arith.addf %179, %180 : vector<8x32xf32>
    %182 = arith.truncf %181 : vector<8x32xf32> to vector<8x32xbf16>
    %c0_67 = arith.constant 0 : index
    %c0_68 = arith.constant 0 : index
    %c0_69 = arith.constant 0 : index
    %183 = vector.load %arg14[%c0_67, %c0_68, %c0_69] : memref<1x8x32xbf16, #tpu.memory_space<vmem>>, vector<1x8x32xbf16>
    %184 = vector.shape_cast %183 : vector<1x8x32xbf16> to vector<8x32xbf16>
    %185 = vector.shape_cast %182 : vector<8x32xbf16> to vector<1x8x32xbf16>
    tpu.vector_store %arg14[%c0_67, %c0_68, %c0_69], %185 {strides = array<i32>} : memref<1x8x32xbf16, #tpu.memory_space<vmem>>, vector<1x8x32xbf16>,
    return
  }
  func.func @transform_0(%arg0: i32) -> (i32, i32, i32) {
    %c0_i32 = arith.constant 0 : i32
    %c0_i32_0 = arith.constant 0 : i32
    %c0_i32_1 = arith.constant 0 : i32
    return %arg0, %c0_i32, %c0_i32_0 : i32, i32, i32
  }
  func.func @transform_1(%arg0: i32) -> (i32, i32) {
    %c0_i32 = arith.constant 0 : i32
    %c0_i32_0 = arith.constant 0 : i32
    %c0_i32_1 = arith.constant 0 : i32
    return %c0_i32, %c0_i32_0 : i32, i32
  }
  func.func @transform_2(%arg0: i32) -> (i32, i32) {
    %c0_i32 = arith.constant 0 : i32
    %c0_i32_0 = arith.constant 0 : i32
    %c0_i32_1 = arith.constant 0 : i32
    return %c0_i32, %c0_i32_0 : i32, i32
  }
  func.func @transform_3(%arg0: i32) -> (i32, i32) {
    %c0_i32 = arith.constant 0 : i32
    %c0_i32_0 = arith.constant 0 : i32
    %c0_i32_1 = arith.constant 0 : i32
    return %c0_i32, %c0_i32_0 : i32, i32
  }
  func.func @transform_4(%arg0: i32) -> (i32, i32) {
    %c0_i32 = arith.constant 0 : i32
    %c0_i32_0 = arith.constant 0 : i32
    %c0_i32_1 = arith.constant 0 : i32
    return %c0_i32, %c0_i32_0 : i32, i32
  }
  func.func @transform_5(%arg0: i32) -> (i32, i32) {
    %c0_i32 = arith.constant 0 : i32
    %c0_i32_0 = arith.constant 0 : i32
    %c0_i32_1 = arith.constant 0 : i32
    return %c0_i32, %c0_i32_0 : i32, i32
  }
  func.func @transform_6(%arg0: i32) -> (i32, i32) {
    %c0_i32 = arith.constant 0 : i32
    %c0_i32_0 = arith.constant 0 : i32
    %c0_i32_1 = arith.constant 0 : i32
    return %c0_i32, %c0_i32_0 : i32, i32
  }
  func.func @transform_7(%arg0: i32) -> (i32, i32) {
    %c0_i32 = arith.constant 0 : i32
    %c0_i32_0 = arith.constant 0 : i32
    %c0_i32_1 = arith.constant 0 : i32
    return %c0_i32, %c0_i32_0 : i32, i32
  }
  func.func @transform_8(%arg0: i32) -> (i32, i32) {
    %c0_i32 = arith.constant 0 : i32
    %c0_i32_0 = arith.constant 0 : i32
    %c0_i32_1 = arith.constant 0 : i32
    return %c0_i32, %c0_i32_0 : i32, i32
  }
  func.func @transform_9(%arg0: i32) -> (i32, i32) {
    %c0_i32 = arith.constant 0 : i32
    %c0_i32_0 = arith.constant 0 : i32
    %c0_i32_1 = arith.constant 0 : i32
    return %c0_i32, %c0_i32_0 : i32, i32
  }
  func.func @transform_10(%arg0: i32) -> (i32, i32) {
    %c0_i32 = arith.constant 0 : i32
    %c0_i32_0 = arith.constant 0 : i32
    %c0_i32_1 = arith.constant 0 : i32
    return %c0_i32, %c0_i32_0 : i32, i32
  }
  func.func @transform_11(%arg0: i32) -> (i32, i32) {
    %c0_i32 = arith.constant 0 : i32
    %c0_i32_0 = arith.constant 0 : i32
    %c0_i32_1 = arith.constant 0 : i32
    return %c0_i32, %c0_i32_0 : i32, i32
  }
  func.func @transform_12(%arg0: i32) -> (i32, i32) {
    %c0_i32 = arith.constant 0 : i32
    %c0_i32_0 = arith.constant 0 : i32
    %c0_i32_1 = arith.constant 0 : i32
    return %c0_i32, %c0_i32_0 : i32, i32
  }
  func.func @transform_13(%arg0: i32) -> (i32, i32, i32) {
    %c0_i32 = arith.constant 0 : i32
    %c0_i32_0 = arith.constant 0 : i32
    %c0_i32_1 = arith.constant 0 : i32
    return %arg0, %c0_i32, %c0_i32_0 : i32, i32, i32
  }
}

</mosaic_0001>

<llo_original>
// kernel: _lambda_.5
$region0: #{_lambda_.5}
  #allocation0 [shape = 'u32[]', space=smem, size = 0x4, offset = 0x4, fixed_abs, tag = 'smem constant byte address 0x4 - core index']
  #allocation1 [shape = 'u32[72,128]{1,0:T(1,128)}', space=vmem, size = 0x9000, scoped, tag = 'internal scratch']
  #allocation2 [shape = 'bf16[8,32]{1,0:T(8,128)(2,1)}', space=vmem, size = 0x800, scoped, tag = 'scratch operand']
  %s0 = inlined_call_operand.vmem [shape: bf16[2,8,32], index: 0, kind: input, shape index: {}]
  %s1 = inlined_call_operand.vmem [shape: f32[1,32], index: 1, kind: input, shape index: {}]
  %s2 = inlined_call_operand.vmem [shape: f32[1,32], index: 2, kind: input, shape index: {}]
  %s3 = inlined_call_operand.vmem [shape: bf16[32,32], index: 3, kind: input, shape index: {}]
  %s4 = inlined_call_operand.hbm [shape: f32[2,8,32], index: 4, kind: output, shape index: {}]
  %s5 = sld [smem:[#allocation0]]
  $region53: #{_lambda_.5} parent=0
    _
  %s7 = ssub.s32 1, %s5
  %s8 = scalar_select 0, %s7, %s5
  $region1: #{_lambda_.5} parent=0
    #allocation3 [shape = 'u8[8192]{0}', space=vmem, size = 0x2000, scoped, tag = 'output window, operand 0']
    #allocation4 [shape = 's32[2]{0}', space=sflag, size = 0x8, scoped, tag = 'scoped memory for _lambda_.5']
    %9 = vsyncpa [#allocation4], 0
    %s10 = scalar_lea.sflag [#allocation4], 1
    %11 = vsyncpa %s10, 0
    loop: start=0, step=1, limit=4
    $region2: #{_lambda_.5} parent=1 // loop_pre_header
      _
    $region3: #{_lambda_.5} parent=1 // loop_header
      %s13 = sphi 0, %s17
      %p14 = scmp.ge.s32.totalorder %s13, 4
      %s20 = sphi 0, %s32
      %s21 = sphi 0, %s28
      %s22 = sphi 0, %s20
      %s23 = sphi 0, %s21
      %s24 = sphi 0, %s22
      %s25 = sphi 0, %s23
      %s35 = sphi 0, %s37
      %s38 = sphi 0, %s35
      %s39 = sphi 0, %s38
      %s55 = sphi 0, %s39
      %s59 = sphi 0, %s59
      %s61 = sphi 0, %s59
      %s62 = sphi 0, %s61
      %s76 = sphi 0, %s62
      %s80 = sphi 0, %s80
      %s82 = sphi 0, %s80
      %s83 = sphi 0, %s82
      %s97 = sphi 0, %s83
      %s103 = sphi 0, %s105
      %s106 = sphi 0, %s103
      %s107 = sphi 0, %s106
      %s123 = sphi 0, %s107
      %s131 = sphi 0, %s133
      %s134 = sphi 0, %s131
      %s135 = sphi 0, %s134
      %s151 = sphi 0, %s135
    $region4: #{_lambda_.5} parent=1 // loop_header_branch
      %16 = sbr.rel (%p14) target = $region8
    $region5: #{_lambda_.5} parent=1 // loop_body
      %s18 = ssub.s32 %s13, 1
      %s19 = ssub.s32 %s13, 2
      %s26 = sadd.s32 1, %s21
      %p27 = scmp.ge.s32.totalorder %s26, 1
      %s28 = scalar_select %p27, 0, %s26
      %s29 = sadd.s32 1, %s20
      %s30 = scalar_select %p27, %s29, %s20
      %p31 = scmp.ge.s32.totalorder %s30, 2
      %s32 = scalar_select %p31, 0, %s30
      %s33 = ssub.s32 %s20, %s32
      %p34 = scmp.eq.s32.totalorder %s33, 0
      %s36 = sadd.s32 %s35, 1
      %s37 = scalar_select %p34, %s35, %s36
      %p40 = pneg %p34
      %p41 = scmp.eq.s32.totalorder %s13, 1
      %p42 = por %p40, %p41
      %p43 = scmp.ne.s32.totalorder %s35, %s38
      %p44 = scmp.eq.s32.totalorder %s13, 0
      %p45 = por %p43, %p44
      %p46 = scmp.ne.s32.totalorder %s35, %s38
      %p47 = scmp.eq.s32.totalorder %s18, 1
      %p48 = por %p46, %p47
      %p49 = scmp.ne.s32.totalorder %s38, %s39
      %p50 = scmp.eq.s32.totalorder %s18, 0
      %p51 = por %p49, %p50
      %p52 = scmp.ne.s32.totalorder %s38, %s39
      %p53 = scmp.eq.s32.totalorder %s19, 1
      %p54 = por %p52, %p53
      %p56 = scmp.ne.s32.totalorder %s39, %s55
      %p57 = scmp.eq.s32.totalorder %s19, 0
      %p58 = por %p56, %p57
      %s60 = sadd.s32 %s59, 1
      %p63 = scmp.eq.s32.totalorder %s13, 1
      %p64 = scmp.ne.s32.totalorder %s59, %s61
      %p65 = scmp.eq.s32.totalorder %s13, 0
      %p66 = por %p64, %p65
      %p67 = scmp.ne.s32.totalorder %s59, %s61
      %p68 = scmp.eq.s32.totalorder %s18, 1
      %p69 = por %p67, %p68
      %p70 = scmp.ne.s32.totalorder %s61, %s62
      %p71 = scmp.eq.s32.totalorder %s18, 0
      %p72 = por %p70, %p71
      %p73 = scmp.ne.s32.totalorder %s61, %s62
      %p74 = scmp.eq.s32.totalorder %s19, 1
      %p75 = por %p73, %p74
      %p77 = scmp.ne.s32.totalorder %s62, %s76
      %p78 = scmp.eq.s32.totalorder %s19, 0
      %p79 = por %p77, %p78
      %s81 = sadd.s32 %s80, 1
      %p84 = scmp.eq.s32.totalorder %s13, 1
      %p85 = scmp.ne.s32.totalorder %s80, %s82
      %p86 = scmp.eq.s32.totalorder %s13, 0
      %p87 = por %p85, %p86
      %p88 = scmp.ne.s32.totalorder %s80, %s82
      %p89 = scmp.eq.s32.totalorder %s18, 1
      %p90 = por %p88, %p89
      %p91 = scmp.ne.s32.totalorder %s82, %s83
      %p92 = scmp.eq.s32.totalorder %s18, 0
      %p93 = por %p91, %p92
      %p94 = scmp.ne.s32.totalorder %s82, %s83
      %p95 = scmp.eq.s32.totalorder %s19, 1
      %p96 = por %p94, %p95
      %p98 = scmp.ne.s32.totalorder %s83, %s97
      %p99 = scmp.eq.s32.totalorder %s19, 0
      %p100 = por %p98, %p99
      %s101 = ssub.s32 %s21, %s28
      %p102 = scmp.eq.s32.totalorder %s101, 0
      %s104 = sadd.s32 %s103, 1
      %s105 = scalar_select %p102, %s103, %s104
      %p108 = pneg %p102
      %p109 = scmp.eq.s32.totalorder %s13, 1
      %p110 = por %p108, %p109
      %p111 = scmp.ne.s32.totalorder %s103, %s106
      %p112 = scmp.eq.s32.totalorder %s13, 0
      %p113 = por %p111, %p112
      %p114 = scmp.ne.s32.totalorder %s103, %s106
      %p115 = scmp.eq.s32.totalorder %s18, 1
      %p116 = por %p114, %p115
      %p117 = scmp.ne.s32.totalorder %s106, %s107
      %p118 = scmp.eq.s32.totalorder %s18, 0
      %p119 = por %p117, %p118
      %p120 = scmp.ne.s32.totalorder %s106, %s107
      %p121 = scmp.eq.s32.totalorder %s19, 1
      %p122 = por %p120, %p121
      %p124 = scmp.ne.s32.totalorder %s107, %s123
      %p125 = scmp.eq.s32.totalorder %s19, 0
      %p126 = por %p124, %p125
      %s127 = ssub.s32 %s20, %s32
      %s128 = ssub.s32 %s21, %s28
      %s129 = sor.u32 %s127, %s128
      %p130 = scmp.eq.s32.totalorder %s129, 0
      %s132 = sadd.s32 %s131, 1
      %s133 = scalar_select %p130, %s131, %s132
      %p136 = pneg %p130
      %p137 = scmp.eq.s32.totalorder %s13, 1
      %p138 = por %p136, %p137
      %p139 = scmp.ne.s32.totalorder %s131, %s134
      %p140 = scmp.eq.s32.totalorder %s13, 0
      %p141 = por %p139, %p140
      %p142 = scmp.ne.s32.totalorder %s131, %s134
      %p143 = scmp.eq.s32.totalorder %s18, 1
      %p144 = por %p142, %p143
      %p145 = scmp.ne.s32.totalorder %s134, %s135
      %p146 = scmp.eq.s32.totalorder %s18, 0
      %p147 = por %p145, %p146
      %p148 = scmp.ne.s32.totalorder %s134, %s135
      %p149 = scmp.eq.s32.totalorder %s19, 1
      %p150 = por %p148, %p149
      %p152 = scmp.ne.s32.totalorder %s135, %s151
      %p153 = scmp.eq.s32.totalorder %s19, 0
      %p154 = por %p152, %p153
      %p155 = scmp.le.s32.totalorder 1, %s13
      %p156 = scmp.lt.s32.totalorder %s13, 3
      %p157 = pnand %p155, %p156
      %p158 = pneg %p157
      // Predicated region
      $region9: #{_lambda_.5} parent=5 // pred_check
        _
      $region10: #{_lambda_.5} parent=5 // pred_check_branch
        %160 = sbr.rel (%p157) target = $region12
      $region11: #{_lambda_.5} parent=5 // pred_region
        %s161 = ssub.s32 %s13, 1
        // Predicated region
        $region13: #{_lambda_.5} parent=11 // pred_check
          %p162 = pneg %p72
        $region14: #{_lambda_.5} parent=11 // pred_check_branch
          %164 = sbr.rel (%p162) target = $region16
        $region15: #{_lambda_.5} parent=11 // pred_region
          _
        $region16: #{_lambda_.5} parent=11 // pred_fallthru
          _
        // Predicated region
        $region17: #{_lambda_.5} parent=11 // pred_check
          %p165 = pneg %p93
        $region18: #{_lambda_.5} parent=11 // pred_check_branch
          %167 = sbr.rel (%p165) target = $region20
        $region19: #{_lambda_.5} parent=11 // pred_region
          _
        $region20: #{_lambda_.5} parent=11 // pred_fallthru
          _
        // Predicated region
        $region21: #{_lambda_.5} parent=11 // pred_check
          %p168 = pneg %p119
        $region22: #{_lambda_.5} parent=11 // pred_check_branch
          %170 = sbr.rel (%p168) target = $region24
        $region23: #{_lambda_.5} parent=11 // pred_region
          %p171 = scmp.lt.s32.totalorder %s23, 0
          %s172 = scalar_select %p171, %s23, 0
          %s173 = smul.addr %s172, 4
          %s174 = scalar_lea.vmem %s3, %s173
        $region24: #{_lambda_.5} parent=11 // pred_fallthru
          _
      $region12: #{_lambda_.5} parent=5 // pred_fallthru
        _
      %p175 = scmp.lt.s32.totalorder %s13, 2
      // Predicated region
      $region25: #{_lambda_.5} parent=5 // pred_check
        %p176 = pneg %p175
      $region26: #{_lambda_.5} parent=5 // pred_check_branch
        %178 = sbr.rel (%p176) target = $region28
      $region27: #{_lambda_.5} parent=5 // pred_region
        // Predicated region
        $region29: #{_lambda_.5} parent=27 // pred_check
          %p179 = pneg %p45
        $region30: #{_lambda_.5} parent=27 // pred_check_branch
          %181 = sbr.rel (%p179) target = $region32
        $region31: #{_lambda_.5} parent=27 // pred_region
          %p182 = scmp.lt.s32.totalorder %s20, 1
          %s183 = scalar_select %p182, %s20, 1
          %s184 = smul.addr %s183, 4
          %s185 = scalar_lea.vmem %s0, %s184
        $region32: #{_lambda_.5} parent=27 // pred_fallthru
          _
      $region28: #{_lambda_.5} parent=5 // pred_fallthru
        _
      %p186 = scmp.le.s32.totalorder 1, %s13
      %p187 = scmp.lt.s32.totalorder %s13, 3
      %p188 = pnand %p186, %p187
      %p189 = pneg %p188
      // Predicated region
      $region33: #{_lambda_.5} parent=5 // pred_check
        _
      $region34: #{_lambda_.5} parent=5 // pred_check_branch
        %191 = sbr.rel (%p188) target = $region36
      $region35: #{_lambda_.5} parent=5 // pred_region
        %s192 = ssub.s32 %s13, 1
        %p193 = scmp.lt.s32.totalorder %s22, 1
        %s194 = scalar_select %p193, %s22, 1
        %s195 = smul.addr %s194, 4
        %s196 = scalar_lea.vmem %s0, %s195
        %p197 = pneg %p51
        %p198 = pneg %p48
        %p199 = pneg %p72
        %p200 = pneg %p69
        %p201 = pneg %p93
        %p202 = pneg %p90
        %p203 = scmp.lt.s32.totalorder %s23, 0
        %s204 = scalar_select %p203, %s23, 0
        %s205 = smul.addr %s204, 4
        %s206 = scalar_lea.vmem %s3, %s205
        %p207 = pneg %p119
        %p208 = pneg %p116
        %p209 = pneg %p147
        %p210 = pneg %p144
        %s211 = sand.u32 %s134, 1
        %s212 = scalar_lea.sflag [#allocation4], %s211
        %s213 = sand.u32 %s134, 1
        %s214 = smul.addr %s213, 8
        %s215 = scalar_lea.vmem [#allocation3], %s214
        %p216 = scmp.lt.s32.totalorder %s22, 1
        %s217 = scalar_select %p216, %s22, 1
        %s218 = smul.addr %s217, 4
        %s219 = scalar_lea.vmem %s0, %s218
        %p220 = scmp.lt.s32.totalorder %s23, 0
        %s221 = scalar_select %p220, %s23, 0
        %s222 = smul.addr %s221, 4
        %s223 = scalar_lea.vmem %s3, %s222
        %p225 = scmp.eq.s32.totalorder %s23, 0
        // Predicated region
        $region37: #{_lambda_.5} parent=35 // pred_check
          %p226 = pneg %p225
        $region38: #{_lambda_.5} parent=35 // pred_check_branch
          %228 = sbr.rel (%p226) target = $region40
        $region39: #{_lambda_.5} parent=35 // pred_region
          %v229 = vld [vmem:[%s219] sm:$0xf]
          %v230 = vunpack.c.l.bf16 %v229
          %v231 = vld [vmem:[%s1] sm:$0x1]
          %v232 = vld [vmem:[%s2] sm:$0x1]
          %vm233 = vcmask 261120
          %v234 = vsel %vm233, %v230, 0.0
          %235 = vadd.xlane.f32.xlu0 %v234
          %v236 = vpop.xlane.xlu0 %235
          %v237 = vrcp.pop 32.0
          %v238 = vmul.f32 32.0, %v237
          %v239 = vsub.f32 1.0, %v238
          %v240 = vmul.f32 %v237, %v239
          %v241 = vadd.f32 %v237, %v240
          %vm242 = vweird.f32 %v237
          %v243 = vsel %vm242, %v237, %v241
          %v244 = vmul.f32 %v236, %v243
          %v245 = vsub.f32 %v230, %v244
          %v246 = vmul.f32 %v245, %v245
          %v247 = vsel %vm233, %v246, 0.0
          %248 = vadd.xlane.f32.xlu0 %v247
          %v249 = vpop.xlane.xlu0 %248
          %v250 = vmul.f32 %v249, %v243
          %v251 = vadd.f32 %v250, 1e-05
          %v252 = vrsqrt.pop %v251
          %v253 = vmul.f32 %v252, %v251
          %v254 = vmul.f32 %v253, %v252
          %v255 = vmul.f32 0.5, %v254
          %v256 = vsub.f32 1.5, %v255
          %v257 = vmul.f32 %v252, %v256
          %vm258 = vweird.f32 %v251
          %vm259 = vweird.f32 %v252
          %vm260 = vmor %vm258, %vm259
          %v261 = vsel %vm260, %v252, %v257
          %v262 = vmul.f32 %v245, %v261
          %v264 = vperm.slane %v231, 0
          %v266 = vmul.f32 %v262, %v264
          %v268 = vperm.slane %v232, 0
          %v270 = vadd.f32 %v266, %v268
          %v271 = vpack.c.bf16 %v270, %v270
          %vm272 = vcmask 257024
          %273 = vst.msk [vmem:[#allocation2] sm:$0xf] %vm272, %v271
        $region40: #{_lambda_.5} parent=35 // pred_fallthru
          _
        %v274 = vld [vmem:[#allocation2] sm:$0xf]
        %v275 = vld [vmem:[%s223] sm:$0xf]
        %v276 = vld [vmem:[%s223 + $0x4] sm:$0xf]
        %v277 = vld [vmem:[%s223 + $0x8] sm:$0xf]
        %v278 = vld [vmem:[%s223 + $0xc] sm:$0xf]
        %v283 = vunpack.c.l.b16 %v275
        %v284 = vunpack.c.l.b16 %v276
        %v285 = vunpack.c.l.b16 %v277
        %v286 = vunpack.c.l.b16 %v278
        %v287 = vpack.c.b16 %v284, %v283
        %v288 = vpack.c.b16 %v286, %v285
        %vm291 = vcmask 261120
        %v293 = vsel %vm291, %v274, 0
        %295 = vmatpush.bf16.msra.mxu0 0
        %296 = vmatpush.bf16.msra.mxu0 0
        %297 = vmatpush.bf16.msra.mxu0 0
        %298 = vmatpush.bf16.msra.mxu0 0
        %299 = vmatpush.bf16.msra.mxu0 0
        %300 = vmatpush.bf16.msra.mxu0 0
        %301 = vmatpush.bf16.msra.mxu0 %v288
        %302 = vmatpush.bf16.msra.mxu0 %v287
        %303 = vmatmul.bf16.gmra.mxu0 %v293
        %v304 = vpop.f32.mrf.mxu0
        %v305 = vadd.f32 0.0, %v304
        %v306 = vpop.f32.mrf.mxu0
        %307 = vdwg.mxu0
        %308 = vst.msk [vmem:[%s215] sm:$0xff] %vm291, %v305
        %s309 = sand.u32 %s134, 1
        %s310 = scalar_lea.sflag [#allocation4], %s309
        %s311 = sand.u32 %s134, 1
        %s312 = smul.addr %s311, 8
        %s313 = scalar_lea.vmem [#allocation3], %s312
        // Predicated region
        $region41: #{_lambda_.5} parent=35 // pred_check
          %p314 = pneg %p144
        $region42: #{_lambda_.5} parent=35 // pred_check_branch
          %316 = sbr.rel (%p314) target = $region44
        $region43: #{_lambda_.5} parent=35 // pred_region
          %318 = vsyncadd %s310, 0
          %s319 = sadd.s32 %s23, %s22
          %s320 = smul.addr %s319, 8
          %s321 = scalar_lea.hbm %s4, %s320
          %s323 = sshll.u32 %s313, 4
          %s324 = int_to_ptr.vmem [resolvable:$true] %s323
          %s325 = sshll.u32 %s321, 4
          %s326 = int_to_ptr.hbm [resolvable:$true] %s325
          %328 = dma.vmem_to_hbm [thread:$0]  %s324, 128, %s326, %s310
        $region44: #{_lambda_.5} parent=35 // pred_fallthru
          _
      $region36: #{_lambda_.5} parent=5 // pred_fallthru
        _
      %p329 = scmp.le.s32.totalorder 2, %s13
      // Predicated region
      $region45: #{_lambda_.5} parent=5 // pred_check
        %p330 = pneg %p329
      $region46: #{_lambda_.5} parent=5 // pred_check_branch
        %332 = sbr.rel (%p330) target = $region48
      $region47: #{_lambda_.5} parent=5 // pred_region
        %s333 = ssub.s32 %s13, 2
        // Predicated region
        $region49: #{_lambda_.5} parent=47 // pred_check
          %p334 = pneg %p150
        $region50: #{_lambda_.5} parent=47 // pred_check_branch
          %336 = sbr.rel (%p334) target = $region52
        $region51: #{_lambda_.5} parent=47 // pred_region
          %s337 = sand.u32 %s135, 1
          %s338 = scalar_lea.sflag [#allocation4], %s337
          %s339 = sand.u32 %s135, 1
          %s340 = smul.addr %s339, 8
          %s341 = scalar_lea.vmem [#allocation3], %s340
          %343 = dma.done %s338, 128
        $region52: #{_lambda_.5} parent=47 // pred_fallthru
          _
      $region48: #{_lambda_.5} parent=5 // pred_fallthru
        _
    $region6: #{_lambda_.5} parent=1 // loop_footer
      %s17 = sadd.s32 1, %s13
    $region7: #{_lambda_.5} parent=1 // loop_footer_branch
      %12 = sbr.rel target = $region3
    $region8: #{_lambda_.5} parent=1 // loop_exit
      _
    %344 = vsyncpa [#allocation4], 1
    %s345 = scalar_lea.sflag [#allocation4], 1
    %346 = vsyncpa %s345, 1

// kernel: _lambda_.4
$region0: #{_lambda_.4}
  #allocation0 [shape = 'u32[]', space=smem, size = 0x4, offset = 0x4, fixed_abs, tag = 'smem constant byte address 0x4 - core index']
  #allocation1 [shape = 'u32[72,128]{1,0:T(1,128)}', space=vmem, size = 0x9000, scoped, tag = 'internal scratch']
  %s0 = inlined_call_operand.vmem [shape: bf16[2,8,32], index: 0, kind: input, shape index: {}]
  %s1 = inlined_call_operand.vmem [shape: bf16[32,96], index: 1, kind: input, shape index: {}]
  %s2 = inlined_call_operand.vmem [shape: f32[1,96], index: 2, kind: input, shape index: {}]
  %s3 = inlined_call_operand.hbm [shape: bf16[32,32], index: 3, kind: input, shape index: {}]
  %s4 = inlined_call_operand.vmem [shape: f32[1,32], index: 4, kind: input, shape index: {}]
  %s5 = inlined_call_operand.vmem [shape: f32[1,32], index: 5, kind: input, shape index: {}, may-alias: {5,11}]
  %s6 = inlined_call_operand.vmem [shape: f32[1,32], index: 6, kind: input, shape index: {}, may-alias: {6,12}]
  %s7 = inlined_call_operand.hbm [shape: bf16[32,128], index: 7, kind: input, shape index: {}]
  %s8 = inlined_call_operand.hbm [shape: f32[1,128], index: 8, kind: input, shape index: {}]
  %s9 = inlined_call_operand.vmem [shape: bf16[128,32], index: 9, kind: input, shape index: {}]
  %s10 = inlined_call_operand.hbm [shape: f32[1,32], index: 10, kind: input, shape index: {}]
  %s11 = inlined_call_operand.vmem [shape: f32[1,32], index: 11, kind: input, shape index: {}, may-alias: {5,11}]
  %s12 = inlined_call_operand.vmem [shape: f32[1,32], index: 12, kind: input, shape index: {}, may-alias: {6,12}]
  %s13 = inlined_call_operand.vmem [shape: bf16[2,8,32], index: 13, kind: output, shape index: {}]
  %s14 = sld [smem:[#allocation0]]
  $region101: #{_lambda_.4} parent=0
    _
  %s16 = ssub.s32 1, %s14
  %s17 = scalar_select 0, %s16, %s14
  $region1: #{_lambda_.4} parent=0
    #allocation2 [shape = 'u8[8192]{0}', space=vmem, size = 0x2000, scoped, tag = 'input window, operand 3, single buffered']
    #allocation3 [shape = 's32[2]{0}', space=sflag, size = 0x8, scoped, tag = 'scoped memory for _lambda_.4']
    #allocation4 [shape = 'u8[8192]{0}', space=vmem, size = 0x2000, scoped, tag = 'input window, operand 7, single buffered']
    #allocation5 [shape = 's32[1]{0}', space=sflag, size = 0x4, scoped, tag = 'scoped memory for _lambda_.4']
    #allocation6 [shape = 'u8[512]{0}', space=vmem, size = 0x400, scoped, tag = 'input window, operand 8, single buffered']
    #allocation7 [shape = 'u8[512]{0}', space=vmem, size = 0x400, scoped, tag = 'input window, operand 10, single buffered']
    #allocation8 [shape = 's32[1]{0}', space=sflag, size = 0x4, scoped, tag = 'scoped memory for _lambda_.4']
    %18 = vsyncpa [#allocation3], 0
    %19 = vsyncpa [#allocation5], 0
    %20 = vsyncpa [#allocation8], 0
    loop: start=0, step=1, limit=4
    $region2: #{_lambda_.4} parent=1 // loop_pre_header
      _
    $region3: #{_lambda_.4} parent=1 // loop_header
      %s22 = sphi 0, %s26
      %p23 = scmp.ge.s32.totalorder %s22, 4
      %s32 = sphi 0, %s34
      %s35 = sphi 0, %s32
      %s36 = sphi 0, %s35
      %s52 = sphi 0, %s36
      %s56 = sphi 0, %s56
      %s58 = sphi 0, %s56
      %s59 = sphi 0, %s58
      %s73 = sphi 0, %s59
      %s77 = sphi 0, %s77
      %s79 = sphi 0, %s77
      %s80 = sphi 0, %s79
      %s94 = sphi 0, %s80
      %s98 = sphi 0, %s98
      %s100 = sphi 0, %s98
      %s101 = sphi 0, %s100
      %s115 = sphi 0, %s101
      %s119 = sphi 0, %s119
      %s121 = sphi 0, %s119
      %s122 = sphi 0, %s121
      %s136 = sphi 0, %s122
      %s140 = sphi 0, %s140
      %s142 = sphi 0, %s140
      %s143 = sphi 0, %s142
      %s157 = sphi 0, %s143
      %s161 = sphi 0, %s161
      %s163 = sphi 0, %s161
      %s164 = sphi 0, %s163
      %s178 = sphi 0, %s164
      %s182 = sphi 0, %s182
      %s184 = sphi 0, %s182
      %s185 = sphi 0, %s184
      %s199 = sphi 0, %s185
      %s203 = sphi 0, %s203
      %s205 = sphi 0, %s203
      %s206 = sphi 0, %s205
      %s220 = sphi 0, %s206
      %s224 = sphi 0, %s224
      %s226 = sphi 0, %s224
      %s227 = sphi 0, %s226
      %s241 = sphi 0, %s227
      %s245 = sphi 0, %s245
      %s247 = sphi 0, %s245
      %s248 = sphi 0, %s247
      %s262 = sphi 0, %s248
      %s266 = sphi 0, %s266
      %s268 = sphi 0, %s266
      %s269 = sphi 0, %s268
      %s283 = sphi 0, %s269
      %s287 = sphi 0, %s287
      %s289 = sphi 0, %s287
      %s290 = sphi 0, %s289
      %s304 = sphi 0, %s290
      %s310 = sphi 0, %s312
      %s313 = sphi 0, %s310
      %s314 = sphi 0, %s313
      %s330 = sphi 0, %s314
    $region4: #{_lambda_.4} parent=1 // loop_header_branch
      %25 = sbr.rel (%p23) target = $region8
    $region5: #{_lambda_.4} parent=1 // loop_body
      %s27 = ssub.s32 %s22, 1
      %s28 = ssub.s32 %s22, 2
      %s29 = sadd.s32 %s22, 1
      %s30 = ssub.s32 %s22, %s29
      %p31 = scmp.eq.s32.totalorder %s30, 0
      %s33 = sadd.s32 %s32, 1
      %s34 = scalar_select %p31, %s32, %s33
      %p37 = pneg %p31
      %p38 = scmp.eq.s32.totalorder %s22, 1
      %p39 = por %p37, %p38
      %p40 = scmp.ne.s32.totalorder %s32, %s35
      %p41 = scmp.eq.s32.totalorder %s22, 0
      %p42 = por %p40, %p41
      %p43 = scmp.ne.s32.totalorder %s32, %s35
      %p44 = scmp.eq.s32.totalorder %s27, 1
      %p45 = por %p43, %p44
      %p46 = scmp.ne.s32.totalorder %s35, %s36
      %p47 = scmp.eq.s32.totalorder %s27, 0
      %p48 = por %p46, %p47
      %p49 = scmp.ne.s32.totalorder %s35, %s36
      %p50 = scmp.eq.s32.totalorder %s28, 1
      %p51 = por %p49, %p50
      %p53 = scmp.ne.s32.totalorder %s36, %s52
      %p54 = scmp.eq.s32.totalorder %s28, 0
      %p55 = por %p53, %p54
      %s57 = sadd.s32 %s56, 1
      %p60 = scmp.eq.s32.totalorder %s22, 1
      %p61 = scmp.ne.s32.totalorder %s56, %s58
      %p62 = scmp.eq.s32.totalorder %s22, 0
      %p63 = por %p61, %p62
      %p64 = scmp.ne.s32.totalorder %s56, %s58
      %p65 = scmp.eq.s32.totalorder %s27, 1
      %p66 = por %p64, %p65
      %p67 = scmp.ne.s32.totalorder %s58, %s59
      %p68 = scmp.eq.s32.totalorder %s27, 0
      %p69 = por %p67, %p68
      %p70 = scmp.ne.s32.totalorder %s58, %s59
      %p71 = scmp.eq.s32.totalorder %s28, 1
      %p72 = por %p70, %p71
      %p74 = scmp.ne.s32.totalorder %s59, %s73
      %p75 = scmp.eq.s32.totalorder %s28, 0
      %p76 = por %p74, %p75
      %s78 = sadd.s32 %s77, 1
      %p81 = scmp.eq.s32.totalorder %s22, 1
      %p82 = scmp.ne.s32.totalorder %s77, %s79
      %p83 = scmp.eq.s32.totalorder %s22, 0
      %p84 = por %p82, %p83
      %p85 = scmp.ne.s32.totalorder %s77, %s79
      %p86 = scmp.eq.s32.totalorder %s27, 1
      %p87 = por %p85, %p86
      %p88 = scmp.ne.s32.totalorder %s79, %s80
      %p89 = scmp.eq.s32.totalorder %s27, 0
      %p90 = por %p88, %p89
      %p91 = scmp.ne.s32.totalorder %s79, %s80
      %p92 = scmp.eq.s32.totalorder %s28, 1
      %p93 = por %p91, %p92
      %p95 = scmp.ne.s32.totalorder %s80, %s94
      %p96 = scmp.eq.s32.totalorder %s28, 0
      %p97 = por %p95, %p96
      %s99 = sadd.s32 %s98, 1
      %p102 = scmp.eq.s32.totalorder %s22, 1
      %p103 = scmp.ne.s32.totalorder %s98, %s100
      %p104 = scmp.eq.s32.totalorder %s22, 0
      %p105 = por %p103, %p104
      %p106 = scmp.ne.s32.totalorder %s98, %s100
      %p107 = scmp.eq.s32.totalorder %s27, 1
      %p108 = por %p106, %p107
      %p109 = scmp.ne.s32.totalorder %s100, %s101
      %p110 = scmp.eq.s32.totalorder %s27, 0
      %p111 = por %p109, %p110
      %p112 = scmp.ne.s32.totalorder %s100, %s101
      %p113 = scmp.eq.s32.totalorder %s28, 1
      %p114 = por %p112, %p113
      %p116 = scmp.ne.s32.totalorder %s101, %s115
      %p117 = scmp.eq.s32.totalorder %s28, 0
      %p118 = por %p116, %p117
      %s120 = sadd.s32 %s119, 1
      %p123 = scmp.eq.s32.totalorder %s22, 1
      %p124 = scmp.ne.s32.totalorder %s119, %s121
      %p125 = scmp.eq.s32.totalorder %s22, 0
      %p126 = por %p124, %p125
      %p127 = scmp.ne.s32.totalorder %s119, %s121
      %p128 = scmp.eq.s32.totalorder %s27, 1
      %p129 = por %p127, %p128
      %p130 = scmp.ne.s32.totalorder %s121, %s122
      %p131 = scmp.eq.s32.totalorder %s27, 0
      %p132 = por %p130, %p131
      %p133 = scmp.ne.s32.totalorder %s121, %s122
      %p134 = scmp.eq.s32.totalorder %s28, 1
      %p135 = por %p133, %p134
      %p137 = scmp.ne.s32.totalorder %s122, %s136
      %p138 = scmp.eq.s32.totalorder %s28, 0
      %p139 = por %p137, %p138
      %s141 = sadd.s32 %s140, 1
      %p144 = scmp.eq.s32.totalorder %s22, 1
      %p145 = scmp.ne.s32.totalorder %s140, %s142
      %p146 = scmp.eq.s32.totalorder %s22, 0
      %p147 = por %p145, %p146
      %p148 = scmp.ne.s32.totalorder %s140, %s142
      %p149 = scmp.eq.s32.totalorder %s27, 1
      %p150 = por %p148, %p149
      %p151 = scmp.ne.s32.totalorder %s142, %s143
      %p152 = scmp.eq.s32.totalorder %s27, 0
      %p153 = por %p151, %p152
      %p154 = scmp.ne.s32.totalorder %s142, %s143
      %p155 = scmp.eq.s32.totalorder %s28, 1
      %p156 = por %p154, %p155
      %p158 = scmp.ne.s32.totalorder %s143, %s157
      %p159 = scmp.eq.s32.totalorder %s28, 0
      %p160 = por %p158, %p159
      %s162 = sadd.s32 %s161, 1
      %p165 = scmp.eq.s32.totalorder %s22, 1
      %p166 = scmp.ne.s32.totalorder %s161, %s163
      %p167 = scmp.eq.s32.totalorder %s22, 0
      %p168 = por %p166, %p167
      %p169 = scmp.ne.s32.totalorder %s161, %s163
      %p170 = scmp.eq.s32.totalorder %s27, 1
      %p171 = por %p169, %p170
      %p172 = scmp.ne.s32.totalorder %s163, %s164
      %p173 = scmp.eq.s32.totalorder %s27, 0
      %p174 = por %p172, %p173
      %p175 = scmp.ne.s32.totalorder %s163, %s164
      %p176 = scmp.eq.s32.totalorder %s28, 1
      %p177 = por %p175, %p176
      %p179 = scmp.ne.s32.totalorder %s164, %s178
      %p180 = scmp.eq.s32.totalorder %s28, 0
      %p181 = por %p179, %p180
      %s183 = sadd.s32 %s182, 1
      %p186 = scmp.eq.s32.totalorder %s22, 1
      %p187 = scmp.ne.s32.totalorder %s182, %s184
      %p188 = scmp.eq.s32.totalorder %s22, 0
      %p189 = por %p187, %p188
      %p190 = scmp.ne.s32.totalorder %s182, %s184
      %p191 = scmp.eq.s32.totalorder %s27, 1
      %p192 = por %p190, %p191
      %p193 = scmp.ne.s32.totalorder %s184, %s185
      %p194 = scmp.eq.s32.totalorder %s27, 0
      %p195 = por %p193, %p194
      %p196 = scmp.ne.s32.totalorder %s184, %s185
      %p197 = scmp.eq.s32.totalorder %s28, 1
      %p198 = por %p196, %p197
      %p200 = scmp.ne.s32.totalorder %s185, %s199
      %p201 = scmp.eq.s32.totalorder %s28, 0
      %p202 = por %p200, %p201
      %s204 = sadd.s32 %s203, 1
      %p207 = scmp.eq.s32.totalorder %s22, 1
      %p208 = scmp.ne.s32.totalorder %s203, %s205
      %p209 = scmp.eq.s32.totalorder %s22, 0
      %p210 = por %p208, %p209
      %p211 = scmp.ne.s32.totalorder %s203, %s205
      %p212 = scmp.eq.s32.totalorder %s27, 1
      %p213 = por %p211, %p212
      %p214 = scmp.ne.s32.totalorder %s205, %s206
      %p215 = scmp.eq.s32.totalorder %s27, 0
      %p216 = por %p214, %p215
      %p217 = scmp.ne.s32.totalorder %s205, %s206
      %p218 = scmp.eq.s32.totalorder %s28, 1
      %p219 = por %p217, %p218
      %p221 = scmp.ne.s32.totalorder %s206, %s220
      %p222 = scmp.eq.s32.totalorder %s28, 0
      %p223 = por %p221, %p222
      %s225 = sadd.s32 %s224, 1
      %p228 = scmp.eq.s32.totalorder %s22, 1
      %p229 = scmp.ne.s32.totalorder %s224, %s226
      %p230 = scmp.eq.s32.totalorder %s22, 0
      %p231 = por %p229, %p230
      %p232 = scmp.ne.s32.totalorder %s224, %s226
      %p233 = scmp.eq.s32.totalorder %s27, 1
      %p234 = por %p232, %p233
      %p235 = scmp.ne.s32.totalorder %s226, %s227
      %p236 = scmp.eq.s32.totalorder %s27, 0
      %p237 = por %p235, %p236
      %p238 = scmp.ne.s32.totalorder %s226, %s227
      %p239 = scmp.eq.s32.totalorder %s28, 1
      %p240 = por %p238, %p239
      %p242 = scmp.ne.s32.totalorder %s227, %s241
      %p243 = scmp.eq.s32.totalorder %s28, 0
      %p244 = por %p242, %p243
      %s246 = sadd.s32 %s245, 1
      %p249 = scmp.eq.s32.totalorder %s22, 1
      %p250 = scmp.ne.s32.totalorder %s245, %s247
      %p251 = scmp.eq.s32.totalorder %s22, 0
      %p252 = por %p250, %p251
      %p253 = scmp.ne.s32.totalorder %s245, %s247
      %p254 = scmp.eq.s32.totalorder %s27, 1
      %p255 = por %p253, %p254
      %p256 = scmp.ne.s32.totalorder %s247, %s248
      %p257 = scmp.eq.s32.totalorder %s27, 0
      %p258 = por %p256, %p257
      %p259 = scmp.ne.s32.totalorder %s247, %s248
      %p260 = scmp.eq.s32.totalorder %s28, 1
      %p261 = por %p259, %p260
      %p263 = scmp.ne.s32.totalorder %s248, %s262
      %p264 = scmp.eq.s32.totalorder %s28, 0
      %p265 = por %p263, %p264
      %s267 = sadd.s32 %s266, 1
      %p270 = scmp.eq.s32.totalorder %s22, 1
      %p271 = scmp.ne.s32.totalorder %s266, %s268
      %p272 = scmp.eq.s32.totalorder %s22, 0
      %p273 = por %p271, %p272
      %p274 = scmp.ne.s32.totalorder %s266, %s268
      %p275 = scmp.eq.s32.totalorder %s27, 1
      %p276 = por %p274, %p275
      %p277 = scmp.ne.s32.totalorder %s268, %s269
      %p278 = scmp.eq.s32.totalorder %s27, 0
      %p279 = por %p277, %p278
      %p280 = scmp.ne.s32.totalorder %s268, %s269
      %p281 = scmp.eq.s32.totalorder %s28, 1
      %p282 = por %p280, %p281
      %p284 = scmp.ne.s32.totalorder %s269, %s283
      %p285 = scmp.eq.s32.totalorder %s28, 0
      %p286 = por %p284, %p285
      %s288 = sadd.s32 %s287, 1
      %p291 = scmp.eq.s32.totalorder %s22, 1
      %p292 = scmp.ne.s32.totalorder %s287, %s289
      %p293 = scmp.eq.s32.totalorder %s22, 0
      %p294 = por %p292, %p293
      %p295 = scmp.ne.s32.totalorder %s287, %s289
      %p296 = scmp.eq.s32.totalorder %s27, 1
      %p297 = por %p295, %p296
      %p298 = scmp.ne.s32.totalorder %s289, %s290
      %p299 = scmp.eq.s32.totalorder %s27, 0
      %p300 = por %p298, %p299
      %p301 = scmp.ne.s32.totalorder %s289, %s290
      %p302 = scmp.eq.s32.totalorder %s28, 1
      %p303 = por %p301, %p302
      %p305 = scmp.ne.s32.totalorder %s290, %s304
      %p306 = scmp.eq.s32.totalorder %s28, 0
      %p307 = por %p305, %p306
      %s308 = ssub.s32 %s22, %s29
      %p309 = scmp.eq.s32.totalorder %s308, 0
      %s311 = sadd.s32 %s310, 1
      %s312 = scalar_select %p309, %s310, %s311
      %p315 = pneg %p309
      %p316 = scmp.eq.s32.totalorder %s22, 1
      %p317 = por %p315, %p316
      %p318 = scmp.ne.s32.totalorder %s310, %s313
      %p319 = scmp.eq.s32.totalorder %s22, 0
      %p320 = por %p318, %p319
      %p321 = scmp.ne.s32.totalorder %s310, %s313
      %p322 = scmp.eq.s32.totalorder %s27, 1
      %p323 = por %p321, %p322
      %p324 = scmp.ne.s32.totalorder %s313, %s314
      %p325 = scmp.eq.s32.totalorder %s27, 0
      %p326 = por %p324, %p325
      %p327 = scmp.ne.s32.totalorder %s313, %s314
      %p328 = scmp.eq.s32.totalorder %s28, 1
      %p329 = por %p327, %p328
      %p331 = scmp.ne.s32.totalorder %s314, %s330
      %p332 = scmp.eq.s32.totalorder %s28, 0
      %p333 = por %p331, %p332
      %p334 = scmp.le.s32.totalorder 1, %s22
      %p335 = scmp.lt.s32.totalorder %s22, 3
      %p336 = pnand %p334, %p335
      %p337 = pneg %p336
      // Predicated region
      $region9: #{_lambda_.4} parent=5 // pred_check
        _
      $region10: #{_lambda_.4} parent=5 // pred_check_branch
        %339 = sbr.rel (%p336) target = $region12
      $region11: #{_lambda_.4} parent=5 // pred_region
        %s340 = ssub.s32 %s22, 1
        // Predicated region
        $region13: #{_lambda_.4} parent=11 // pred_check
          %p341 = pneg %p69
        $region14: #{_lambda_.4} parent=11 // pred_check_branch
          %343 = sbr.rel (%p341) target = $region16
        $region15: #{_lambda_.4} parent=11 // pred_region
          _
        $region16: #{_lambda_.4} parent=11 // pred_fallthru
          _
        // Predicated region
        $region17: #{_lambda_.4} parent=11 // pred_check
          %p344 = pneg %p90
        $region18: #{_lambda_.4} parent=11 // pred_check_branch
          %346 = sbr.rel (%p344) target = $region20
        $region19: #{_lambda_.4} parent=11 // pred_region
          _
        $region20: #{_lambda_.4} parent=11 // pred_fallthru
          _
        // Predicated region
        $region21: #{_lambda_.4} parent=11 // pred_check
          %p347 = pneg %p111
        $region22: #{_lambda_.4} parent=11 // pred_check_branch
          %349 = sbr.rel (%p347) target = $region24
        $region23: #{_lambda_.4} parent=11 // pred_region
          %351 = vsyncadd [#allocation3], 0
          %s352 = sshll.u32 %s3, 4
          %s353 = int_to_ptr.hbm [resolvable:$true] %s352
          %s354 = sshll.u32 [#allocation2], 4
          %s355 = int_to_ptr.vmem [resolvable:$true] %s354
          %360 = dma.hbm_to_vmem [thread:$0]  %s353, 256, %s355, [#allocation3], 64, 64, 4
        $region24: #{_lambda_.4} parent=11 // pred_fallthru
          _
        // Predicated region
        $region25: #{_lambda_.4} parent=11 // pred_check
          %p361 = pneg %p132
        $region26: #{_lambda_.4} parent=11 // pred_check_branch
          %363 = sbr.rel (%p361) target = $region28
        $region27: #{_lambda_.4} parent=11 // pred_region
          _
        $region28: #{_lambda_.4} parent=11 // pred_fallthru
          _
        // Predicated region
        $region29: #{_lambda_.4} parent=11 // pred_check
          %p364 = pneg %p153
        $region30: #{_lambda_.4} parent=11 // pred_check_branch
          %366 = sbr.rel (%p364) target = $region32
        $region31: #{_lambda_.4} parent=11 // pred_region
          _
        $region32: #{_lambda_.4} parent=11 // pred_fallthru
          _
        // Predicated region
        $region33: #{_lambda_.4} parent=11 // pred_check
          %p367 = pneg %p174
        $region34: #{_lambda_.4} parent=11 // pred_check_branch
          %369 = sbr.rel (%p367) target = $region36
        $region35: #{_lambda_.4} parent=11 // pred_region
          _
        $region36: #{_lambda_.4} parent=11 // pred_fallthru
          _
        // Predicated region
        $region37: #{_lambda_.4} parent=11 // pred_check
          %p370 = pneg %p195
        $region38: #{_lambda_.4} parent=11 // pred_check_branch
          %372 = sbr.rel (%p370) target = $region40
        $region39: #{_lambda_.4} parent=11 // pred_region
          %374 = vsyncadd [#allocation5], 0
          %s375 = sshll.u32 %s7, 4
          %s376 = int_to_ptr.hbm [resolvable:$true] %s375
          %s377 = sshll.u32 [#allocation4], 4
          %s378 = int_to_ptr.vmem [resolvable:$true] %s377
          %383 = dma.hbm_to_vmem [thread:$0]  %s376, 256, %s378, [#allocation5], 64, 64, 4
        $region40: #{_lambda_.4} parent=11 // pred_fallthru
          _
        // Predicated region
        $region41: #{_lambda_.4} parent=11 // pred_check
          %p384 = pneg %p216
        $region42: #{_lambda_.4} parent=11 // pred_check_branch
          %386 = sbr.rel (%p384) target = $region44
        $region43: #{_lambda_.4} parent=11 // pred_region
          %388 = vsyncadd [#allocation5], 0
          %s390 = sshll.u32 %s8, 4
          %s391 = int_to_ptr.hbm [resolvable:$true] %s390
          %s392 = sshll.u32 [#allocation6], 4
          %s393 = int_to_ptr.vmem [resolvable:$true] %s392
          %395 = dma.hbm_to_vmem [thread:$0]  %s391, 16, %s393, [#allocation5]
        $region44: #{_lambda_.4} parent=11 // pred_fallthru
          _
        // Predicated region
        $region45: #{_lambda_.4} parent=11 // pred_check
          %p396 = pneg %p237
        $region46: #{_lambda_.4} parent=11 // pred_check_branch
          %398 = sbr.rel (%p396) target = $region48
        $region47: #{_lambda_.4} parent=11 // pred_region
          _
        $region48: #{_lambda_.4} parent=11 // pred_fallthru
          _
        // Predicated region
        $region49: #{_lambda_.4} parent=11 // pred_check
          %p399 = pneg %p258
        $region50: #{_lambda_.4} parent=11 // pred_check_branch
          %401 = sbr.rel (%p399) target = $region52
        $region51: #{_lambda_.4} parent=11 // pred_region
          %403 = vsyncadd [#allocation8], 0
          %s405 = sshll.u32 %s10, 4
          %s406 = int_to_ptr.hbm [resolvable:$true] %s405
          %s407 = sshll.u32 [#allocation7], 4
          %s408 = int_to_ptr.vmem [resolvable:$true] %s407
          %410 = dma.hbm_to_vmem [thread:$0]  %s406, 16, %s408, [#allocation8]
        $region52: #{_lambda_.4} parent=11 // pred_fallthru
          _
        // Predicated region
        $region53: #{_lambda_.4} parent=11 // pred_check
          %p411 = pneg %p279
        $region54: #{_lambda_.4} parent=11 // pred_check_branch
          %413 = sbr.rel (%p411) target = $region56
        $region55: #{_lambda_.4} parent=11 // pred_region
          _
        $region56: #{_lambda_.4} parent=11 // pred_fallthru
          _
        // Predicated region
        $region57: #{_lambda_.4} parent=11 // pred_check
          %p414 = pneg %p300
        $region58: #{_lambda_.4} parent=11 // pred_check_branch
          %416 = sbr.rel (%p414) target = $region60
        $region59: #{_lambda_.4} parent=11 // pred_region
          _
        $region60: #{_lambda_.4} parent=11 // pred_fallthru
          _
      $region12: #{_lambda_.4} parent=5 // pred_fallthru
        _
      %p417 = scmp.lt.s32.totalorder %s22, 2
      // Predicated region
      $region61: #{_lambda_.4} parent=5 // pred_check
        %p418 = pneg %p417
      $region62: #{_lambda_.4} parent=5 // pred_check_branch
        %420 = sbr.rel (%p418) target = $region64
      $region63: #{_lambda_.4} parent=5 // pred_region
        // Predicated region
        $region65: #{_lambda_.4} parent=63 // pred_check
          %p421 = pneg %p42
        $region66: #{_lambda_.4} parent=63 // pred_check_branch
          %423 = sbr.rel (%p421) target = $region68
        $region67: #{_lambda_.4} parent=63 // pred_region
          %p424 = scmp.lt.s32.totalorder %s22, 1
          %s425 = scalar_select %p424, %s22, 1
          %s426 = smul.addr %s425, 4
          %s427 = scalar_lea.vmem %s0, %s426
        $region68: #{_lambda_.4} parent=63 // pred_fallthru
          _
      $region64: #{_lambda_.4} parent=5 // pred_fallthru
        _
      %p428 = scmp.le.s32.totalorder 1, %s22
      %p429 = scmp.lt.s32.totalorder %s22, 3
      %p430 = pnand %p428, %p429
      %p431 = pneg %p430
      // Predicated region
      $region69: #{_lambda_.4} parent=5 // pred_check
        _
      $region70: #{_lambda_.4} parent=5 // pred_check_branch
        %433 = sbr.rel (%p430) target = $region72
      $region71: #{_lambda_.4} parent=5 // pred_region
        %s434 = ssub.s32 %s22, 1
        // Predicated region
        $region73: #{_lambda_.4} parent=71 // pred_check
          %p435 = pneg %p111
        $region74: #{_lambda_.4} parent=71 // pred_check_branch
          %437 = sbr.rel (%p435) target = $region76
        $region75: #{_lambda_.4} parent=71 // pred_region
          %439 = dma.done [#allocation3], 256
        $region76: #{_lambda_.4} parent=71 // pred_fallthru
          _
        // Predicated region
        $region77: #{_lambda_.4} parent=71 // pred_check
          %p440 = pneg %p195
        $region78: #{_lambda_.4} parent=71 // pred_check_branch
          %442 = sbr.rel (%p440) target = $region80
        $region79: #{_lambda_.4} parent=71 // pred_region
          %444 = dma.done [#allocation5], 256
        $region80: #{_lambda_.4} parent=71 // pred_fallthru
          _
        // Predicated region
        $region81: #{_lambda_.4} parent=71 // pred_check
          %p445 = pneg %p216
        $region82: #{_lambda_.4} parent=71 // pred_check_branch
          %447 = sbr.rel (%p445) target = $region84
        $region83: #{_lambda_.4} parent=71 // pred_region
          %449 = dma.done [#allocation5], 16
        $region84: #{_lambda_.4} parent=71 // pred_fallthru
          _
        // Predicated region
        $region85: #{_lambda_.4} parent=71 // pred_check
          %p450 = pneg %p258
        $region86: #{_lambda_.4} parent=71 // pred_check_branch
          %452 = sbr.rel (%p450) target = $region88
        $region87: #{_lambda_.4} parent=71 // pred_region
          %454 = dma.done [#allocation8], 16
        $region88: #{_lambda_.4} parent=71 // pred_fallthru
          _
        %p455 = scmp.lt.s32.totalorder %s27, 1
        %s456 = scalar_select %p455, %s27, 1
        %s457 = smul.addr %s456, 4
        %s458 = scalar_lea.vmem %s0, %s457
        %p459 = pneg %p48
        %p460 = pneg %p45
        %p461 = pneg %p69
        %p462 = pneg %p66
        %p463 = pneg %p90
        %p464 = pneg %p87
        %p465 = pneg %p111
        %p466 = pneg %p108
        %p467 = pneg %p132
        %p468 = pneg %p129
        %p469 = pneg %p153
        %p470 = pneg %p150
        %p471 = pneg %p174
        %p472 = pneg %p171
        %p473 = pneg %p195
        %p474 = pneg %p192
        %p475 = pneg %p216
        %p476 = pneg %p213
        %p477 = pneg %p237
        %p478 = pneg %p234
        %p479 = pneg %p258
        %p480 = pneg %p255
        %p481 = pneg %p279
        %p482 = pneg %p276
        %p483 = pneg %p300
        %p484 = pneg %p297
        %p485 = pneg %p326
        %p486 = pneg %p323
        %p487 = scmp.lt.s32.totalorder %s27, 1
        %s488 = scalar_select %p487, %s27, 1
        %s489 = smul.addr %s488, 4
        %s490 = scalar_lea.vmem %s13, %s489
        %p491 = scmp.lt.s32.totalorder %s27, 1
        %s492 = scalar_select %p491, %s27, 1
        %s493 = smul.addr %s492, 4
        %s494 = scalar_lea.vmem %s0, %s493
        %p495 = scmp.lt.s32.totalorder %s27, 1
        %s496 = scalar_select %p495, %s27, 1
        %s497 = smul.addr %s496, 4
        %s498 = scalar_lea.vmem %s13, %s497
        %v500 = vld [vmem:[%s494] sm:$0xf]
        %v501 = vld [vmem:[%s1] sm:$0xf]
        %v502 = vld [vmem:[%s1 + $0x4] sm:$0xf]
        %v503 = vld [vmem:[%s1 + $0x8] sm:$0xf]
        %v504 = vld [vmem:[%s1 + $0xc] sm:$0xf]
        %v505 = vld [vmem:[%s2] sm:$0x1]
        %v507 = vperm.slane %v505, 0
        %v513 = vunpack.c.l.b16 %v501
        %v514 = vunpack.c.l.b16 %v502
        %v515 = vunpack.c.l.b16 %v503
        %v516 = vunpack.c.l.b16 %v504
        %v517 = vpack.c.b16 %v514, %v513
        %v518 = vpack.c.b16 %v516, %v515
        %vm521 = vcmask 261120
        %v523 = vsel %vm521, %v500, 0
        %525 = vmatpush.bf16.msra.mxu0 0
        %526 = vmatpush.bf16.msra.mxu0 0
        %527 = vmatpush.bf16.msra.mxu0 0
        %528 = vmatpush.bf16.msra.mxu0 0
        %529 = vmatpush.bf16.msra.mxu0 0
        %530 = vmatpush.bf16.msra.mxu0 0
        %531 = vmatpush.bf16.msra.mxu0 %v518
        %532 = vmatpush.bf16.msra.mxu0 %v517
        %533 = vmatmul.bf16.gmra.mxu0 %v523
        %v534 = vpop.f32.mrf.mxu0
        %v535 = vadd.f32 %v507, %v534
        %v536 = vpop.f32.mrf.mxu0
        %537 = vdwg.mxu0
        %v538 = vpack.c.bf16 %v535, %v535
        %v539 = vld [vmem:[#allocation2] sm:$0xf]
        %v540 = vld [vmem:[#allocation2 + $0x4] sm:$0xf]
        %v541 = vld [vmem:[#allocation2 + $0x8] sm:$0xf]
        %v542 = vld [vmem:[#allocation2 + $0xc] sm:$0xf]
        %v543 = vld [vmem:[%s4] sm:$0x1]
        %v544 = vld [vmem:[#allocation6] sm:$0x1]
        %v545 = vld [vmem:[#allocation7] sm:$0x1]
        %v546 = vld [vmem:[%s5] sm:$0x1]
        %v547 = vld [vmem:[%s6] sm:$0x1]
        %v548 = vld [vmem:[%s11] sm:$0x1]
        %v549 = vld [vmem:[%s12] sm:$0x1]
        %v550 = vld [vmem:[#allocation4] sm:$0xf]
        %v551 = vld [vmem:[#allocation4 + $0x4] sm:$0xf]
        %v552 = vld [vmem:[#allocation4 + $0x8] sm:$0xf]
        %v553 = vld [vmem:[#allocation4 + $0xc] sm:$0xf]
        %v554 = vld [vmem:[%s9] sm:$0xf]
        %v555 = vld [vmem:[%s9 + $0x4] sm:$0xf]
        %v556 = vld [vmem:[%s9 + $0x8] sm:$0xf]
        %v557 = vld [vmem:[%s9 + $0xc] sm:$0xf]
        %v558 = vld [vmem:[%s9 + $0x10] sm:$0xf]
        %v559 = vld [vmem:[%s9 + $0x14] sm:$0xf]
        %v560 = vld [vmem:[%s9 + $0x18] sm:$0xf]
        %v561 = vld [vmem:[%s9 + $0x1c] sm:$0xf]
        %v562 = vld [vmem:[%s9 + $0x20] sm:$0xf]
        %v563 = vld [vmem:[%s9 + $0x24] sm:$0xf]
        %v564 = vld [vmem:[%s9 + $0x28] sm:$0xf]
        %v565 = vld [vmem:[%s9 + $0x2c] sm:$0xf]
        %v566 = vld [vmem:[%s9 + $0x30] sm:$0xf]
        %v567 = vld [vmem:[%s9 + $0x34] sm:$0xf]
        %v568 = vld [vmem:[%s9 + $0x38] sm:$0xf]
        %v569 = vld [vmem:[%s9 + $0x3c] sm:$0xf]
        %v570 = vlaneseq
        %v571 = vshrl.u32 %v570, 7
        %v572 = vlaneseq
        %v573 = vand.u32 %v572, 127
        %vm574 = vcmp.le.s32.totalorder %v573, %v571
        %v576 = vunpack.c.l.b16 %v538
        %v577 = vpack.c.b16 %v576, %v576
        %578 = vrot.lane.b32.xlu0 %v577, 96
        %v579 = vpop.permute.xlu0 %578
        %vm580 = vcmask 64512
        %v582 = vsel %vm580, %v538, 0
        %v585 = vsel %vm580, %v579, 0
        %587 = vmatpush.bf16.xpose.msra.mxu0 0
        %588 = vmatpush.bf16.xpose.msra.mxu0 0
        %589 = vmatpush.bf16.xpose.msra.mxu0 0
        %590 = vmatpush.bf16.xpose.msra.mxu0 0
        %591 = vmatpush.bf16.xpose.msra.mxu0 0
        %592 = vmatpush.bf16.xpose.msra.mxu0 0
        %593 = vmatpush.bf16.xpose.msra.mxu0 0
        %594 = vmatpush.bf16.xpose.msra.mxu0 %v585
        %595 = vmatmul.bf16.gmra.mxu0 %v582
        %v596 = vpop.f32.mrf.mxu0
        %v597 = vadd.f32 0.0, %v596
        %v598 = vpop.f32.mrf.mxu0
        %599 = vdwg.mxu0
        %v600 = vsel %vm574, %v597, -1e+30
        %v601 = vsel %vm580, %v600, -inf
        %602 = vmax.xlane.f32.xlu0 %v601
        %v603 = vpop.xlane.xlu0 %602
        %v604 = vsub.f32 %v600, %v603
        %v605 = vmul.f32 %v604, 1.442695
        %v606 = vpow.pop %v605
        %v607 = vsel %vm580, %v606, 0.0
        %608 = vadd.xlane.f32.xlu0 %v607
        %v609 = vpop.xlane.xlu0 %608
        %v610 = vrcp.pop %v609
        %v611 = vmul.f32 %v606, %v610
        %v612 = vpack.c.bf16 %v611, %v611
        %613 = vrot.lane.b32.xlu0 %v577, 64
        %v614 = vpop.permute.xlu0 %613
        %v616 = vsel %vm580, %v612, 0
        %vm618 = vcmask 1043456
        %v620 = vsel %vm618, %v614, 0
        %622 = vmatpush.bf16.msra.mxu0 0
        %623 = vmatpush.bf16.msra.mxu0 0
        %624 = vmatpush.bf16.msra.mxu0 0
        %625 = vmatpush.bf16.msra.mxu0 0
        %626 = vmatpush.bf16.msra.mxu0 0
        %627 = vmatpush.bf16.msra.mxu0 0
        %628 = vmatpush.bf16.msra.mxu0 0
        %629 = vmatpush.bf16.msra.mxu0 %v620
        %630 = vmatmul.bf16.gmra.mxu0 %v616
        %v631 = vpop.f32.mrf.mxu0
        %v632 = vadd.f32 0.0, %v631
        %v633 = vpop.f32.mrf.mxu0
        %634 = vdwg.mxu0
        %v635 = vpack.c.bf16 %v632, %v632
        %636 = vrot.lane.b32.xlu0 %v577, 120
        %v637 = vpop.permute.xlu0 %636
        %638 = vrot.lane.b32.xlu0 %v577, 88
        %v639 = vpop.permute.xlu0 %638
        %v641 = vsel %vm580, %v637, 0
        %v644 = vsel %vm580, %v639, 0
        %646 = vmatpush.bf16.xpose.msra.mxu0 0
        %647 = vmatpush.bf16.xpose.msra.mxu0 0
        %648 = vmatpush.bf16.xpose.msra.mxu0 0
        %649 = vmatpush.bf16.xpose.msra.mxu0 0
        %650 = vmatpush.bf16.xpose.msra.mxu0 0
        %651 = vmatpush.bf16.xpose.msra.mxu0 0
        %652 = vmatpush.bf16.xpose.msra.mxu0 0
        %653 = vmatpush.bf16.xpose.msra.mxu0 %v644
        %654 = vmatmul.bf16.gmra.mxu0 %v641
        %v655 = vpop.f32.mrf.mxu0
        %v656 = vadd.f32 0.0, %v655
        %v657 = vpop.f32.mrf.mxu0
        %658 = vdwg.mxu0
        %v659 = vsel %vm574, %v656, -1e+30
        %v660 = vsel %vm580, %v659, -inf
        %661 = vmax.xlane.f32.xlu0 %v660
        %v662 = vpop.xlane.xlu0 %661
        %v663 = vsub.f32 %v659, %v662
        %v664 = vmul.f32 %v663, 1.442695
        %v665 = vpow.pop %v664
        %v666 = vsel %vm580, %v665, 0.0
        %667 = vadd.xlane.f32.xlu0 %v666
        %v668 = vpop.xlane.xlu0 %667
        %v669 = vrcp.pop %v668
        %v670 = vmul.f32 %v665, %v669
        %v671 = vpack.c.bf16 %v670, %v670
        %672 = vrot.lane.b32.xlu0 %v577, 56
        %v673 = vpop.permute.xlu0 %672
        %v675 = vsel %vm580, %v671, 0
        %v678 = vsel %vm618, %v673, 0
        %680 = vmatpush.bf16.msra.mxu0 0
        %681 = vmatpush.bf16.msra.mxu0 0
        %682 = vmatpush.bf16.msra.mxu0 0
        %683 = vmatpush.bf16.msra.mxu0 0
        %684 = vmatpush.bf16.msra.mxu0 0
        %685 = vmatpush.bf16.msra.mxu0 0
        %686 = vmatpush.bf16.msra.mxu0 0
        %687 = vmatpush.bf16.msra.mxu0 %v678
        %688 = vmatmul.bf16.gmra.mxu0 %v675
        %v689 = vpop.f32.mrf.mxu0
        %v690 = vadd.f32 0.0, %v689
        %v691 = vpop.f32.mrf.mxu0
        %692 = vdwg.mxu0
        %v693 = vpack.c.bf16 %v690, %v690
        %v695 = vsel %vm580, %v693, 0
        %v698 = vsel %vm618, %v540, 0
        %700 = vmatpush.bf16.msra.mxu0 0
        %701 = vmatpush.bf16.msra.mxu0 0
        %702 = vmatpush.bf16.msra.mxu0 0
        %703 = vmatpush.bf16.msra.mxu0 0
        %704 = vmatpush.bf16.msra.mxu0 0
        %705 = vmatpush.bf16.msra.mxu0 0
        %706 = vmatpush.bf16.msra.mxu0 0
        %707 = vmatpush.bf16.msra.mxu0 %v698
        %708 = vmatmul.bf16.gmra.mxu0 %v695
        %v709 = vpop.f32.mrf.mxu0
        %v710 = vadd.f32 0.0, %v709
        %v711 = vpop.f32.mrf.mxu0
        %712 = vdwg.mxu0
        %v714 = vsel %vm580, %v635, 0
        %v717 = vsel %vm618, %v539, 0
        %719 = vmatpush.bf16.msra.mxu0 0
        %720 = vmatpush.bf16.msra.mxu0 0
        %721 = vmatpush.bf16.msra.mxu0 0
        %722 = vmatpush.bf16.msra.mxu0 0
        %723 = vmatpush.bf16.msra.mxu0 0
        %724 = vmatpush.bf16.msra.mxu0 0
        %725 = vmatpush.bf16.msra.mxu0 0
        %726 = vmatpush.bf16.msra.mxu0 %v717
        %727 = vmatmul.bf16.gmra.mxu0 %v714
        %v728 = vpop.f32.mrf.mxu0
        %v729 = vadd.f32 %v710, %v728
        %v730 = vpop.f32.mrf.mxu0
        %731 = vdwg.mxu0
        %732 = vrot.lane.b32.xlu0 %v577, 112
        %v733 = vpop.permute.xlu0 %732
        %734 = vrot.lane.b32.xlu0 %v577, 80
        %v735 = vpop.permute.xlu0 %734
        %v737 = vsel %vm580, %v733, 0
        %v740 = vsel %vm580, %v735, 0
        %742 = vmatpush.bf16.xpose.msra.mxu0 0
        %743 = vmatpush.bf16.xpose.msra.mxu0 0
        %744 = vmatpush.bf16.xpose.msra.mxu0 0
        %745 = vmatpush.bf16.xpose.msra.mxu0 0
        %746 = vmatpush.bf16.xpose.msra.mxu0 0
        %747 = vmatpush.bf16.xpose.msra.mxu0 0
        %748 = vmatpush.bf16.xpose.msra.mxu0 0
        %749 = vmatpush.bf16.xpose.msra.mxu0 %v740
        %750 = vmatmul.bf16.gmra.mxu0 %v737
        %v751 = vpop.f32.mrf.mxu0
        %v752 = vadd.f32 0.0, %v751
        %v753 = vpop.f32.mrf.mxu0
        %754 = vdwg.mxu0
        %v755 = vsel %vm574, %v752, -1e+30
        %v756 = vsel %vm580, %v755, -inf
        %757 = vmax.xlane.f32.xlu0 %v756
        %v758 = vpop.xlane.xlu0 %757
        %v759 = vsub.f32 %v755, %v758
        %v760 = vmul.f32 %v759, 1.442695
        %v761 = vpow.pop %v760
        %v762 = vsel %vm580, %v761, 0.0
        %763 = vadd.xlane.f32.xlu0 %v762
        %v764 = vpop.xlane.xlu0 %763
        %v765 = vrcp.pop %v764
        %v766 = vmul.f32 %v761, %v765
        %v767 = vpack.c.bf16 %v766, %v766
        %768 = vrot.lane.b32.xlu0 %v577, 48
        %v769 = vpop.permute.xlu0 %768
        %v771 = vsel %vm580, %v767, 0
        %v774 = vsel %vm618, %v769, 0
        %776 = vmatpush.bf16.msra.mxu0 0
        %777 = vmatpush.bf16.msra.mxu0 0
        %778 = vmatpush.bf16.msra.mxu0 0
        %779 = vmatpush.bf16.msra.mxu0 0
        %780 = vmatpush.bf16.msra.mxu0 0
        %781 = vmatpush.bf16.msra.mxu0 0
        %782 = vmatpush.bf16.msra.mxu0 0
        %783 = vmatpush.bf16.msra.mxu0 %v774
        %784 = vmatmul.bf16.gmra.mxu0 %v771
        %v785 = vpop.f32.mrf.mxu0
        %v786 = vadd.f32 0.0, %v785
        %v787 = vpop.f32.mrf.mxu0
        %788 = vdwg.mxu0
        %v789 = vpack.c.bf16 %v786, %v786
        %v791 = vsel %vm580, %v789, 0
        %v794 = vsel %vm618, %v541, 0
        %796 = vmatpush.bf16.msra.mxu0 0
        %797 = vmatpush.bf16.msra.mxu0 0
        %798 = vmatpush.bf16.msra.mxu0 0
        %799 = vmatpush.bf16.msra.mxu0 0
        %800 = vmatpush.bf16.msra.mxu0 0
        %801 = vmatpush.bf16.msra.mxu0 0
        %802 = vmatpush.bf16.msra.mxu0 0
        %803 = vmatpush.bf16.msra.mxu0 %v794
        %804 = vmatmul.bf16.gmra.mxu0 %v791
        %v805 = vpop.f32.mrf.mxu0
        %v806 = vadd.f32 0.0, %v805
        %v807 = vpop.f32.mrf.mxu0
        %808 = vdwg.mxu0
        %v809 = vadd.f32 %v729, %v806
        %810 = vrot.lane.b32.xlu0 %v577, 104
        %v811 = vpop.permute.xlu0 %810
        %812 = vrot.lane.b32.xlu0 %v577, 72
        %v813 = vpop.permute.xlu0 %812
        %v815 = vsel %vm580, %v811, 0
        %v818 = vsel %vm580, %v813, 0
        %820 = vmatpush.bf16.xpose.msra.mxu0 0
        %821 = vmatpush.bf16.xpose.msra.mxu0 0
        %822 = vmatpush.bf16.xpose.msra.mxu0 0
        %823 = vmatpush.bf16.xpose.msra.mxu0 0
        %824 = vmatpush.bf16.xpose.msra.mxu0 0
        %825 = vmatpush.bf16.xpose.msra.mxu0 0
        %826 = vmatpush.bf16.xpose.msra.mxu0 0
        %827 = vmatpush.bf16.xpose.msra.mxu0 %v818
        %828 = vmatmul.bf16.gmra.mxu0 %v815
        %v829 = vpop.f32.mrf.mxu0
        %v830 = vadd.f32 0.0, %v829
        %v831 = vpop.f32.mrf.mxu0
        %832 = vdwg.mxu0
        %v833 = vsel %vm574, %v830, -1e+30
        %v834 = vsel %vm580, %v833, -inf
        %835 = vmax.xlane.f32.xlu0 %v834
        %v836 = vpop.xlane.xlu0 %835
        %v837 = vsub.f32 %v833, %v836
        %v838 = vmul.f32 %v837, 1.442695
        %v839 = vpow.pop %v838
        %v840 = vsel %vm580, %v839, 0.0
        %841 = vadd.xlane.f32.xlu0 %v840
        %v842 = vpop.xlane.xlu0 %841
        %v843 = vrcp.pop %v842
        %v844 = vmul.f32 %v839, %v843
        %v845 = vpack.c.bf16 %v844, %v844
        %846 = vrot.lane.b32.xlu0 %v577, 40
        %v847 = vpop.permute.xlu0 %846
        %v849 = vsel %vm580, %v845, 0
        %v852 = vsel %vm618, %v847, 0
        %854 = vmatpush.bf16.msra.mxu0 0
        %855 = vmatpush.bf16.msra.mxu0 0
        %856 = vmatpush.bf16.msra.mxu0 0
        %857 = vmatpush.bf16.msra.mxu0 0
        %858 = vmatpush.bf16.msra.mxu0 0
        %859 = vmatpush.bf16.msra.mxu0 0
        %860 = vmatpush.bf16.msra.mxu0 0
        %861 = vmatpush.bf16.msra.mxu0 %v852
        %862 = vmatmul.bf16.gmra.mxu0 %v849
        %v863 = vpop.f32.mrf.mxu0
        %v864 = vadd.f32 0.0, %v863
        %v865 = vpop.f32.mrf.mxu0
        %866 = vdwg.mxu0
        %v867 = vpack.c.bf16 %v864, %v864
        %v869 = vsel %vm580, %v867, 0
        %v872 = vsel %vm618, %v542, 0
        %874 = vmatpush.bf16.msra.mxu0 0
        %875 = vmatpush.bf16.msra.mxu0 0
        %876 = vmatpush.bf16.msra.mxu0 0
        %877 = vmatpush.bf16.msra.mxu0 0
        %878 = vmatpush.bf16.msra.mxu0 0
        %879 = vmatpush.bf16.msra.mxu0 0
        %880 = vmatpush.bf16.msra.mxu0 0
        %881 = vmatpush.bf16.msra.mxu0 %v872
        %882 = vmatmul.bf16.gmra.mxu0 %v869
        %v883 = vpop.f32.mrf.mxu0
        %v884 = vadd.f32 0.0, %v883
        %v885 = vpop.f32.mrf.mxu0
        %886 = vdwg.mxu0
        %v887 = vadd.f32 %v809, %v884
        %v889 = vperm.slane %v543, 0
        %v891 = vadd.f32 %v887, %v889
        %v892 = vunpack.c.l.bf16 %v500
        %v893 = vadd.f32 %v892, %v891
        %v894 = vsel %vm521, %v893, 0.0
        %895 = vadd.xlane.f32.xlu0 %v894
        %v896 = vpop.xlane.xlu0 %895
        %v897 = vrcp.pop 32.0
        %v898 = vmul.f32 32.0, %v897
        %v899 = vsub.f32 1.0, %v898
        %v900 = vmul.f32 %v897, %v899
        %v901 = vadd.f32 %v897, %v900
        %vm902 = vweird.f32 %v897
        %v903 = vsel %vm902, %v897, %v901
        %v904 = vmul.f32 %v896, %v903
        %v905 = vsub.f32 %v893, %v904
        %v906 = vmul.f32 %v905, %v905
        %v907 = vsel %vm521, %v906, 0.0
        %908 = vadd.xlane.f32.xlu0 %v907
        %v909 = vpop.xlane.xlu0 %908
        %v910 = vmul.f32 %v909, %v903
        %v911 = vadd.f32 %v910, 1e-05
        %v912 = vrsqrt.pop %v911
        %v913 = vmul.f32 %v912, %v911
        %v914 = vmul.f32 %v913, %v912
        %v915 = vmul.f32 0.5, %v914
        %v916 = vsub.f32 1.5, %v915
        %v917 = vmul.f32 %v912, %v916
        %vm918 = vweird.f32 %v911
        %vm919 = vweird.f32 %v912
        %vm920 = vmor %vm918, %vm919
        %v921 = vsel %vm920, %v912, %v917
        %v922 = vmul.f32 %v905, %v921
        %v924 = vperm.slane %v546, 0
        %v926 = vmul.f32 %v922, %v924
        %v928 = vperm.slane %v547, 0
        %v930 = vadd.f32 %v926, %v928
        %v931 = vpack.c.bf16 %v930, %v930
        %v933 = vperm.slane %v544, 0
        %v939 = vunpack.c.l.b16 %v550
        %v940 = vunpack.c.l.b16 %v551
        %v941 = vunpack.c.l.b16 %v552
        %v942 = vunpack.c.l.b16 %v553
        %v943 = vpack.c.b16 %v940, %v939
        %v944 = vpack.c.b16 %v942, %v941
        %v948 = vsel %vm521, %v931, 0
        %950 = vmatpush.bf16.msra.mxu0 0
        %951 = vmatpush.bf16.msra.mxu0 0
        %952 = vmatpush.bf16.msra.mxu0 0
        %953 = vmatpush.bf16.msra.mxu0 0
        %954 = vmatpush.bf16.msra.mxu0 0
        %955 = vmatpush.bf16.msra.mxu0 0
        %956 = vmatpush.bf16.msra.mxu0 %v944
        %957 = vmatpush.bf16.msra.mxu0 %v943
        %958 = vmatmul.bf16.gmra.mxu0 %v948
        %v959 = vpop.f32.mrf.mxu0
        %v960 = vadd.f32 %v933, %v959
        %v961 = vpop.f32.mrf.mxu0
        %962 = vdwg.mxu0
        %v963 = vmul.f32 %v960, 0.5
        %v964 = vmul.f32 %v960, 0.044715
        %v965 = vmul.f32 %v964, %v960
        %v966 = vmul.f32 %v965, %v960
        %v967 = vadd.f32 %v960, %v966
        %v968 = vmul.f32 %v967, 0.7978846
        %v969 = vtanh.pop %v968
        %v970 = vadd.f32 %v969, 1.0
        %v971 = vmul.f32 %v963, %v970
        %v972 = vpack.c.bf16 %v971, %v971
        %v974 = vperm.slane %v545, 0
        %v992 = vunpack.c.l.b16 %v554
        %v993 = vunpack.c.l.b16 %v555
        %v994 = vunpack.c.l.b16 %v556
        %v995 = vunpack.c.l.b16 %v557
        %v996 = vunpack.c.l.b16 %v558
        %v997 = vunpack.c.l.b16 %v559
        %v998 = vunpack.c.l.b16 %v560
        %v999 = vunpack.c.l.b16 %v561
        %v1000 = vunpack.c.l.b16 %v562
        %v1001 = vunpack.c.l.b16 %v563
        %v1002 = vunpack.c.l.b16 %v564
        %v1003 = vunpack.c.l.b16 %v565
        %v1004 = vunpack.c.l.b16 %v566
        %v1005 = vunpack.c.l.b16 %v567
        %v1006 = vunpack.c.l.b16 %v568
        %v1007 = vunpack.c.l.b16 %v569
        %v1008 = vpack.c.b16 %v993, %v992
        %v1009 = vpack.c.b16 %v995, %v994
        %v1010 = vpack.c.b16 %v997, %v996
        %v1011 = vpack.c.b16 %v999, %v998
        %v1012 = vpack.c.b16 %v1001, %v1000
        %v1013 = vpack.c.b16 %v1003, %v1002
        %v1014 = vpack.c.b16 %v1005, %v1004
        %v1015 = vpack.c.b16 %v1007, %v1006
        %1024 = vmatpush.bf16.msra.mxu0 %v1015
        %1025 = vmatpush.bf16.msra.mxu0 %v1014
        %1026 = vmatpush.bf16.msra.mxu0 %v1013
        %1027 = vmatpush.bf16.msra.mxu0 %v1012
        %1028 = vmatpush.bf16.msra.mxu0 %v1011
        %1029 = vmatpush.bf16.msra.mxu0 %v1010
        %1030 = vmatpush.bf16.msra.mxu0 %v1009
        %1031 = vmatpush.bf16.msra.mxu0 %v1008
        %1032 = vmatmul.bf16.gmra.mxu0 %v972
        %v1033 = vpop.f32.mrf.mxu0
        %v1034 = vadd.f32 %v974, %v1033
        %v1035 = vpop.f32.mrf.mxu0
        %1036 = vdwg.mxu0
        %v1037 = vadd.f32 %v930, %v1034
        %v1038 = vsel %vm521, %v1037, 0.0
        %1039 = vadd.xlane.f32.xlu0 %v1038
        %v1040 = vpop.xlane.xlu0 %1039
        %v1041 = vmul.f32 %v1040, %v903
        %v1042 = vsub.f32 %v1037, %v1041
        %v1043 = vmul.f32 %v1042, %v1042
        %v1044 = vsel %vm521, %v1043, 0.0
        %1045 = vadd.xlane.f32.xlu0 %v1044
        %v1046 = vpop.xlane.xlu0 %1045
        %v1047 = vmul.f32 %v1046, %v903
        %v1048 = vadd.f32 %v1047, 1e-05
        %v1049 = vrsqrt.pop %v1048
        %v1050 = vmul.f32 %v1049, %v1048
        %v1051 = vmul.f32 %v1050, %v1049
        %v1052 = vmul.f32 0.5, %v1051
        %v1053 = vsub.f32 1.5, %v1052
        %v1054 = vmul.f32 %v1049, %v1053
        %vm1055 = vweird.f32 %v1048
        %vm1056 = vweird.f32 %v1049
        %vm1057 = vmor %vm1055, %vm1056
        %v1058 = vsel %vm1057, %v1049, %v1054
        %v1059 = vmul.f32 %v1042, %v1058
        %v1061 = vperm.slane %v548, 0
        %v1063 = vmul.f32 %v1059, %v1061
        %v1065 = vperm.slane %v549, 0
        %v1067 = vadd.f32 %v1063, %v1065
        %v1068 = vpack.c.bf16 %v1067, %v1067
        %vm1069 = vcmask 257024
        %1070 = vst.msk [vmem:[%s498] sm:$0xf] %vm1069, %v1068
        %p1071 = scmp.lt.s32.totalorder %s27, 1
        %s1072 = scalar_select %p1071, %s27, 1
        %s1073 = smul.addr %s1072, 4
        %s1074 = scalar_lea.vmem %s13, %s1073
        // Predicated region
        $region89: #{_lambda_.4} parent=71 // pred_check
          %p1075 = pneg %p323
        $region90: #{_lambda_.4} parent=71 // pred_check_branch
          %1077 = sbr.rel (%p1075) target = $region92
        $region91: #{_lambda_.4} parent=71 // pred_region
          _
        $region92: #{_lambda_.4} parent=71 // pred_fallthru
          _
      $region72: #{_lambda_.4} parent=5 // pred_fallthru
        _
      %p1078 = scmp.le.s32.totalorder 2, %s22
      // Predicated region
      $region93: #{_lambda_.4} parent=5 // pred_check
        %p1079 = pneg %p1078
      $region94: #{_lambda_.4} parent=5 // pred_check_branch
        %1081 = sbr.rel (%p1079) target = $region96
      $region95: #{_lambda_.4} parent=5 // pred_region
        %s1082 = ssub.s32 %s22, 2
        // Predicated region
        $region97: #{_lambda_.4} parent=95 // pred_check
          %p1083 = pneg %p329
        $region98: #{_lambda_.4} parent=95 // pred_check_branch
          %1085 = sbr.rel (%p1083) target = $region100
        $region99: #{_lambda_.4} parent=95 // pred_region
          %p1086 = scmp.lt.s32.totalorder %s28, 1
          %s1087 = scalar_select %p1086, %s28, 1
          %s1088 = smul.addr %s1087, 4
          %s1089 = scalar_lea.vmem %s13, %s1088
        $region100: #{_lambda_.4} parent=95 // pred_fallthru
          _
      $region96: #{_lambda_.4} parent=5 // pred_fallthru
        _
    $region6: #{_lambda_.4} parent=1 // loop_footer
      %s26 = sadd.s32 1, %s22
    $region7: #{_lambda_.4} parent=1 // loop_footer_branch
      %21 = sbr.rel target = $region3
    $region8: #{_lambda_.4} parent=1 // loop_exit
      _
    %1090 = vsyncpa [#allocation3], 1
    %s1091 = scalar_lea.sflag [#allocation3], 1
    %1092 = vsyncpa %s1091, 1
    %1093 = vsyncpa [#allocation5], 1
    %1094 = vsyncpa [#allocation8], 1

// kernel: _lambda_.3
$region0: #{_lambda_.3}
  #allocation0 [shape = 'u32[]', space=smem, size = 0x4, offset = 0x4, fixed_abs, tag = 'smem constant byte address 0x4 - core index']
  #allocation1 [shape = 'u32[72,128]{1,0:T(1,128)}', space=vmem, size = 0x9000, scoped, tag = 'internal scratch']
  %s0 = inlined_call_operand.vmem [shape: bf16[2,8,32], index: 0, kind: input, shape index: {}]
  %s1 = inlined_call_operand.vmem [shape: bf16[32,96], index: 1, kind: input, shape index: {}]
  %s2 = inlined_call_operand.vmem [shape: f32[1,96], index: 2, kind: input, shape index: {}]
  %s3 = inlined_call_operand.vmem [shape: bf16[32,32], index: 3, kind: input, shape index: {}]
  %s4 = inlined_call_operand.vmem [shape: f32[1,32], index: 4, kind: input, shape index: {}]
  %s5 = inlined_call_operand.vmem [shape: f32[1,32], index: 5, kind: input, shape index: {}, may-alias: {5,11}]
  %s6 = inlined_call_operand.vmem [shape: f32[1,32], index: 6, kind: input, shape index: {}, may-alias: {6,12}]
  %s7 = inlined_call_operand.hbm [shape: bf16[32,128], index: 7, kind: input, shape index: {}]
  %s8 = inlined_call_operand.vmem [shape: f32[1,128], index: 8, kind: input, shape index: {}]
  %s9 = inlined_call_operand.vmem [shape: bf16[128,32], index: 9, kind: input, shape index: {}]
  %s10 = inlined_call_operand.vmem [shape: f32[1,32], index: 10, kind: input, shape index: {}]
  %s11 = inlined_call_operand.vmem [shape: f32[1,32], index: 11, kind: input, shape index: {}, may-alias: {5,11}]
  %s12 = inlined_call_operand.vmem [shape: f32[1,32], index: 12, kind: input, shape index: {}, may-alias: {6,12}]
  %s13 = inlined_call_operand.vmem [shape: bf16[2,8,32], index: 13, kind: output, shape index: {}]
  %s14 = sld [smem:[#allocation0]]
  $region89: #{_lambda_.3} parent=0
    _
  %s16 = ssub.s32 1, %s14
  %s17 = scalar_select 0, %s16, %s14
  $region1: #{_lambda_.3} parent=0
    #allocation2 [shape = 'u8[8192]{0}', space=vmem, size = 0x2000, scoped, tag = 'input window, operand 7, single buffered']
    #allocation3 [shape = 's32[2]{0}', space=sflag, size = 0x8, scoped, tag = 'scoped memory for _lambda_.3']
    %18 = vsyncpa [#allocation3], 0
    loop: start=0, step=1, limit=4
    $region2: #{_lambda_.3} parent=1 // loop_pre_header
      _
    $region3: #{_lambda_.3} parent=1 // loop_header
      %s20 = sphi 0, %s24
      %p21 = scmp.ge.s32.totalorder %s20, 4
      %s30 = sphi 0, %s32
      %s33 = sphi 0, %s30
      %s34 = sphi 0, %s33
      %s50 = sphi 0, %s34
      %s54 = sphi 0, %s54
      %s56 = sphi 0, %s54
      %s57 = sphi 0, %s56
      %s71 = sphi 0, %s57
      %s75 = sphi 0, %s75
      %s77 = sphi 0, %s75
      %s78 = sphi 0, %s77
      %s92 = sphi 0, %s78
      %s96 = sphi 0, %s96
      %s98 = sphi 0, %s96
      %s99 = sphi 0, %s98
      %s113 = sphi 0, %s99
      %s117 = sphi 0, %s117
      %s119 = sphi 0, %s117
      %s120 = sphi 0, %s119
      %s134 = sphi 0, %s120
      %s138 = sphi 0, %s138
      %s140 = sphi 0, %s138
      %s141 = sphi 0, %s140
      %s155 = sphi 0, %s141
      %s159 = sphi 0, %s159
      %s161 = sphi 0, %s159
      %s162 = sphi 0, %s161
      %s176 = sphi 0, %s162
      %s180 = sphi 0, %s180
      %s182 = sphi 0, %s180
      %s183 = sphi 0, %s182
      %s197 = sphi 0, %s183
      %s201 = sphi 0, %s201
      %s203 = sphi 0, %s201
      %s204 = sphi 0, %s203
      %s218 = sphi 0, %s204
      %s222 = sphi 0, %s222
      %s224 = sphi 0, %s222
      %s225 = sphi 0, %s224
      %s239 = sphi 0, %s225
      %s243 = sphi 0, %s243
      %s245 = sphi 0, %s243
      %s246 = sphi 0, %s245
      %s260 = sphi 0, %s246
      %s264 = sphi 0, %s264
      %s266 = sphi 0, %s264
      %s267 = sphi 0, %s266
      %s281 = sphi 0, %s267
      %s285 = sphi 0, %s285
      %s287 = sphi 0, %s285
      %s288 = sphi 0, %s287
      %s302 = sphi 0, %s288
      %s308 = sphi 0, %s310
      %s311 = sphi 0, %s308
      %s312 = sphi 0, %s311
      %s328 = sphi 0, %s312
    $region4: #{_lambda_.3} parent=1 // loop_header_branch
      %23 = sbr.rel (%p21) target = $region8
    $region5: #{_lambda_.3} parent=1 // loop_body
      %s25 = ssub.s32 %s20, 1
      %s26 = ssub.s32 %s20, 2
      %s27 = sadd.s32 %s20, 1
      %s28 = ssub.s32 %s20, %s27
      %p29 = scmp.eq.s32.totalorder %s28, 0
      %s31 = sadd.s32 %s30, 1
      %s32 = scalar_select %p29, %s30, %s31
      %p35 = pneg %p29
      %p36 = scmp.eq.s32.totalorder %s20, 1
      %p37 = por %p35, %p36
      %p38 = scmp.ne.s32.totalorder %s30, %s33
      %p39 = scmp.eq.s32.totalorder %s20, 0
      %p40 = por %p38, %p39
      %p41 = scmp.ne.s32.totalorder %s30, %s33
      %p42 = scmp.eq.s32.totalorder %s25, 1
      %p43 = por %p41, %p42
      %p44 = scmp.ne.s32.totalorder %s33, %s34
      %p45 = scmp.eq.s32.totalorder %s25, 0
      %p46 = por %p44, %p45
      %p47 = scmp.ne.s32.totalorder %s33, %s34
      %p48 = scmp.eq.s32.totalorder %s26, 1
      %p49 = por %p47, %p48
      %p51 = scmp.ne.s32.totalorder %s34, %s50
      %p52 = scmp.eq.s32.totalorder %s26, 0
      %p53 = por %p51, %p52
      %s55 = sadd.s32 %s54, 1
      %p58 = scmp.eq.s32.totalorder %s20, 1
      %p59 = scmp.ne.s32.totalorder %s54, %s56
      %p60 = scmp.eq.s32.totalorder %s20, 0
      %p61 = por %p59, %p60
      %p62 = scmp.ne.s32.totalorder %s54, %s56
      %p63 = scmp.eq.s32.totalorder %s25, 1
      %p64 = por %p62, %p63
      %p65 = scmp.ne.s32.totalorder %s56, %s57
      %p66 = scmp.eq.s32.totalorder %s25, 0
      %p67 = por %p65, %p66
      %p68 = scmp.ne.s32.totalorder %s56, %s57
      %p69 = scmp.eq.s32.totalorder %s26, 1
      %p70 = por %p68, %p69
      %p72 = scmp.ne.s32.totalorder %s57, %s71
      %p73 = scmp.eq.s32.totalorder %s26, 0
      %p74 = por %p72, %p73
      %s76 = sadd.s32 %s75, 1
      %p79 = scmp.eq.s32.totalorder %s20, 1
      %p80 = scmp.ne.s32.totalorder %s75, %s77
      %p81 = scmp.eq.s32.totalorder %s20, 0
      %p82 = por %p80, %p81
      %p83 = scmp.ne.s32.totalorder %s75, %s77
      %p84 = scmp.eq.s32.totalorder %s25, 1
      %p85 = por %p83, %p84
      %p86 = scmp.ne.s32.totalorder %s77, %s78
      %p87 = scmp.eq.s32.totalorder %s25, 0
      %p88 = por %p86, %p87
      %p89 = scmp.ne.s32.totalorder %s77, %s78
      %p90 = scmp.eq.s32.totalorder %s26, 1
      %p91 = por %p89, %p90
      %p93 = scmp.ne.s32.totalorder %s78, %s92
      %p94 = scmp.eq.s32.totalorder %s26, 0
      %p95 = por %p93, %p94
      %s97 = sadd.s32 %s96, 1
      %p100 = scmp.eq.s32.totalorder %s20, 1
      %p101 = scmp.ne.s32.totalorder %s96, %s98
      %p102 = scmp.eq.s32.totalorder %s20, 0
      %p103 = por %p101, %p102
      %p104 = scmp.ne.s32.totalorder %s96, %s98
      %p105 = scmp.eq.s32.totalorder %s25, 1
      %p106 = por %p104, %p105
      %p107 = scmp.ne.s32.totalorder %s98, %s99
      %p108 = scmp.eq.s32.totalorder %s25, 0
      %p109 = por %p107, %p108
      %p110 = scmp.ne.s32.totalorder %s98, %s99
      %p111 = scmp.eq.s32.totalorder %s26, 1
      %p112 = por %p110, %p111
      %p114 = scmp.ne.s32.totalorder %s99, %s113
      %p115 = scmp.eq.s32.totalorder %s26, 0
      %p116 = por %p114, %p115
      %s118 = sadd.s32 %s117, 1
      %p121 = scmp.eq.s32.totalorder %s20, 1
      %p122 = scmp.ne.s32.totalorder %s117, %s119
      %p123 = scmp.eq.s32.totalorder %s20, 0
      %p124 = por %p122, %p123
      %p125 = scmp.ne.s32.totalorder %s117, %s119
      %p126 = scmp.eq.s32.totalorder %s25, 1
      %p127 = por %p125, %p126
      %p128 = scmp.ne.s32.totalorder %s119, %s120
      %p129 = scmp.eq.s32.totalorder %s25, 0
      %p130 = por %p128, %p129
      %p131 = scmp.ne.s32.totalorder %s119, %s120
      %p132 = scmp.eq.s32.totalorder %s26, 1
      %p133 = por %p131, %p132
      %p135 = scmp.ne.s32.totalorder %s120, %s134
      %p136 = scmp.eq.s32.totalorder %s26, 0
      %p137 = por %p135, %p136
      %s139 = sadd.s32 %s138, 1
      %p142 = scmp.eq.s32.totalorder %s20, 1
      %p143 = scmp.ne.s32.totalorder %s138, %s140
      %p144 = scmp.eq.s32.totalorder %s20, 0
      %p145 = por %p143, %p144
      %p146 = scmp.ne.s32.totalorder %s138, %s140
      %p147 = scmp.eq.s32.totalorder %s25, 1
      %p148 = por %p146, %p147
      %p149 = scmp.ne.s32.totalorder %s140, %s141
      %p150 = scmp.eq.s32.totalorder %s25, 0
      %p151 = por %p149, %p150
      %p152 = scmp.ne.s32.totalorder %s140, %s141
      %p153 = scmp.eq.s32.totalorder %s26, 1
      %p154 = por %p152, %p153
      %p156 = scmp.ne.s32.totalorder %s141, %s155
      %p157 = scmp.eq.s32.totalorder %s26, 0
      %p158 = por %p156, %p157
      %s160 = sadd.s32 %s159, 1
      %p163 = scmp.eq.s32.totalorder %s20, 1
      %p164 = scmp.ne.s32.totalorder %s159, %s161
      %p165 = scmp.eq.s32.totalorder %s20, 0
      %p166 = por %p164, %p165
      %p167 = scmp.ne.s32.totalorder %s159, %s161
      %p168 = scmp.eq.s32.totalorder %s25, 1
      %p169 = por %p167, %p168
      %p170 = scmp.ne.s32.totalorder %s161, %s162
      %p171 = scmp.eq.s32.totalorder %s25, 0
      %p172 = por %p170, %p171
      %p173 = scmp.ne.s32.totalorder %s161, %s162
      %p174 = scmp.eq.s32.totalorder %s26, 1
      %p175 = por %p173, %p174
      %p177 = scmp.ne.s32.totalorder %s162, %s176
      %p178 = scmp.eq.s32.totalorder %s26, 0
      %p179 = por %p177, %p178
      %s181 = sadd.s32 %s180, 1
      %p184 = scmp.eq.s32.totalorder %s20, 1
      %p185 = scmp.ne.s32.totalorder %s180, %s182
      %p186 = scmp.eq.s32.totalorder %s20, 0
      %p187 = por %p185, %p186
      %p188 = scmp.ne.s32.totalorder %s180, %s182
      %p189 = scmp.eq.s32.totalorder %s25, 1
      %p190 = por %p188, %p189
      %p191 = scmp.ne.s32.totalorder %s182, %s183
      %p192 = scmp.eq.s32.totalorder %s25, 0
      %p193 = por %p191, %p192
      %p194 = scmp.ne.s32.totalorder %s182, %s183
      %p195 = scmp.eq.s32.totalorder %s26, 1
      %p196 = por %p194, %p195
      %p198 = scmp.ne.s32.totalorder %s183, %s197
      %p199 = scmp.eq.s32.totalorder %s26, 0
      %p200 = por %p198, %p199
      %s202 = sadd.s32 %s201, 1
      %p205 = scmp.eq.s32.totalorder %s20, 1
      %p206 = scmp.ne.s32.totalorder %s201, %s203
      %p207 = scmp.eq.s32.totalorder %s20, 0
      %p208 = por %p206, %p207
      %p209 = scmp.ne.s32.totalorder %s201, %s203
      %p210 = scmp.eq.s32.totalorder %s25, 1
      %p211 = por %p209, %p210
      %p212 = scmp.ne.s32.totalorder %s203, %s204
      %p213 = scmp.eq.s32.totalorder %s25, 0
      %p214 = por %p212, %p213
      %p215 = scmp.ne.s32.totalorder %s203, %s204
      %p216 = scmp.eq.s32.totalorder %s26, 1
      %p217 = por %p215, %p216
      %p219 = scmp.ne.s32.totalorder %s204, %s218
      %p220 = scmp.eq.s32.totalorder %s26, 0
      %p221 = por %p219, %p220
      %s223 = sadd.s32 %s222, 1
      %p226 = scmp.eq.s32.totalorder %s20, 1
      %p227 = scmp.ne.s32.totalorder %s222, %s224
      %p228 = scmp.eq.s32.totalorder %s20, 0
      %p229 = por %p227, %p228
      %p230 = scmp.ne.s32.totalorder %s222, %s224
      %p231 = scmp.eq.s32.totalorder %s25, 1
      %p232 = por %p230, %p231
      %p233 = scmp.ne.s32.totalorder %s224, %s225
      %p234 = scmp.eq.s32.totalorder %s25, 0
      %p235 = por %p233, %p234
      %p236 = scmp.ne.s32.totalorder %s224, %s225
      %p237 = scmp.eq.s32.totalorder %s26, 1
      %p238 = por %p236, %p237
      %p240 = scmp.ne.s32.totalorder %s225, %s239
      %p241 = scmp.eq.s32.totalorder %s26, 0
      %p242 = por %p240, %p241
      %s244 = sadd.s32 %s243, 1
      %p247 = scmp.eq.s32.totalorder %s20, 1
      %p248 = scmp.ne.s32.totalorder %s243, %s245
      %p249 = scmp.eq.s32.totalorder %s20, 0
      %p250 = por %p248, %p249
      %p251 = scmp.ne.s32.totalorder %s243, %s245
      %p252 = scmp.eq.s32.totalorder %s25, 1
      %p253 = por %p251, %p252
      %p254 = scmp.ne.s32.totalorder %s245, %s246
      %p255 = scmp.eq.s32.totalorder %s25, 0
      %p256 = por %p254, %p255
      %p257 = scmp.ne.s32.totalorder %s245, %s246
      %p258 = scmp.eq.s32.totalorder %s26, 1
      %p259 = por %p257, %p258
      %p261 = scmp.ne.s32.totalorder %s246, %s260
      %p262 = scmp.eq.s32.totalorder %s26, 0
      %p263 = por %p261, %p262
      %s265 = sadd.s32 %s264, 1
      %p268 = scmp.eq.s32.totalorder %s20, 1
      %p269 = scmp.ne.s32.totalorder %s264, %s266
      %p270 = scmp.eq.s32.totalorder %s20, 0
      %p271 = por %p269, %p270
      %p272 = scmp.ne.s32.totalorder %s264, %s266
      %p273 = scmp.eq.s32.totalorder %s25, 1
      %p274 = por %p272, %p273
      %p275 = scmp.ne.s32.totalorder %s266, %s267
      %p276 = scmp.eq.s32.totalorder %s25, 0
      %p277 = por %p275, %p276
      %p278 = scmp.ne.s32.totalorder %s266, %s267
      %p279 = scmp.eq.s32.totalorder %s26, 1
      %p280 = por %p278, %p279
      %p282 = scmp.ne.s32.totalorder %s267, %s281
      %p283 = scmp.eq.s32.totalorder %s26, 0
      %p284 = por %p282, %p283
      %s286 = sadd.s32 %s285, 1
      %p289 = scmp.eq.s32.totalorder %s20, 1
      %p290 = scmp.ne.s32.totalorder %s285, %s287
      %p291 = scmp.eq.s32.totalorder %s20, 0
      %p292 = por %p290, %p291
      %p293 = scmp.ne.s32.totalorder %s285, %s287
      %p294 = scmp.eq.s32.totalorder %s25, 1
      %p295 = por %p293, %p294
      %p296 = scmp.ne.s32.totalorder %s287, %s288
      %p297 = scmp.eq.s32.totalorder %s25, 0
      %p298 = por %p296, %p297
      %p299 = scmp.ne.s32.totalorder %s287, %s288
      %p300 = scmp.eq.s32.totalorder %s26, 1
      %p301 = por %p299, %p300
      %p303 = scmp.ne.s32.totalorder %s288, %s302
      %p304 = scmp.eq.s32.totalorder %s26, 0
      %p305 = por %p303, %p304
      %s306 = ssub.s32 %s20, %s27
      %p307 = scmp.eq.s32.totalorder %s306, 0
      %s309 = sadd.s32 %s308, 1
      %s310 = scalar_select %p307, %s308, %s309
      %p313 = pneg %p307
      %p314 = scmp.eq.s32.totalorder %s20, 1
      %p315 = por %p313, %p314
      %p316 = scmp.ne.s32.totalorder %s308, %s311
      %p317 = scmp.eq.s32.totalorder %s20, 0
      %p318 = por %p316, %p317
      %p319 = scmp.ne.s32.totalorder %s308, %s311
      %p320 = scmp.eq.s32.totalorder %s25, 1
      %p321 = por %p319, %p320
      %p322 = scmp.ne.s32.totalorder %s311, %s312
      %p323 = scmp.eq.s32.totalorder %s25, 0
      %p324 = por %p322, %p323
      %p325 = scmp.ne.s32.totalorder %s311, %s312
      %p326 = scmp.eq.s32.totalorder %s26, 1
      %p327 = por %p325, %p326
      %p329 = scmp.ne.s32.totalorder %s312, %s328
      %p330 = scmp.eq.s32.totalorder %s26, 0
      %p331 = por %p329, %p330
      %p332 = scmp.le.s32.totalorder 1, %s20
      %p333 = scmp.lt.s32.totalorder %s20, 3
      %p334 = pnand %p332, %p333
      %p335 = pneg %p334
      // Predicated region
      $region9: #{_lambda_.3} parent=5 // pred_check
        _
      $region10: #{_lambda_.3} parent=5 // pred_check_branch
        %337 = sbr.rel (%p334) target = $region12
      $region11: #{_lambda_.3} parent=5 // pred_region
        %s338 = ssub.s32 %s20, 1
        // Predicated region
        $region13: #{_lambda_.3} parent=11 // pred_check
          %p339 = pneg %p67
        $region14: #{_lambda_.3} parent=11 // pred_check_branch
          %341 = sbr.rel (%p339) target = $region16
        $region15: #{_lambda_.3} parent=11 // pred_region
          _
        $region16: #{_lambda_.3} parent=11 // pred_fallthru
          _
        // Predicated region
        $region17: #{_lambda_.3} parent=11 // pred_check
          %p342 = pneg %p88
        $region18: #{_lambda_.3} parent=11 // pred_check_branch
          %344 = sbr.rel (%p342) target = $region20
        $region19: #{_lambda_.3} parent=11 // pred_region
          _
        $region20: #{_lambda_.3} parent=11 // pred_fallthru
          _
        // Predicated region
        $region21: #{_lambda_.3} parent=11 // pred_check
          %p345 = pneg %p109
        $region22: #{_lambda_.3} parent=11 // pred_check_branch
          %347 = sbr.rel (%p345) target = $region24
        $region23: #{_lambda_.3} parent=11 // pred_region
          _
        $region24: #{_lambda_.3} parent=11 // pred_fallthru
          _
        // Predicated region
        $region25: #{_lambda_.3} parent=11 // pred_check
          %p348 = pneg %p130
        $region26: #{_lambda_.3} parent=11 // pred_check_branch
          %350 = sbr.rel (%p348) target = $region28
        $region27: #{_lambda_.3} parent=11 // pred_region
          _
        $region28: #{_lambda_.3} parent=11 // pred_fallthru
          _
        // Predicated region
        $region29: #{_lambda_.3} parent=11 // pred_check
          %p351 = pneg %p151
        $region30: #{_lambda_.3} parent=11 // pred_check_branch
          %353 = sbr.rel (%p351) target = $region32
        $region31: #{_lambda_.3} parent=11 // pred_region
          _
        $region32: #{_lambda_.3} parent=11 // pred_fallthru
          _
        // Predicated region
        $region33: #{_lambda_.3} parent=11 // pred_check
          %p354 = pneg %p172
        $region34: #{_lambda_.3} parent=11 // pred_check_branch
          %356 = sbr.rel (%p354) target = $region36
        $region35: #{_lambda_.3} parent=11 // pred_region
          _
        $region36: #{_lambda_.3} parent=11 // pred_fallthru
          _
        // Predicated region
        $region37: #{_lambda_.3} parent=11 // pred_check
          %p357 = pneg %p193
        $region38: #{_lambda_.3} parent=11 // pred_check_branch
          %359 = sbr.rel (%p357) target = $region40
        $region39: #{_lambda_.3} parent=11 // pred_region
          %361 = vsyncadd [#allocation3], 0
          %s362 = sshll.u32 %s7, 4
          %s363 = int_to_ptr.hbm [resolvable:$true] %s362
          %s364 = sshll.u32 [#allocation2], 4
          %s365 = int_to_ptr.vmem [resolvable:$true] %s364
          %370 = dma.hbm_to_vmem [thread:$0]  %s363, 256, %s365, [#allocation3], 64, 64, 4
        $region40: #{_lambda_.3} parent=11 // pred_fallthru
          _
        // Predicated region
        $region41: #{_lambda_.3} parent=11 // pred_check
          %p371 = pneg %p214
        $region42: #{_lambda_.3} parent=11 // pred_check_branch
          %373 = sbr.rel (%p371) target = $region44
        $region43: #{_lambda_.3} parent=11 // pred_region
          _
        $region44: #{_lambda_.3} parent=11 // pred_fallthru
          _
        // Predicated region
        $region45: #{_lambda_.3} parent=11 // pred_check
          %p374 = pneg %p235
        $region46: #{_lambda_.3} parent=11 // pred_check_branch
          %376 = sbr.rel (%p374) target = $region48
        $region47: #{_lambda_.3} parent=11 // pred_region
          _
        $region48: #{_lambda_.3} parent=11 // pred_fallthru
          _
        // Predicated region
        $region49: #{_lambda_.3} parent=11 // pred_check
          %p377 = pneg %p256
        $region50: #{_lambda_.3} parent=11 // pred_check_branch
          %379 = sbr.rel (%p377) target = $region52
        $region51: #{_lambda_.3} parent=11 // pred_region
          _
        $region52: #{_lambda_.3} parent=11 // pred_fallthru
          _
        // Predicated region
        $region53: #{_lambda_.3} parent=11 // pred_check
          %p380 = pneg %p277
        $region54: #{_lambda_.3} parent=11 // pred_check_branch
          %382 = sbr.rel (%p380) target = $region56
        $region55: #{_lambda_.3} parent=11 // pred_region
          _
        $region56: #{_lambda_.3} parent=11 // pred_fallthru
          _
        // Predicated region
        $region57: #{_lambda_.3} parent=11 // pred_check
          %p383 = pneg %p298
        $region58: #{_lambda_.3} parent=11 // pred_check_branch
          %385 = sbr.rel (%p383) target = $region60
        $region59: #{_lambda_.3} parent=11 // pred_region
          _
        $region60: #{_lambda_.3} parent=11 // pred_fallthru
          _
      $region12: #{_lambda_.3} parent=5 // pred_fallthru
        _
      %p386 = scmp.lt.s32.totalorder %s20, 2
      // Predicated region
      $region61: #{_lambda_.3} parent=5 // pred_check
        %p387 = pneg %p386
      $region62: #{_lambda_.3} parent=5 // pred_check_branch
        %389 = sbr.rel (%p387) target = $region64
      $region63: #{_lambda_.3} parent=5 // pred_region
        // Predicated region
        $region65: #{_lambda_.3} parent=63 // pred_check
          %p390 = pneg %p40
        $region66: #{_lambda_.3} parent=63 // pred_check_branch
          %392 = sbr.rel (%p390) target = $region68
        $region67: #{_lambda_.3} parent=63 // pred_region
          %p393 = scmp.lt.s32.totalorder %s20, 1
          %s394 = scalar_select %p393, %s20, 1
          %s395 = smul.addr %s394, 4
          %s396 = scalar_lea.vmem %s0, %s395
        $region68: #{_lambda_.3} parent=63 // pred_fallthru
          _
      $region64: #{_lambda_.3} parent=5 // pred_fallthru
        _
      %p397 = scmp.le.s32.totalorder 1, %s20
      %p398 = scmp.lt.s32.totalorder %s20, 3
      %p399 = pnand %p397, %p398
      %p400 = pneg %p399
      // Predicated region
      $region69: #{_lambda_.3} parent=5 // pred_check
        _
      $region70: #{_lambda_.3} parent=5 // pred_check_branch
        %402 = sbr.rel (%p399) target = $region72
      $region71: #{_lambda_.3} parent=5 // pred_region
        %s403 = ssub.s32 %s20, 1
        // Predicated region
        $region73: #{_lambda_.3} parent=71 // pred_check
          %p404 = pneg %p193
        $region74: #{_lambda_.3} parent=71 // pred_check_branch
          %406 = sbr.rel (%p404) target = $region76
        $region75: #{_lambda_.3} parent=71 // pred_region
          %408 = dma.done [#allocation3], 256
        $region76: #{_lambda_.3} parent=71 // pred_fallthru
          _
        %p409 = scmp.lt.s32.totalorder %s25, 1
        %s410 = scalar_select %p409, %s25, 1
        %s411 = smul.addr %s410, 4
        %s412 = scalar_lea.vmem %s0, %s411
        %p413 = pneg %p46
        %p414 = pneg %p43
        %p415 = pneg %p67
        %p416 = pneg %p64
        %p417 = pneg %p88
        %p418 = pneg %p85
        %p419 = pneg %p109
        %p420 = pneg %p106
        %p421 = pneg %p130
        %p422 = pneg %p127
        %p423 = pneg %p151
        %p424 = pneg %p148
        %p425 = pneg %p172
        %p426 = pneg %p169
        %p427 = pneg %p193
        %p428 = pneg %p190
        %p429 = pneg %p214
        %p430 = pneg %p211
        %p431 = pneg %p235
        %p432 = pneg %p232
        %p433 = pneg %p256
        %p434 = pneg %p253
        %p435 = pneg %p277
        %p436 = pneg %p274
        %p437 = pneg %p298
        %p438 = pneg %p295
        %p439 = pneg %p324
        %p440 = pneg %p321
        %p441 = scmp.lt.s32.totalorder %s25, 1
        %s442 = scalar_select %p441, %s25, 1
        %s443 = smul.addr %s442, 4
        %s444 = scalar_lea.vmem %s13, %s443
        %p445 = scmp.lt.s32.totalorder %s25, 1
        %s446 = scalar_select %p445, %s25, 1
        %s447 = smul.addr %s446, 4
        %s448 = scalar_lea.vmem %s0, %s447
        %p449 = scmp.lt.s32.totalorder %s25, 1
        %s450 = scalar_select %p449, %s25, 1
        %s451 = smul.addr %s450, 4
        %s452 = scalar_lea.vmem %s13, %s451
        %v454 = vld [vmem:[%s448] sm:$0xf]
        %v455 = vld [vmem:[%s1] sm:$0xf]
        %v456 = vld [vmem:[%s1 + $0x4] sm:$0xf]
        %v457 = vld [vmem:[%s1 + $0x8] sm:$0xf]
        %v458 = vld [vmem:[%s1 + $0xc] sm:$0xf]
        %v459 = vld [vmem:[%s2] sm:$0x1]
        %v461 = vperm.slane %v459, 0
        %v467 = vunpack.c.l.b16 %v455
        %v468 = vunpack.c.l.b16 %v456
        %v469 = vunpack.c.l.b16 %v457
        %v470 = vunpack.c.l.b16 %v458
        %v471 = vpack.c.b16 %v468, %v467
        %v472 = vpack.c.b16 %v470, %v469
        %vm475 = vcmask 261120
        %v477 = vsel %vm475, %v454, 0
        %479 = vmatpush.bf16.msra.mxu0 0
        %480 = vmatpush.bf16.msra.mxu0 0
        %481 = vmatpush.bf16.msra.mxu0 0
        %482 = vmatpush.bf16.msra.mxu0 0
        %483 = vmatpush.bf16.msra.mxu0 0
        %484 = vmatpush.bf16.msra.mxu0 0
        %485 = vmatpush.bf16.msra.mxu0 %v472
        %486 = vmatpush.bf16.msra.mxu0 %v471
        %487 = vmatmul.bf16.gmra.mxu0 %v477
        %v488 = vpop.f32.mrf.mxu0
        %v489 = vadd.f32 %v461, %v488
        %v490 = vpop.f32.mrf.mxu0
        %491 = vdwg.mxu0
        %v492 = vpack.c.bf16 %v489, %v489
        %v493 = vld [vmem:[%s3] sm:$0xf]
        %v494 = vld [vmem:[%s3 + $0x4] sm:$0xf]
        %v495 = vld [vmem:[%s3 + $0x8] sm:$0xf]
        %v496 = vld [vmem:[%s3 + $0xc] sm:$0xf]
        %v497 = vld [vmem:[%s4] sm:$0x1]
        %v498 = vld [vmem:[%s8] sm:$0x1]
        %v499 = vld [vmem:[%s10] sm:$0x1]
        %v500 = vld [vmem:[%s5] sm:$0x1]
        %v501 = vld [vmem:[%s6] sm:$0x1]
        %v502 = vld [vmem:[%s11] sm:$0x1]
        %v503 = vld [vmem:[%s12] sm:$0x1]
        %v504 = vld [vmem:[#allocation2] sm:$0xf]
        %v505 = vld [vmem:[#allocation2 + $0x4] sm:$0xf]
        %v506 = vld [vmem:[#allocation2 + $0x8] sm:$0xf]
        %v507 = vld [vmem:[#allocation2 + $0xc] sm:$0xf]
        %v508 = vld [vmem:[%s9] sm:$0xf]
        %v509 = vld [vmem:[%s9 + $0x4] sm:$0xf]
        %v510 = vld [vmem:[%s9 + $0x8] sm:$0xf]
        %v511 = vld [vmem:[%s9 + $0xc] sm:$0xf]
        %v512 = vld [vmem:[%s9 + $0x10] sm:$0xf]
        %v513 = vld [vmem:[%s9 + $0x14] sm:$0xf]
        %v514 = vld [vmem:[%s9 + $0x18] sm:$0xf]
        %v515 = vld [vmem:[%s9 + $0x1c] sm:$0xf]
        %v516 = vld [vmem:[%s9 + $0x20] sm:$0xf]
        %v517 = vld [vmem:[%s9 + $0x24] sm:$0xf]
        %v518 = vld [vmem:[%s9 + $0x28] sm:$0xf]
        %v519 = vld [vmem:[%s9 + $0x2c] sm:$0xf]
        %v520 = vld [vmem:[%s9 + $0x30] sm:$0xf]
        %v521 = vld [vmem:[%s9 + $0x34] sm:$0xf]
        %v522 = vld [vmem:[%s9 + $0x38] sm:$0xf]
        %v523 = vld [vmem:[%s9 + $0x3c] sm:$0xf]
        %v524 = vlaneseq
        %v525 = vshrl.u32 %v524, 7
        %v526 = vlaneseq
        %v527 = vand.u32 %v526, 127
        %vm528 = vcmp.le.s32.totalorder %v527, %v525
        %v530 = vunpack.c.l.b16 %v492
        %v531 = vpack.c.b16 %v530, %v530
        %532 = vrot.lane.b32.xlu0 %v531, 96
        %v533 = vpop.permute.xlu0 %532
        %vm534 = vcmask 64512
        %v536 = vsel %vm534, %v492, 0
        %v539 = vsel %vm534, %v533, 0
        %541 = vmatpush.bf16.xpose.msra.mxu0 0
        %542 = vmatpush.bf16.xpose.msra.mxu0 0
        %543 = vmatpush.bf16.xpose.msra.mxu0 0
        %544 = vmatpush.bf16.xpose.msra.mxu0 0
        %545 = vmatpush.bf16.xpose.msra.mxu0 0
        %546 = vmatpush.bf16.xpose.msra.mxu0 0
        %547 = vmatpush.bf16.xpose.msra.mxu0 0
        %548 = vmatpush.bf16.xpose.msra.mxu0 %v539
        %549 = vmatmul.bf16.gmra.mxu0 %v536
        %v550 = vpop.f32.mrf.mxu0
        %v551 = vadd.f32 0.0, %v550
        %v552 = vpop.f32.mrf.mxu0
        %553 = vdwg.mxu0
        %v554 = vsel %vm528, %v551, -1e+30
        %v555 = vsel %vm534, %v554, -inf
        %556 = vmax.xlane.f32.xlu0 %v555
        %v557 = vpop.xlane.xlu0 %556
        %v558 = vsub.f32 %v554, %v557
        %v559 = vmul.f32 %v558, 1.442695
        %v560 = vpow.pop %v559
        %v561 = vsel %vm534, %v560, 0.0
        %562 = vadd.xlane.f32.xlu0 %v561
        %v563 = vpop.xlane.xlu0 %562
        %v564 = vrcp.pop %v563
        %v565 = vmul.f32 %v560, %v564
        %v566 = vpack.c.bf16 %v565, %v565
        %567 = vrot.lane.b32.xlu0 %v531, 64
        %v568 = vpop.permute.xlu0 %567
        %v570 = vsel %vm534, %v566, 0
        %vm572 = vcmask 1043456
        %v574 = vsel %vm572, %v568, 0
        %576 = vmatpush.bf16.msra.mxu0 0
        %577 = vmatpush.bf16.msra.mxu0 0
        %578 = vmatpush.bf16.msra.mxu0 0
        %579 = vmatpush.bf16.msra.mxu0 0
        %580 = vmatpush.bf16.msra.mxu0 0
        %581 = vmatpush.bf16.msra.mxu0 0
        %582 = vmatpush.bf16.msra.mxu0 0
        %583 = vmatpush.bf16.msra.mxu0 %v574
        %584 = vmatmul.bf16.gmra.mxu0 %v570
        %v585 = vpop.f32.mrf.mxu0
        %v586 = vadd.f32 0.0, %v585
        %v587 = vpop.f32.mrf.mxu0
        %588 = vdwg.mxu0
        %v589 = vpack.c.bf16 %v586, %v586
        %590 = vrot.lane.b32.xlu0 %v531, 120
        %v591 = vpop.permute.xlu0 %590
        %592 = vrot.lane.b32.xlu0 %v531, 88
        %v593 = vpop.permute.xlu0 %592
        %v595 = vsel %vm534, %v591, 0
        %v598 = vsel %vm534, %v593, 0
        %600 = vmatpush.bf16.xpose.msra.mxu0 0
        %601 = vmatpush.bf16.xpose.msra.mxu0 0
        %602 = vmatpush.bf16.xpose.msra.mxu0 0
        %603 = vmatpush.bf16.xpose.msra.mxu0 0
        %604 = vmatpush.bf16.xpose.msra.mxu0 0
        %605 = vmatpush.bf16.xpose.msra.mxu0 0
        %606 = vmatpush.bf16.xpose.msra.mxu0 0
        %607 = vmatpush.bf16.xpose.msra.mxu0 %v598
        %608 = vmatmul.bf16.gmra.mxu0 %v595
        %v609 = vpop.f32.mrf.mxu0
        %v610 = vadd.f32 0.0, %v609
        %v611 = vpop.f32.mrf.mxu0
        %612 = vdwg.mxu0
        %v613 = vsel %vm528, %v610, -1e+30
        %v614 = vsel %vm534, %v613, -inf
        %615 = vmax.xlane.f32.xlu0 %v614
        %v616 = vpop.xlane.xlu0 %615
        %v617 = vsub.f32 %v613, %v616
        %v618 = vmul.f32 %v617, 1.442695
        %v619 = vpow.pop %v618
        %v620 = vsel %vm534, %v619, 0.0
        %621 = vadd.xlane.f32.xlu0 %v620
        %v622 = vpop.xlane.xlu0 %621
        %v623 = vrcp.pop %v622
        %v624 = vmul.f32 %v619, %v623
        %v625 = vpack.c.bf16 %v624, %v624
        %626 = vrot.lane.b32.xlu0 %v531, 56
        %v627 = vpop.permute.xlu0 %626
        %v629 = vsel %vm534, %v625, 0
        %v632 = vsel %vm572, %v627, 0
        %634 = vmatpush.bf16.msra.mxu0 0
        %635 = vmatpush.bf16.msra.mxu0 0
        %636 = vmatpush.bf16.msra.mxu0 0
        %637 = vmatpush.bf16.msra.mxu0 0
        %638 = vmatpush.bf16.msra.mxu0 0
        %639 = vmatpush.bf16.msra.mxu0 0
        %640 = vmatpush.bf16.msra.mxu0 0
        %641 = vmatpush.bf16.msra.mxu0 %v632
        %642 = vmatmul.bf16.gmra.mxu0 %v629
        %v643 = vpop.f32.mrf.mxu0
        %v644 = vadd.f32 0.0, %v643
        %v645 = vpop.f32.mrf.mxu0
        %646 = vdwg.mxu0
        %v647 = vpack.c.bf16 %v644, %v644
        %v649 = vsel %vm534, %v647, 0
        %v652 = vsel %vm572, %v494, 0
        %654 = vmatpush.bf16.msra.mxu0 0
        %655 = vmatpush.bf16.msra.mxu0 0
        %656 = vmatpush.bf16.msra.mxu0 0
        %657 = vmatpush.bf16.msra.mxu0 0
        %658 = vmatpush.bf16.msra.mxu0 0
        %659 = vmatpush.bf16.msra.mxu0 0
        %660 = vmatpush.bf16.msra.mxu0 0
        %661 = vmatpush.bf16.msra.mxu0 %v652
        %662 = vmatmul.bf16.gmra.mxu0 %v649
        %v663 = vpop.f32.mrf.mxu0
        %v664 = vadd.f32 0.0, %v663
        %v665 = vpop.f32.mrf.mxu0
        %666 = vdwg.mxu0
        %v668 = vsel %vm534, %v589, 0
        %v671 = vsel %vm572, %v493, 0
        %673 = vmatpush.bf16.msra.mxu0 0
        %674 = vmatpush.bf16.msra.mxu0 0
        %675 = vmatpush.bf16.msra.mxu0 0
        %676 = vmatpush.bf16.msra.mxu0 0
        %677 = vmatpush.bf16.msra.mxu0 0
        %678 = vmatpush.bf16.msra.mxu0 0
        %679 = vmatpush.bf16.msra.mxu0 0
        %680 = vmatpush.bf16.msra.mxu0 %v671
        %681 = vmatmul.bf16.gmra.mxu0 %v668
        %v682 = vpop.f32.mrf.mxu0
        %v683 = vadd.f32 %v664, %v682
        %v684 = vpop.f32.mrf.mxu0
        %685 = vdwg.mxu0
        %686 = vrot.lane.b32.xlu0 %v531, 112
        %v687 = vpop.permute.xlu0 %686
        %688 = vrot.lane.b32.xlu0 %v531, 80
        %v689 = vpop.permute.xlu0 %688
        %v691 = vsel %vm534, %v687, 0
        %v694 = vsel %vm534, %v689, 0
        %696 = vmatpush.bf16.xpose.msra.mxu0 0
        %697 = vmatpush.bf16.xpose.msra.mxu0 0
        %698 = vmatpush.bf16.xpose.msra.mxu0 0
        %699 = vmatpush.bf16.xpose.msra.mxu0 0
        %700 = vmatpush.bf16.xpose.msra.mxu0 0
        %701 = vmatpush.bf16.xpose.msra.mxu0 0
        %702 = vmatpush.bf16.xpose.msra.mxu0 0
        %703 = vmatpush.bf16.xpose.msra.mxu0 %v694
        %704 = vmatmul.bf16.gmra.mxu0 %v691
        %v705 = vpop.f32.mrf.mxu0
        %v706 = vadd.f32 0.0, %v705
        %v707 = vpop.f32.mrf.mxu0
        %708 = vdwg.mxu0
        %v709 = vsel %vm528, %v706, -1e+30
        %v710 = vsel %vm534, %v709, -inf
        %711 = vmax.xlane.f32.xlu0 %v710
        %v712 = vpop.xlane.xlu0 %711
        %v713 = vsub.f32 %v709, %v712
        %v714 = vmul.f32 %v713, 1.442695
        %v715 = vpow.pop %v714
        %v716 = vsel %vm534, %v715, 0.0
        %717 = vadd.xlane.f32.xlu0 %v716
        %v718 = vpop.xlane.xlu0 %717
        %v719 = vrcp.pop %v718
        %v720 = vmul.f32 %v715, %v719
        %v721 = vpack.c.bf16 %v720, %v720
        %722 = vrot.lane.b32.xlu0 %v531, 48
        %v723 = vpop.permute.xlu0 %722
        %v725 = vsel %vm534, %v721, 0
        %v728 = vsel %vm572, %v723, 0
        %730 = vmatpush.bf16.msra.mxu0 0
        %731 = vmatpush.bf16.msra.mxu0 0
        %732 = vmatpush.bf16.msra.mxu0 0
        %733 = vmatpush.bf16.msra.mxu0 0
        %734 = vmatpush.bf16.msra.mxu0 0
        %735 = vmatpush.bf16.msra.mxu0 0
        %736 = vmatpush.bf16.msra.mxu0 0
        %737 = vmatpush.bf16.msra.mxu0 %v728
        %738 = vmatmul.bf16.gmra.mxu0 %v725
        %v739 = vpop.f32.mrf.mxu0
        %v740 = vadd.f32 0.0, %v739
        %v741 = vpop.f32.mrf.mxu0
        %742 = vdwg.mxu0
        %v743 = vpack.c.bf16 %v740, %v740
        %v745 = vsel %vm534, %v743, 0
        %v748 = vsel %vm572, %v495, 0
        %750 = vmatpush.bf16.msra.mxu0 0
        %751 = vmatpush.bf16.msra.mxu0 0
        %752 = vmatpush.bf16.msra.mxu0 0
        %753 = vmatpush.bf16.msra.mxu0 0
        %754 = vmatpush.bf16.msra.mxu0 0
        %755 = vmatpush.bf16.msra.mxu0 0
        %756 = vmatpush.bf16.msra.mxu0 0
        %757 = vmatpush.bf16.msra.mxu0 %v748
        %758 = vmatmul.bf16.gmra.mxu0 %v745
        %v759 = vpop.f32.mrf.mxu0
        %v760 = vadd.f32 0.0, %v759
        %v761 = vpop.f32.mrf.mxu0
        %762 = vdwg.mxu0
        %v763 = vadd.f32 %v683, %v760
        %764 = vrot.lane.b32.xlu0 %v531, 104
        %v765 = vpop.permute.xlu0 %764
        %766 = vrot.lane.b32.xlu0 %v531, 72
        %v767 = vpop.permute.xlu0 %766
        %v769 = vsel %vm534, %v765, 0
        %v772 = vsel %vm534, %v767, 0
        %774 = vmatpush.bf16.xpose.msra.mxu0 0
        %775 = vmatpush.bf16.xpose.msra.mxu0 0
        %776 = vmatpush.bf16.xpose.msra.mxu0 0
        %777 = vmatpush.bf16.xpose.msra.mxu0 0
        %778 = vmatpush.bf16.xpose.msra.mxu0 0
        %779 = vmatpush.bf16.xpose.msra.mxu0 0
        %780 = vmatpush.bf16.xpose.msra.mxu0 0
        %781 = vmatpush.bf16.xpose.msra.mxu0 %v772
        %782 = vmatmul.bf16.gmra.mxu0 %v769
        %v783 = vpop.f32.mrf.mxu0
        %v784 = vadd.f32 0.0, %v783
        %v785 = vpop.f32.mrf.mxu0
        %786 = vdwg.mxu0
        %v787 = vsel %vm528, %v784, -1e+30
        %v788 = vsel %vm534, %v787, -inf
        %789 = vmax.xlane.f32.xlu0 %v788
        %v790 = vpop.xlane.xlu0 %789
        %v791 = vsub.f32 %v787, %v790
        %v792 = vmul.f32 %v791, 1.442695
        %v793 = vpow.pop %v792
        %v794 = vsel %vm534, %v793, 0.0
        %795 = vadd.xlane.f32.xlu0 %v794
        %v796 = vpop.xlane.xlu0 %795
        %v797 = vrcp.pop %v796
        %v798 = vmul.f32 %v793, %v797
        %v799 = vpack.c.bf16 %v798, %v798
        %800 = vrot.lane.b32.xlu0 %v531, 40
        %v801 = vpop.permute.xlu0 %800
        %v803 = vsel %vm534, %v799, 0
        %v806 = vsel %vm572, %v801, 0
        %808 = vmatpush.bf16.msra.mxu0 0
        %809 = vmatpush.bf16.msra.mxu0 0
        %810 = vmatpush.bf16.msra.mxu0 0
        %811 = vmatpush.bf16.msra.mxu0 0
        %812 = vmatpush.bf16.msra.mxu0 0
        %813 = vmatpush.bf16.msra.mxu0 0
        %814 = vmatpush.bf16.msra.mxu0 0
        %815 = vmatpush.bf16.msra.mxu0 %v806
        %816 = vmatmul.bf16.gmra.mxu0 %v803
        %v817 = vpop.f32.mrf.mxu0
        %v818 = vadd.f32 0.0, %v817
        %v819 = vpop.f32.mrf.mxu0
        %820 = vdwg.mxu0
        %v821 = vpack.c.bf16 %v818, %v818
        %v823 = vsel %vm534, %v821, 0
        %v826 = vsel %vm572, %v496, 0
        %828 = vmatpush.bf16.msra.mxu0 0
        %829 = vmatpush.bf16.msra.mxu0 0
        %830 = vmatpush.bf16.msra.mxu0 0
        %831 = vmatpush.bf16.msra.mxu0 0
        %832 = vmatpush.bf16.msra.mxu0 0
        %833 = vmatpush.bf16.msra.mxu0 0
        %834 = vmatpush.bf16.msra.mxu0 0
        %835 = vmatpush.bf16.msra.mxu0 %v826
        %836 = vmatmul.bf16.gmra.mxu0 %v823
        %v837 = vpop.f32.mrf.mxu0
        %v838 = vadd.f32 0.0, %v837
        %v839 = vpop.f32.mrf.mxu0
        %840 = vdwg.mxu0
        %v841 = vadd.f32 %v763, %v838
        %v843 = vperm.slane %v497, 0
        %v845 = vadd.f32 %v841, %v843
        %v846 = vunpack.c.l.bf16 %v454
        %v847 = vadd.f32 %v846, %v845
        %v848 = vsel %vm475, %v847, 0.0
        %849 = vadd.xlane.f32.xlu0 %v848
        %v850 = vpop.xlane.xlu0 %849
        %v851 = vrcp.pop 32.0
        %v852 = vmul.f32 32.0, %v851
        %v853 = vsub.f32 1.0, %v852
        %v854 = vmul.f32 %v851, %v853
        %v855 = vadd.f32 %v851, %v854
        %vm856 = vweird.f32 %v851
        %v857 = vsel %vm856, %v851, %v855
        %v858 = vmul.f32 %v850, %v857
        %v859 = vsub.f32 %v847, %v858
        %v860 = vmul.f32 %v859, %v859
        %v861 = vsel %vm475, %v860, 0.0
        %862 = vadd.xlane.f32.xlu0 %v861
        %v863 = vpop.xlane.xlu0 %862
        %v864 = vmul.f32 %v863, %v857
        %v865 = vadd.f32 %v864, 1e-05
        %v866 = vrsqrt.pop %v865
        %v867 = vmul.f32 %v866, %v865
        %v868 = vmul.f32 %v867, %v866
        %v869 = vmul.f32 0.5, %v868
        %v870 = vsub.f32 1.5, %v869
        %v871 = vmul.f32 %v866, %v870
        %vm872 = vweird.f32 %v865
        %vm873 = vweird.f32 %v866
        %vm874 = vmor %vm872, %vm873
        %v875 = vsel %vm874, %v866, %v871
        %v876 = vmul.f32 %v859, %v875
        %v878 = vperm.slane %v500, 0
        %v880 = vmul.f32 %v876, %v878
        %v882 = vperm.slane %v501, 0
        %v884 = vadd.f32 %v880, %v882
        %v885 = vpack.c.bf16 %v884, %v884
        %v887 = vperm.slane %v498, 0
        %v893 = vunpack.c.l.b16 %v504
        %v894 = vunpack.c.l.b16 %v505
        %v895 = vunpack.c.l.b16 %v506
        %v896 = vunpack.c.l.b16 %v507
        %v897 = vpack.c.b16 %v894, %v893
        %v898 = vpack.c.b16 %v896, %v895
        %v902 = vsel %vm475, %v885, 0
        %904 = vmatpush.bf16.msra.mxu0 0
        %905 = vmatpush.bf16.msra.mxu0 0
        %906 = vmatpush.bf16.msra.mxu0 0
        %907 = vmatpush.bf16.msra.mxu0 0
        %908 = vmatpush.bf16.msra.mxu0 0
        %909 = vmatpush.bf16.msra.mxu0 0
        %910 = vmatpush.bf16.msra.mxu0 %v898
        %911 = vmatpush.bf16.msra.mxu0 %v897
        %912 = vmatmul.bf16.gmra.mxu0 %v902
        %v913 = vpop.f32.mrf.mxu0
        %v914 = vadd.f32 %v887, %v913
        %v915 = vpop.f32.mrf.mxu0
        %916 = vdwg.mxu0
        %v917 = vmul.f32 %v914, 0.5
        %v918 = vmul.f32 %v914, 0.044715
        %v919 = vmul.f32 %v918, %v914
        %v920 = vmul.f32 %v919, %v914
        %v921 = vadd.f32 %v914, %v920
        %v922 = vmul.f32 %v921, 0.7978846
        %v923 = vtanh.pop %v922
        %v924 = vadd.f32 %v923, 1.0
        %v925 = vmul.f32 %v917, %v924
        %v926 = vpack.c.bf16 %v925, %v925
        %v928 = vperm.slane %v499, 0
        %v946 = vunpack.c.l.b16 %v508
        %v947 = vunpack.c.l.b16 %v509
        %v948 = vunpack.c.l.b16 %v510
        %v949 = vunpack.c.l.b16 %v511
        %v950 = vunpack.c.l.b16 %v512
        %v951 = vunpack.c.l.b16 %v513
        %v952 = vunpack.c.l.b16 %v514
        %v953 = vunpack.c.l.b16 %v515
        %v954 = vunpack.c.l.b16 %v516
        %v955 = vunpack.c.l.b16 %v517
        %v956 = vunpack.c.l.b16 %v518
        %v957 = vunpack.c.l.b16 %v519
        %v958 = vunpack.c.l.b16 %v520
        %v959 = vunpack.c.l.b16 %v521
        %v960 = vunpack.c.l.b16 %v522
        %v961 = vunpack.c.l.b16 %v523
        %v962 = vpack.c.b16 %v947, %v946
        %v963 = vpack.c.b16 %v949, %v948
        %v964 = vpack.c.b16 %v951, %v950
        %v965 = vpack.c.b16 %v953, %v952
        %v966 = vpack.c.b16 %v955, %v954
        %v967 = vpack.c.b16 %v957, %v956
        %v968 = vpack.c.b16 %v959, %v958
        %v969 = vpack.c.b16 %v961, %v960
        %978 = vmatpush.bf16.msra.mxu0 %v969
        %979 = vmatpush.bf16.msra.mxu0 %v968
        %980 = vmatpush.bf16.msra.mxu0 %v967
        %981 = vmatpush.bf16.msra.mxu0 %v966
        %982 = vmatpush.bf16.msra.mxu0 %v965
        %983 = vmatpush.bf16.msra.mxu0 %v964
        %984 = vmatpush.bf16.msra.mxu0 %v963
        %985 = vmatpush.bf16.msra.mxu0 %v962
        %986 = vmatmul.bf16.gmra.mxu0 %v926
        %v987 = vpop.f32.mrf.mxu0
        %v988 = vadd.f32 %v928, %v987
        %v989 = vpop.f32.mrf.mxu0
        %990 = vdwg.mxu0
        %v991 = vadd.f32 %v884, %v988
        %v992 = vsel %vm475, %v991, 0.0
        %993 = vadd.xlane.f32.xlu0 %v992
        %v994 = vpop.xlane.xlu0 %993
        %v995 = vmul.f32 %v994, %v857
        %v996 = vsub.f32 %v991, %v995
        %v997 = vmul.f32 %v996, %v996
        %v998 = vsel %vm475, %v997, 0.0
        %999 = vadd.xlane.f32.xlu0 %v998
        %v1000 = vpop.xlane.xlu0 %999
        %v1001 = vmul.f32 %v1000, %v857
        %v1002 = vadd.f32 %v1001, 1e-05
        %v1003 = vrsqrt.pop %v1002
        %v1004 = vmul.f32 %v1003, %v1002
        %v1005 = vmul.f32 %v1004, %v1003
        %v1006 = vmul.f32 0.5, %v1005
        %v1007 = vsub.f32 1.5, %v1006
        %v1008 = vmul.f32 %v1003, %v1007
        %vm1009 = vweird.f32 %v1002
        %vm1010 = vweird.f32 %v1003
        %vm1011 = vmor %vm1009, %vm1010
        %v1012 = vsel %vm1011, %v1003, %v1008
        %v1013 = vmul.f32 %v996, %v1012
        %v1015 = vperm.slane %v502, 0
        %v1017 = vmul.f32 %v1013, %v1015
        %v1019 = vperm.slane %v503, 0
        %v1021 = vadd.f32 %v1017, %v1019
        %v1022 = vpack.c.bf16 %v1021, %v1021
        %vm1023 = vcmask 257024
        %1024 = vst.msk [vmem:[%s452] sm:$0xf] %vm1023, %v1022
        %p1025 = scmp.lt.s32.totalorder %s25, 1
        %s1026 = scalar_select %p1025, %s25, 1
        %s1027 = smul.addr %s1026, 4
        %s1028 = scalar_lea.vmem %s13, %s1027
        // Predicated region
        $region77: #{_lambda_.3} parent=71 // pred_check
          %p1029 = pneg %p321
        $region78: #{_lambda_.3} parent=71 // pred_check_branch
          %1031 = sbr.rel (%p1029) target = $region80
        $region79: #{_lambda_.3} parent=71 // pred_region
          _
        $region80: #{_lambda_.3} parent=71 // pred_fallthru
          _
      $region72: #{_lambda_.3} parent=5 // pred_fallthru
        _
      %p1032 = scmp.le.s32.totalorder 2, %s20
      // Predicated region
      $region81: #{_lambda_.3} parent=5 // pred_check
        %p1033 = pneg %p1032
      $region82: #{_lambda_.3} parent=5 // pred_check_branch
        %1035 = sbr.rel (%p1033) target = $region84
      $region83: #{_lambda_.3} parent=5 // pred_region
        %s1036 = ssub.s32 %s20, 2
        // Predicated region
        $region85: #{_lambda_.3} parent=83 // pred_check
          %p1037 = pneg %p327
        $region86: #{_lambda_.3} parent=83 // pred_check_branch
          %1039 = sbr.rel (%p1037) target = $region88
        $region87: #{_lambda_.3} parent=83 // pred_region
          %p1040 = scmp.lt.s32.totalorder %s26, 1
          %s1041 = scalar_select %p1040, %s26, 1
          %s1042 = smul.addr %s1041, 4
          %s1043 = scalar_lea.vmem %s13, %s1042
        $region88: #{_lambda_.3} parent=83 // pred_fallthru
          _
      $region84: #{_lambda_.3} parent=5 // pred_fallthru
        _
    $region6: #{_lambda_.3} parent=1 // loop_footer
      %s24 = sadd.s32 1, %s20
    $region7: #{_lambda_.3} parent=1 // loop_footer_branch
      %19 = sbr.rel target = $region3
    $region8: #{_lambda_.3} parent=1 // loop_exit
      _
    %1044 = vsyncpa [#allocation3], 1
    %s1045 = scalar_lea.sflag [#allocation3], 1
    %1046 = vsyncpa %s1045, 1

</llo_original>
